<compile_context>
chip_gen: v6e
topology: v6e:2x2x1
jax: 0.10.0
libtpu: 0.0.40
codegen_flags: <defaults>
</compile_context>

<pallas_src>
import functools

import jax
import jax.numpy as jnp
from jax import lax
from jax.experimental import pallas as pl
from jax.experimental.pallas import tpu as pltpu

F_NORMALIZE_EPS = 1e-12   # torch.nn.functional.normalize default eps
BN_EPS = 1e-5             # torch.nn.BatchNorm1d default eps
Q_DIM, T_DIM, CONF_DIM = 4, 3, 1
HEAD_DIM = Q_DIM + T_DIM + CONF_DIM   # 8 real head columns
HEAD_PAD = 128                        # head columns padded to one full lane group
CONF_COL = Q_DIM + T_DIM              # column index of the confidence logit


def _goal_feature_kernel(z_ref, w1h_ref, w2_ref, b_ref, out_ref, *, h1_dim, h2_dim):
    # Inputs: z f32, weights bf16, biases f32. All matmuls accumulate in f32.
    z = z_ref[...].astype(jnp.bfloat16)

    # Packed buffers: w1h = [W1 | Wheads_pad] along columns (W1 first so both
    # slices stay 128-lane aligned), b = [b1 | b2 | bheads_pad].
    w1 = w1h_ref[:, :h1_dim]                       # [in, h1]      bf16
    wh = w1h_ref[:, h1_dim:]                       # [in, 128]     bf16 (cols >=8 are 0)
    b1 = b_ref[:, :h1_dim]                         # [1, h1]       f32
    b2 = b_ref[:, h1_dim:h1_dim + h2_dim]          # [1, h2]       f32
    bh = b_ref[:, h1_dim + h2_dim:]                # [1, 128]      f32 (cols >=8 are 0)

    # fc_layer with eval-mode BatchNorm1d folded into the linears.
    h1 = jnp.dot(z, w1, preferred_element_type=jnp.float32) + b1
    h1 = jnp.maximum(h1, 0.0)
    h2 = jnp.dot(h1.astype(jnp.bfloat16), w2_ref[...],
                 preferred_element_type=jnp.float32) + b2
    h2 = jnp.maximum(h2, 0.0)

    # Fused heads, lane-aligned: columns [q(4) | t(3) | confidence(1) | zero-pad(120)].
    heads = jnp.dot(h2.astype(jnp.bfloat16), wh,
                    preferred_element_type=jnp.float32) + bh

    # F.normalize(q, p=2, dim=-1): q * rsqrt(max(sum(q^2), eps^2)) == q / max(||q||, eps).
    # Column-mask with iota instead of narrow slices so everything stays full-width.
    cols = lax.broadcasted_iota(jnp.int32, heads.shape, 1)
    is_q = cols < Q_DIM
    sumsq = jnp.sum(jnp.where(is_q, heads * heads, 0.0), axis=-1, keepdims=True)
    inv_norm = lax.rsqrt(jnp.maximum(sumsq, F_NORMALIZE_EPS * F_NORMALIZE_EPS))

    scaled = heads * jnp.where(is_q, inv_norm, 1.0)          # normalize quaternion cols
    out_ref[...] = jnp.where(cols == CONF_COL, jax.nn.sigmoid(heads), scaled)


def _fold_bn(w, b, gamma, beta, mean, var):
    """Fold eval-mode BatchNorm1d into the preceding Linear (w: [in,out], b: [out])."""
    s = gamma / jnp.sqrt(var + BN_EPS)
    return w * s[None, :], (b - mean) * s + beta


def pack_params(params, weights_dtype=jnp.bfloat16):
    """Fold BN, fuse + lane-pad the heads, pack everything into 3 DMA-friendly buffers."""
    w1, b1 = _fold_bn(params["fc1_w"], params["fc1_b"],
                      params["bn1_gamma"], params["bn1_beta"],
                      params["bn1_mean"], params["bn1_var"])
    w2, b2 = _fold_bn(params["fc2_w"], params["fc2_b"],
                      params["bn2_gamma"], params["bn2_beta"],
                      params["bn2_mean"], params["bn2_var"])
    wh = jnp.concatenate([params["q_w"], params["t_w"], params["c_w"]], axis=1)  # [h2, 8]
    bh = jnp.concatenate([params["q_b"], params["t_b"], params["c_b"]], axis=0)  # [8]

    # Zero-pad heads to a full 128-lane column group so the head matmul is lane-aligned.
    wh = jnp.pad(wh, ((0, 0), (0, HEAD_PAD - HEAD_DIM)))
    bh = jnp.pad(bh, (0, HEAD_PAD - HEAD_DIM))

    # GoalFeature structurally has fc-input dim == head-input dim (both 512*scale),
    # so W1 and Wheads can share one column-packed buffer.
    assert w1.shape[0] == wh.shape[0]
    h1_dim = w1.shape[1]
    h2_dim = w2.shape[1]
    return {
        "w1h": jnp.concatenate([w1, wh], axis=1).astype(weights_dtype),   # [in, h1+128]
        "w2": w2.astype(weights_dtype),                                   # [h1, h2]
        "biases": jnp.concatenate([b1, b2, bh], axis=0)[None, :]          # [1, h1+h2+128]
                    .astype(jnp.float32),
        "h1_dim": h1_dim,
        "h2_dim": h2_dim,
    }


def _pick_block_b(B, block_b):
    """Batch tile: 1 step for inference-sized B; >=2 steps otherwise (v7x megacore),
    capped at block_b so v5e/v6e keep big M tiles and few grid steps."""
    if B <= 128:
        return B
    half = -(-B // 2)              # cdiv(B, 2)
    half = -(-half // 8) * 8       # round up to sublane multiple
    return min(block_b, max(128, half))


def _maybe_vmem_limit(bb, in_dim, h1_dim, h2_dim, weight_bytes):
    """Only raise the scoped-VMEM limit when the footprint would exceed the smallest
    default (16 MiB on v5e); cap at ~56 MB to stay inside v7x's 64 MiB physical VMEM."""
    act = 4 * bb * (in_dim + h1_dim + h2_dim + 3 * HEAD_PAD)          # f32 intermediates
    io = 2 * 4 * bb * (in_dim + HEAD_PAD)                             # double-buffered in/out
    need = weight_bytes + act + io + (1 << 20)
    if need <= (16 << 20):
        return None
    # TODO(synk): re-derive the buffer budget per TPU generation (v7x: 64 MiB physical).
    return min(int(need * 1.5), 56 << 20)


def goal_feature_forward(z_feat, packed, *, block_b=512):
    """fc_layer + heads + epilogue of GoalFeature.forward in one Pallas kernel.

    z_feat: [B, 512*scale] pooled SA3 feature (xyz_features.squeeze(-1)).
    Returns (qt [B, 7], confidence [B]) matching the torch module (eval-mode BN).
    """
    B, in_dim = z_feat.shape
    h1_dim, h2_dim = packed["h1_dim"], packed["h2_dim"]
    w1h, w2, biases = packed["w1h"], packed["w2"], packed["biases"]

    bb = _pick_block_b(B, block_b)
    grid = (pl.cdiv(B, bb),)

    kernel = functools.partial(_goal_feature_kernel, h1_dim=h1_dim, h2_dim=h2_dim)

    w_bytes = (w1h.size * w1h.dtype.itemsize + w2.size * w2.dtype.itemsize
               + biases.size * 4)
    flops = 2 * B * (in_dim * h1_dim + h1_dim * h2_dim + h2_dim * HEAD_PAD)
    bytes_accessed = 4 * z_feat.size + w_bytes + 4 * B * HEAD_PAD
    cost = pl.CostEstimate(flops=flops, transcendentals=2 * B,
                           bytes_accessed=bytes_accessed)

    # Constant-index weight/bias operands: single-buffered (double-buffering a
    # never-changing block only wastes VMEM).
    const_spec = lambda shape: pl.BlockSpec(shape, lambda i: (0, 0),
                                            pipeline_mode=pl.Buffered(1))

    # TODO(synk): at inference batch sizes this call is weight-DMA bound; in the full
    # model, prefetch w1h/w2 across calls (P10) so the copy hides under the SA encoder.
    out = pl.pallas_call(
        kernel,
        out_shape=jax.ShapeDtypeStruct((B, HEAD_PAD), jnp.float32),
        grid=grid,
        in_specs=[
            pl.BlockSpec((bb, in_dim), lambda i: (i, 0)),
            const_spec(w1h.shape),
            const_spec(w2.shape),
            const_spec(biases.shape),
        ],
        out_specs=pl.BlockSpec((bb, HEAD_PAD), lambda i: (i, 0)),
        compiler_params=pltpu.CompilerParams(
            dimension_semantics=("parallel",),
            vmem_limit_bytes=_maybe_vmem_limit(bb, in_dim, h1_dim, h2_dim, w_bytes)),
        cost_estimate=cost,
    )(z_feat, w1h, w2, biases)

    qt = out[:, :Q_DIM + T_DIM]
    confidence = out[:, CONF_COL]   # torch .squeeze() drops the size-1 dim
    return qt, confidence


def init_params(key, model_scale=1):
    in_dim = int(512 * model_scale)
    h1 = int(1024 * model_scale)
    h2 = int(512 * model_scale)
    ks = jax.random.split(key, 13)

    def lin(k, fi, fo):
        lim = 1.0 / jnp.sqrt(fi)
        kw, kb = jax.random.split(k)
        w = jax.random.uniform(kw, (fi, fo), jnp.float32, minval=-lim, maxval=lim)
        b = jax.random.uniform(kb, (fo,), jnp.float32, minval=-lim, maxval=lim)
        return w, b

    fc1_w, fc1_b = lin(ks[0], in_dim, h1)
    fc2_w, fc2_b = lin(ks[1], h1, h2)
    q_w, q_b = lin(ks[2], h2, Q_DIM)
    t_w, t_b = lin(ks[3], h2, T_DIM)
    c_w, c_b = lin(ks[4], h2, CONF_DIM)

    return dict(
        fc1_w=fc1_w, fc1_b=fc1_b,
        bn1_gamma=1.0 + 0.1 * jax.random.normal(ks[5], (h1,), jnp.float32),
        bn1_beta=0.1 * jax.random.normal(ks[6], (h1,), jnp.float32),
        bn1_mean=0.1 * jax.random.normal(ks[7], (h1,), jnp.float32),
        bn1_var=0.5 + jax.random.uniform(ks[8], (h1,), jnp.float32),
        fc2_w=fc2_w, fc2_b=fc2_b,
        bn2_gamma=1.0 + 0.1 * jax.random.normal(ks[9], (h2,), jnp.float32),
        bn2_beta=0.1 * jax.random.normal(ks[10], (h2,), jnp.float32),
        bn2_mean=0.1 * jax.random.normal(ks[11], (h2,), jnp.float32),
        bn2_var=0.5 + jax.random.uniform(ks[12], (h2,), jnp.float32),
        q_w=q_w, q_b=q_b, t_w=t_w, t_b=t_b, c_w=c_w, c_b=c_b,
    )


def _reference_forward(z, p):
    # Pure-JAX f32 reference mirroring the PyTorch module (eval-mode BatchNorm).
    def bn(x, g, b, m, v):
        return (x - m) / jnp.sqrt(v + BN_EPS) * g + b

    h1 = jnp.maximum(bn(z @ p["fc1_w"] + p["fc1_b"], p["bn1_gamma"], p["bn1_beta"],
                        p["bn1_mean"], p["bn1_var"]), 0.0)
    h2 = jnp.maximum(bn(h1 @ p["fc2_w"] + p["fc2_b"], p["bn2_gamma"], p["bn2_beta"],
                        p["bn2_mean"], p["bn2_var"]), 0.0)
    q = h2 @ p["q_w"] + p["q_b"]
    qn = q / jnp.maximum(jnp.linalg.norm(q, axis=-1, keepdims=True), F_NORMALIZE_EPS)
    t = h2 @ p["t_w"] + p["t_b"]
    conf = jax.nn.sigmoid(h2 @ p["c_w"] + p["c_b"])
    return jnp.concatenate([qn, t], axis=-1), conf[:, 0]


if __name__ == "__main__":
    model_scale = 1
    batch = 8
    in_dim = int(512 * model_scale)

    key = jax.random.PRNGKey(0)
    k_params, k_state = jax.random.split(key)
    params = init_params(k_params, model_scale)

    # TODO(synk): the PointNet++ SA encoder (FPS / ball-query / grouping) has no
    # clean Pallas equivalent; z_feat stands in for the pooled SA3 feature.
    z_feat = jax.random.normal(k_state, (batch, in_dim), dtype=jnp.float32)

    packed = pack_params(params)                   # bf16 weights, f32 biases
    qt, confidence = goal_feature_forward(z_feat, packed)
    jax.block_until_ready((qt, confidence))

    qt_ref, conf_ref = _reference_forward(z_feat, params)
    assert qt.shape == (batch, Q_DIM + T_DIM)
    assert confidence.shape == (batch,)
    # Tolerance relaxed vs. the f32 reference to cover bf16 weight quantization.
    assert jnp.allclose(qt, qt_ref, atol=2e-2, rtol=2e-2)
    assert jnp.allclose(confidence, conf_ref, atol=2e-2, rtol=2e-2)

    print("KERNEL_OK")
</pallas_src>

<mosaic_0001>
module attributes {stable_mosaic.version = 11 : i64} {
  func.func @_goal_feature_kernel(%arg0: i32, %arg1: memref<8x512xf32, #tpu.memory_space<vmem>>, %arg2: memref<512x1152xbf16, #tpu.memory_space<vmem>>, %arg3: memref<1024x512xbf16, #tpu.memory_space<vmem>>, %arg4: memref<1x1664xf32, #tpu.memory_space<vmem>>, %arg5: memref<8x128xf32, #tpu.memory_space<vmem>>) attributes {dimension_semantics = [#tpu.dimension_semantics<parallel>], iteration_bounds = array<i64: 1>, scalar_prefetch = 0 : i64, scratch_operands = 0 : i64, tpu.core_type = #tpu.core_type<tc>, window_params = [{transform_indices = @transform_0, window_bounds = array<i64: 8, 512>}, {pipeline_mode = #tpu.pipeline_mode<synchronous>, transform_indices = @transform_1, window_bounds = array<i64: 512, 1152>}, {pipeline_mode = #tpu.pipeline_mode<synchronous>, transform_indices = @transform_2, window_bounds = array<i64: 1024, 512>}, {pipeline_mode = #tpu.pipeline_mode<synchronous>, transform_indices = @transform_3, window_bounds = array<i64: 1, 1664>}, {transform_indices = @transform_4, window_bounds = array<i64: 8, 128>}]} {
    %c0 = arith.constant 0 : index
    %c0_0 = arith.constant 0 : index
    %0 = vector.load %arg1[%c0, %c0_0] : memref<8x512xf32, #tpu.memory_space<vmem>>, vector<8x512xf32>
    %1 = arith.truncf %0 : vector<8x512xf32> to vector<8x512xbf16>
    %c0_1 = arith.constant 0 : index
    %c0_2 = arith.constant 0 : index
    %2 = vector.load %arg2[%c0_1, %c0_2] : memref<512x1152xbf16, #tpu.memory_space<vmem>>, vector<512x1024xbf16>
    %c0_3 = arith.constant 0 : index
    %c1024 = arith.constant 1024 : index
    %3 = vector.load %arg2[%c0_3, %c1024] : memref<512x1152xbf16, #tpu.memory_space<vmem>>, vector<512x128xbf16>
    %c0_4 = arith.constant 0 : index
    %c0_5 = arith.constant 0 : index
    %4 = vector.load %arg4[%c0_4, %c0_5] : memref<1x1664xf32, #tpu.memory_space<vmem>>, vector<1x1024xf32>
    %c0_6 = arith.constant 0 : index
    %c1024_7 = arith.constant 1024 : index
    %5 = vector.load %arg4[%c0_6, %c1024_7] : memref<1x1664xf32, #tpu.memory_space<vmem>>, vector<1x512xf32>
    %c0_8 = arith.constant 0 : index
    %c1536 = arith.constant 1536 : index
    %6 = vector.load %arg4[%c0_8, %c1536] : memref<1x1664xf32, #tpu.memory_space<vmem>>, vector<1x128xf32>
    %cst = arith.constant dense<0.000000e+00> : vector<8x1024xf32>
    %7 = tpu.matmul %1, %2, %cst {dimension_numbers = #tpu.dot_dimension_numbers<[1], [0], [0], [1], [0, 0, 1, 1], [], []>} : vector<8x512xbf16>, vector<512x1024xbf16>, vector<8x1024xf32> -> vector<8x1024xf32>
    %8 = vector.broadcast %4 : vector<1x1024xf32> to vector<8x1024xf32>
    %9 = arith.addf %7, %8 : vector<8x1024xf32>
    %cst_9 = arith.constant 0.000000e+00 : f32
    %10 = vector.broadcast %cst_9 : f32 to vector<8x1024xf32>
    %11 = arith.maximumf %9, %10 : vector<8x1024xf32>
    %12 = arith.truncf %11 : vector<8x1024xf32> to vector<8x1024xbf16>
    %c0_10 = arith.constant 0 : index
    %c0_11 = arith.constant 0 : index
    %13 = vector.load %arg3[%c0_10, %c0_11] : memref<1024x512xbf16, #tpu.memory_space<vmem>>, vector<1024x512xbf16>
    %cst_12 = arith.constant dense<0.000000e+00> : vector<8x512xf32>
    %14 = tpu.matmul %12, %13, %cst_12 {dimension_numbers = #tpu.dot_dimension_numbers<[1], [0], [0], [1], [0, 0, 1, 1], [], []>} : vector<8x1024xbf16>, vector<1024x512xbf16>, vector<8x512xf32> -> vector<8x512xf32>
    %15 = vector.broadcast %5 : vector<1x512xf32> to vector<8x512xf32>
    %16 = arith.addf %14, %15 : vector<8x512xf32>
    %cst_13 = arith.constant 0.000000e+00 : f32
    %17 = vector.broadcast %cst_13 : f32 to vector<8x512xf32>
    %18 = arith.maximumf %16, %17 : vector<8x512xf32>
    %19 = arith.truncf %18 : vector<8x512xf32> to vector<8x512xbf16>
    %cst_14 = arith.constant dense<0.000000e+00> : vector<8x128xf32>
    %20 = tpu.matmul %19, %3, %cst_14 {dimension_numbers = #tpu.dot_dimension_numbers<[1], [0], [0], [1], [0, 0, 1, 1], [], []>} : vector<8x512xbf16>, vector<512x128xbf16>, vector<8x128xf32> -> vector<8x128xf32>
    %21 = vector.broadcast %6 : vector<1x128xf32> to vector<8x128xf32>
    %22 = arith.addf %20, %21 : vector<8x128xf32>
    %23 = tpu.iota {dimensions = array<i32: 1>} : vector<8x128xi32>
    %c4_i32 = arith.constant 4 : i32
    %24 = vector.broadcast %c4_i32 : i32 to vector<8x128xi32>
    %25 = arith.cmpi slt, %23, %24 : vector<8x128xi32>
    %26 = arith.mulf %22, %22 : vector<8x128xf32>
    %cst_15 = arith.constant 0.000000e+00 : f32
    %27 = vector.broadcast %cst_15 : f32 to vector<8x128xf32>
    %28 = arith.select %25, %26, %27 : vector<8x128xi1>, vector<8x128xf32>
    %cst_16 = arith.constant dense<0.000000e+00> : vector<8xf32>
    %29 = vector.multi_reduction <add>, %28, %cst_16 [1] : vector<8x128xf32> to vector<8xf32>
    %30 = vector.shape_cast %29 : vector<8xf32> to vector<8x1xf32>
    %cst_17 = arith.constant 1.000000e-24 : f32
    %31 = vector.broadcast %cst_17 : f32 to vector<8x1xf32>
    %32 = arith.maximumf %30, %31 : vector<8x1xf32>
    %33 = math.rsqrt %32 : vector<8x1xf32>
    %cst_18 = arith.constant 1.000000e+00 : f32
    %34 = vector.shape_cast %33 : vector<8x1xf32> to vector<8x1xf32>
    %35 = vector.broadcast %34 : vector<8x1xf32> to vector<8x128xf32>
    %36 = vector.broadcast %cst_18 : f32 to vector<8x128xf32>
    %37 = arith.select %25, %35, %36 : vector<8x128xi1>, vector<8x128xf32>
    %38 = arith.mulf %22, %37 : vector<8x128xf32>
    %c7_i32 = arith.constant 7 : i32
    %39 = vector.broadcast %c7_i32 : i32 to vector<8x128xi32>
    %40 = arith.cmpi eq, %23, %39 : vector<8x128xi32>
    %41 = arith.negf %22 : vector<8x128xf32>
    %42 = math.exp %41 : vector<8x128xf32>
    %cst_19 = arith.constant 1.000000e+00 : f32
    %43 = vector.broadcast %cst_19 : f32 to vector<8x128xf32>
    %44 = arith.addf %43, %42 : vector<8x128xf32>
    %45 = arith.divf %43, %44 : vector<8x128xf32>
    %46 = arith.select %40, %45, %38 : vector<8x128xi1>, vector<8x128xf32>
    %c0_20 = arith.constant 0 : index
    %c0_21 = arith.constant 0 : index
    %47 = vector.load %arg5[%c0_20, %c0_21] : memref<8x128xf32, #tpu.memory_space<vmem>>, vector<8x128xf32>
    tpu.vector_store %arg5[%c0_20, %c0_21], %46 {strides = array<i32>} : memref<8x128xf32, #tpu.memory_space<vmem>>, vector<8x128xf32>,
    return
  }
  func.func @transform_0(%arg0: i32) -> (i32, i32) {
    %c0_i32 = arith.constant 0 : i32
    %c0_i32_0 = arith.constant 0 : i32
    return %arg0, %c0_i32 : i32, i32
  }
  func.func @transform_1(%arg0: i32) -> (i32, i32) {
    %c0_i32 = arith.constant 0 : i32
    %c0_i32_0 = arith.constant 0 : i32
    %c0_i32_1 = arith.constant 0 : i32
    return %c0_i32, %c0_i32_0 : i32, i32
  }
  func.func @transform_2(%arg0: i32) -> (i32, i32) {
    %c0_i32 = arith.constant 0 : i32
    %c0_i32_0 = arith.constant 0 : i32
    %c0_i32_1 = arith.constant 0 : i32
    return %c0_i32, %c0_i32_0 : i32, i32
  }
  func.func @transform_3(%arg0: i32) -> (i32, i32) {
    %c0_i32 = arith.constant 0 : i32
    %c0_i32_0 = arith.constant 0 : i32
    %c0_i32_1 = arith.constant 0 : i32
    return %c0_i32, %c0_i32_0 : i32, i32
  }
  func.func @transform_4(%arg0: i32) -> (i32, i32) {
    %c0_i32 = arith.constant 0 : i32
    %c0_i32_0 = arith.constant 0 : i32
    return %arg0, %c0_i32 : i32, i32
  }
}

</mosaic_0001>

<llo_original>
// kernel: tpu_custom_call.1
$region0: #{tpu_custom_call.1}
  #allocation0 [shape = 'u32[]', space=smem, size = 0x4, offset = 0x4, fixed_abs, tag = 'smem constant byte address 0x4 - core index']
  #allocation1 [shape = 'u32[144,128]{1,0:T(1,128)}', space=vmem, size = 0x12000, scoped, tag = 'internal scratch']
  %s0 = inlined_call_operand.hbm [shape: f32[8,512], index: 0, kind: input, shape index: {}]
  %s1 = inlined_call_operand.hbm [shape: bf16[512,1152], index: 1, kind: input, shape index: {}]
  %s2 = inlined_call_operand.hbm [shape: bf16[1024,512], index: 2, kind: input, shape index: {}]
  %s3 = inlined_call_operand.hbm [shape: f32[1,1664], index: 3, kind: input, shape index: {}]
  %s4 = inlined_call_operand.hbm [shape: f32[8,128], index: 4, kind: output, shape index: {}]
  %s5 = sld [smem:[#allocation0]]
  $region42: #{tpu_custom_call.1} parent=0
    _
  %s7 = ssub.s32 1, %s5
  %s8 = scalar_select 0, %s7, %s5
  $region1: #{tpu_custom_call.1} parent=0
    #allocation2 [shape = 'u8[16384]{0}', space=vmem, size = 0x4000, scoped, tag = 'input window, operand 0, single buffered']
    #allocation3 [shape = 's32[1]{0}', space=sflag, size = 0x4, scoped, tag = 'scoped memory for tpu_custom_call.1']
    #allocation4 [shape = 's32[1]{0}', space=sflag, size = 0x4, scoped, tag = 'scoped memory for tpu_custom_call.1']
    #allocation5 [shape = 'u8[1179648]{0}', space=vmem, size = 0x120000, scoped, tag = 'input window, operand 1, single buffered']
    #allocation6 [shape = 's32[1]{0}', space=sflag, size = 0x4, scoped, tag = 'scoped memory for tpu_custom_call.1']
    #allocation7 [shape = 'u8[1048576]{0}', space=vmem, size = 0x100000, scoped, tag = 'input window, operand 2, single buffered']
    #allocation8 [shape = 'u8[6656]{0}', space=vmem, size = 0x1c00, scoped, tag = 'input window, operand 3, single buffered']
    #allocation9 [shape = 's32[1]{0}', space=sflag, size = 0x4, scoped, tag = 'scoped memory for tpu_custom_call.1']
    #allocation10 [shape = 'u8[4096]{0}', space=vmem, size = 0x1000, scoped, tag = 'output window, operand 0, single buffered']
    %9 = vsyncpa [#allocation3], 0
    %10 = vsyncpa [#allocation6], 0
    %11 = vsyncpa [#allocation9], 0
    %12 = vsyncpa [#allocation4], 0
    // Predicated region
    $region2: #{tpu_custom_call.1} parent=1 // pred_check
      _
    $region3: #{tpu_custom_call.1} parent=1 // pred_check_branch
      %14 = sbr.rel (0) target = $region5
    $region4: #{tpu_custom_call.1} parent=1 // pred_region
      %s16 = ssub.s32 512, 512
      %17 = vsyncadd [#allocation3], %s16
      %s19 = sshll.u32 [#allocation2], 4
      %s20 = int_to_ptr.vmem [resolvable:$true] %s19
      %22 = dma.hbm_to_vmem [thread:$0]  %s0, 512, %s20, [#allocation3]
    $region5: #{tpu_custom_call.1} parent=1 // pred_fallthru
      _
    // Predicated region
    $region6: #{tpu_custom_call.1} parent=1 // pred_check
      _
    $region7: #{tpu_custom_call.1} parent=1 // pred_check_branch
      %24 = sbr.rel (0) target = $region9
    $region8: #{tpu_custom_call.1} parent=1 // pred_region
      %s26 = ssub.s32 36864, 36864
      %27 = vsyncadd [#allocation6], %s26
      %s28 = sshll.u32 [#allocation5], 4
      %s29 = int_to_ptr.vmem [resolvable:$true] %s28
      %34 = dma.hbm_to_vmem [thread:$0]  %s1, 36864, %s29, [#allocation6], 576, 576, 36
    $region9: #{tpu_custom_call.1} parent=1 // pred_fallthru
      _
    // Predicated region
    $region10: #{tpu_custom_call.1} parent=1 // pred_check
      _
    $region11: #{tpu_custom_call.1} parent=1 // pred_check_branch
      %36 = sbr.rel (0) target = $region13
    $region12: #{tpu_custom_call.1} parent=1 // pred_region
      %s38 = ssub.s32 32768, 32768
      %39 = vsyncadd [#allocation6], %s38
      %s40 = sshll.u32 [#allocation7], 4
      %s41 = int_to_ptr.vmem [resolvable:$true] %s40
      %46 = dma.hbm_to_vmem [thread:$0]  %s2, 32768, %s41, [#allocation6], 256, 256, 16
    $region13: #{tpu_custom_call.1} parent=1 // pred_fallthru
      _
    // Predicated region
    $region14: #{tpu_custom_call.1} parent=1 // pred_check
      _
    $region15: #{tpu_custom_call.1} parent=1 // pred_check_branch
      %48 = sbr.rel (0) target = $region17
    $region16: #{tpu_custom_call.1} parent=1 // pred_region
      %s50 = ssub.s32 208, 208
      %51 = vsyncadd [#allocation9], %s50
      %s53 = sshll.u32 [#allocation8], 4
      %s54 = int_to_ptr.vmem [resolvable:$true] %s53
      %56 = dma.hbm_to_vmem [thread:$0]  %s3, 208, %s54, [#allocation9]
    $region17: #{tpu_custom_call.1} parent=1 // pred_fallthru
      _
    // Predicated region
    $region18: #{tpu_custom_call.1} parent=1 // pred_check
      _
    $region19: #{tpu_custom_call.1} parent=1 // pred_check_branch
      %58 = sbr.rel (0) target = $region21
    $region20: #{tpu_custom_call.1} parent=1 // pred_region
      %59 = dma.done [#allocation3], 512
    $region21: #{tpu_custom_call.1} parent=1 // pred_fallthru
      _
    // Predicated region
    $region22: #{tpu_custom_call.1} parent=1 // pred_check
      _
    $region23: #{tpu_custom_call.1} parent=1 // pred_check_branch
      %61 = sbr.rel (0) target = $region25
    $region24: #{tpu_custom_call.1} parent=1 // pred_region
      %62 = dma.done [#allocation6], 36864
    $region25: #{tpu_custom_call.1} parent=1 // pred_fallthru
      _
    // Predicated region
    $region26: #{tpu_custom_call.1} parent=1 // pred_check
      _
    $region27: #{tpu_custom_call.1} parent=1 // pred_check_branch
      %64 = sbr.rel (0) target = $region29
    $region28: #{tpu_custom_call.1} parent=1 // pred_region
      %65 = dma.done [#allocation6], 32768
    $region29: #{tpu_custom_call.1} parent=1 // pred_fallthru
      _
    // Predicated region
    $region30: #{tpu_custom_call.1} parent=1 // pred_check
      _
    $region31: #{tpu_custom_call.1} parent=1 // pred_check_branch
      %67 = sbr.rel (0) target = $region33
    $region32: #{tpu_custom_call.1} parent=1 // pred_region
      %68 = dma.done [#allocation9], 208
    $region33: #{tpu_custom_call.1} parent=1 // pred_fallthru
      _
    %v70 = vld [vmem:[#allocation2] sm:$0xff]
    %v71 = vld [vmem:[#allocation2 + $0x8] sm:$0xff]
    %v72 = vld [vmem:[#allocation2 + $0x10] sm:$0xff]
    %v73 = vld [vmem:[#allocation2 + $0x18] sm:$0xff]
    %v74 = vpack.c.bf16 %v70, %v70
    %v75 = vpack.c.bf16 %v71, %v71
    %v76 = vpack.c.bf16 %v72, %v72
    %v77 = vpack.c.bf16 %v73, %v73
    %v78 = vld [vmem:[#allocation5] sm:$0xff]
    %v79 = vld [vmem:[#allocation5 + $0x8] sm:$0xff]
    %v80 = vld [vmem:[#allocation5 + $0x10] sm:$0xff]
    %v81 = vld [vmem:[#allocation5 + $0x18] sm:$0xff]
    %v82 = vld [vmem:[#allocation5 + $0x24] sm:$0xff]
    %v83 = vld [vmem:[#allocation5 + $0x2c] sm:$0xff]
    %v84 = vld [vmem:[#allocation5 + $0x34] sm:$0xff]
    %v85 = vld [vmem:[#allocation5 + $0x3c] sm:$0xff]
    %v86 = vld [vmem:[#allocation5 + $0x48] sm:$0xff]
    %v87 = vld [vmem:[#allocation5 + $0x50] sm:$0xff]
    %v88 = vld [vmem:[#allocation5 + $0x58] sm:$0xff]
    %v89 = vld [vmem:[#allocation5 + $0x60] sm:$0xff]
    %v90 = vld [vmem:[#allocation5 + $0x6c] sm:$0xff]
    %v91 = vld [vmem:[#allocation5 + $0x74] sm:$0xff]
    %v92 = vld [vmem:[#allocation5 + $0x7c] sm:$0xff]
    %v93 = vld [vmem:[#allocation5 + $0x84] sm:$0xff]
    %v94 = vld [vmem:[#allocation5 + $0x90] sm:$0xff]
    %v95 = vld [vmem:[#allocation5 + $0x98] sm:$0xff]
    %v96 = vld [vmem:[#allocation5 + $0xa0] sm:$0xff]
    %v97 = vld [vmem:[#allocation5 + $0xa8] sm:$0xff]
    %v98 = vld [vmem:[#allocation5 + $0xb4] sm:$0xff]
    %v99 = vld [vmem:[#allocation5 + $0xbc] sm:$0xff]
    %v100 = vld [vmem:[#allocation5 + $0xc4] sm:$0xff]
    %v101 = vld [vmem:[#allocation5 + $0xcc] sm:$0xff]
    %v102 = vld [vmem:[#allocation5 + $0xd8] sm:$0xff]
    %v103 = vld [vmem:[#allocation5 + $0xe0] sm:$0xff]
    %v104 = vld [vmem:[#allocation5 + $0xe8] sm:$0xff]
    %v105 = vld [vmem:[#allocation5 + $0xf0] sm:$0xff]
    %v106 = vld [vmem:[#allocation5 + $0xfc] sm:$0xff]
    %v107 = vld [vmem:[#allocation5 + $0x104] sm:$0xff]
    %v108 = vld [vmem:[#allocation5 + $0x10c] sm:$0xff]
    %v109 = vld [vmem:[#allocation5 + $0x114] sm:$0xff]
    %v110 = vld [vmem:[#allocation5 + $0x120] sm:$0xff]
    %v111 = vld [vmem:[#allocation5 + $0x128] sm:$0xff]
    %v112 = vld [vmem:[#allocation5 + $0x130] sm:$0xff]
    %v113 = vld [vmem:[#allocation5 + $0x138] sm:$0xff]
    %v114 = vld [vmem:[#allocation5 + $0x144] sm:$0xff]
    %v115 = vld [vmem:[#allocation5 + $0x14c] sm:$0xff]
    %v116 = vld [vmem:[#allocation5 + $0x154] sm:$0xff]
    %v117 = vld [vmem:[#allocation5 + $0x15c] sm:$0xff]
    %v118 = vld [vmem:[#allocation5 + $0x168] sm:$0xff]
    %v119 = vld [vmem:[#allocation5 + $0x170] sm:$0xff]
    %v120 = vld [vmem:[#allocation5 + $0x178] sm:$0xff]
    %v121 = vld [vmem:[#allocation5 + $0x180] sm:$0xff]
    %v122 = vld [vmem:[#allocation5 + $0x18c] sm:$0xff]
    %v123 = vld [vmem:[#allocation5 + $0x194] sm:$0xff]
    %v124 = vld [vmem:[#allocation5 + $0x19c] sm:$0xff]
    %v125 = vld [vmem:[#allocation5 + $0x1a4] sm:$0xff]
    %v126 = vld [vmem:[#allocation5 + $0x1b0] sm:$0xff]
    %v127 = vld [vmem:[#allocation5 + $0x1b8] sm:$0xff]
    %v128 = vld [vmem:[#allocation5 + $0x1c0] sm:$0xff]
    %v129 = vld [vmem:[#allocation5 + $0x1c8] sm:$0xff]
    %v130 = vld [vmem:[#allocation5 + $0x1d4] sm:$0xff]
    %v131 = vld [vmem:[#allocation5 + $0x1dc] sm:$0xff]
    %v132 = vld [vmem:[#allocation5 + $0x1e4] sm:$0xff]
    %v133 = vld [vmem:[#allocation5 + $0x1ec] sm:$0xff]
    %v134 = vld [vmem:[#allocation5 + $0x1f8] sm:$0xff]
    %v135 = vld [vmem:[#allocation5 + $0x200] sm:$0xff]
    %v136 = vld [vmem:[#allocation5 + $0x208] sm:$0xff]
    %v137 = vld [vmem:[#allocation5 + $0x210] sm:$0xff]
    %v138 = vld [vmem:[#allocation5 + $0x21c] sm:$0xff]
    %v139 = vld [vmem:[#allocation5 + $0x224] sm:$0xff]
    %v140 = vld [vmem:[#allocation5 + $0x22c] sm:$0xff]
    %v141 = vld [vmem:[#allocation5 + $0x234] sm:$0xff]
    %v142 = vld [vmem:[#allocation5 + $0x240] sm:$0xff]
    %v143 = vld [vmem:[#allocation5 + $0x248] sm:$0xff]
    %v144 = vld [vmem:[#allocation5 + $0x250] sm:$0xff]
    %v145 = vld [vmem:[#allocation5 + $0x258] sm:$0xff]
    %v146 = vld [vmem:[#allocation5 + $0x264] sm:$0xff]
    %v147 = vld [vmem:[#allocation5 + $0x26c] sm:$0xff]
    %v148 = vld [vmem:[#allocation5 + $0x274] sm:$0xff]
    %v149 = vld [vmem:[#allocation5 + $0x27c] sm:$0xff]
    %v150 = vld [vmem:[#allocation5 + $0x288] sm:$0xff]
    %v151 = vld [vmem:[#allocation5 + $0x290] sm:$0xff]
    %v152 = vld [vmem:[#allocation5 + $0x298] sm:$0xff]
    %v153 = vld [vmem:[#allocation5 + $0x2a0] sm:$0xff]
    %v154 = vld [vmem:[#allocation5 + $0x2ac] sm:$0xff]
    %v155 = vld [vmem:[#allocation5 + $0x2b4] sm:$0xff]
    %v156 = vld [vmem:[#allocation5 + $0x2bc] sm:$0xff]
    %v157 = vld [vmem:[#allocation5 + $0x2c4] sm:$0xff]
    %v158 = vld [vmem:[#allocation5 + $0x2d0] sm:$0xff]
    %v159 = vld [vmem:[#allocation5 + $0x2d8] sm:$0xff]
    %v160 = vld [vmem:[#allocation5 + $0x2e0] sm:$0xff]
    %v161 = vld [vmem:[#allocation5 + $0x2e8] sm:$0xff]
    %v162 = vld [vmem:[#allocation5 + $0x2f4] sm:$0xff]
    %v163 = vld [vmem:[#allocation5 + $0x2fc] sm:$0xff]
    %v164 = vld [vmem:[#allocation5 + $0x304] sm:$0xff]
    %v165 = vld [vmem:[#allocation5 + $0x30c] sm:$0xff]
    %v166 = vld [vmem:[#allocation5 + $0x318] sm:$0xff]
    %v167 = vld [vmem:[#allocation5 + $0x320] sm:$0xff]
    %v168 = vld [vmem:[#allocation5 + $0x328] sm:$0xff]
    %v169 = vld [vmem:[#allocation5 + $0x330] sm:$0xff]
    %v170 = vld [vmem:[#allocation5 + $0x33c] sm:$0xff]
    %v171 = vld [vmem:[#allocation5 + $0x344] sm:$0xff]
    %v172 = vld [vmem:[#allocation5 + $0x34c] sm:$0xff]
    %v173 = vld [vmem:[#allocation5 + $0x354] sm:$0xff]
    %v174 = vld [vmem:[#allocation5 + $0x360] sm:$0xff]
    %v175 = vld [vmem:[#allocation5 + $0x368] sm:$0xff]
    %v176 = vld [vmem:[#allocation5 + $0x370] sm:$0xff]
    %v177 = vld [vmem:[#allocation5 + $0x378] sm:$0xff]
    %v178 = vld [vmem:[#allocation5 + $0x384] sm:$0xff]
    %v179 = vld [vmem:[#allocation5 + $0x38c] sm:$0xff]
    %v180 = vld [vmem:[#allocation5 + $0x394] sm:$0xff]
    %v181 = vld [vmem:[#allocation5 + $0x39c] sm:$0xff]
    %v182 = vld [vmem:[#allocation5 + $0x3a8] sm:$0xff]
    %v183 = vld [vmem:[#allocation5 + $0x3b0] sm:$0xff]
    %v184 = vld [vmem:[#allocation5 + $0x3b8] sm:$0xff]
    %v185 = vld [vmem:[#allocation5 + $0x3c0] sm:$0xff]
    %v186 = vld [vmem:[#allocation5 + $0x3cc] sm:$0xff]
    %v187 = vld [vmem:[#allocation5 + $0x3d4] sm:$0xff]
    %v188 = vld [vmem:[#allocation5 + $0x3dc] sm:$0xff]
    %v189 = vld [vmem:[#allocation5 + $0x3e4] sm:$0xff]
    %v190 = vld [vmem:[#allocation5 + $0x3f0] sm:$0xff]
    %v191 = vld [vmem:[#allocation5 + $0x3f8] sm:$0xff]
    %v192 = vld [vmem:[#allocation5 + $0x400] sm:$0xff]
    %v193 = vld [vmem:[#allocation5 + $0x408] sm:$0xff]
    %v194 = vld [vmem:[#allocation5 + $0x414] sm:$0xff]
    %v195 = vld [vmem:[#allocation5 + $0x41c] sm:$0xff]
    %v196 = vld [vmem:[#allocation5 + $0x424] sm:$0xff]
    %v197 = vld [vmem:[#allocation5 + $0x42c] sm:$0xff]
    %v198 = vld [vmem:[#allocation5 + $0x438] sm:$0xff]
    %v199 = vld [vmem:[#allocation5 + $0x440] sm:$0xff]
    %v200 = vld [vmem:[#allocation5 + $0x448] sm:$0xff]
    %v201 = vld [vmem:[#allocation5 + $0x450] sm:$0xff]
    %v202 = vld [vmem:[#allocation5 + $0x45c] sm:$0xff]
    %v203 = vld [vmem:[#allocation5 + $0x464] sm:$0xff]
    %v204 = vld [vmem:[#allocation5 + $0x46c] sm:$0xff]
    %v205 = vld [vmem:[#allocation5 + $0x474] sm:$0xff]
    %v206 = vld [vmem:[#allocation5 + $0x480] sm:$0xff]
    %v207 = vld [vmem:[#allocation5 + $0x488] sm:$0xff]
    %v208 = vld [vmem:[#allocation5 + $0x490] sm:$0xff]
    %v209 = vld [vmem:[#allocation5 + $0x498] sm:$0xff]
    %v210 = vld [vmem:[#allocation5 + $0x4a4] sm:$0xff]
    %v211 = vld [vmem:[#allocation5 + $0x4ac] sm:$0xff]
    %v212 = vld [vmem:[#allocation5 + $0x4b4] sm:$0xff]
    %v213 = vld [vmem:[#allocation5 + $0x4bc] sm:$0xff]
    %v214 = vld [vmem:[#allocation5 + $0x4c8] sm:$0xff]
    %v215 = vld [vmem:[#allocation5 + $0x4d0] sm:$0xff]
    %v216 = vld [vmem:[#allocation5 + $0x4d8] sm:$0xff]
    %v217 = vld [vmem:[#allocation5 + $0x4e0] sm:$0xff]
    %v218 = vld [vmem:[#allocation5 + $0x4ec] sm:$0xff]
    %v219 = vld [vmem:[#allocation5 + $0x4f4] sm:$0xff]
    %v220 = vld [vmem:[#allocation5 + $0x4fc] sm:$0xff]
    %v221 = vld [vmem:[#allocation5 + $0x504] sm:$0xff]
    %v222 = vld [vmem:[#allocation5 + $0x510] sm:$0xff]
    %v223 = vld [vmem:[#allocation5 + $0x518] sm:$0xff]
    %v224 = vld [vmem:[#allocation5 + $0x520] sm:$0xff]
    %v225 = vld [vmem:[#allocation5 + $0x528] sm:$0xff]
    %v226 = vld [vmem:[#allocation5 + $0x534] sm:$0xff]
    %v227 = vld [vmem:[#allocation5 + $0x53c] sm:$0xff]
    %v228 = vld [vmem:[#allocation5 + $0x544] sm:$0xff]
    %v229 = vld [vmem:[#allocation5 + $0x54c] sm:$0xff]
    %v230 = vld [vmem:[#allocation5 + $0x558] sm:$0xff]
    %v231 = vld [vmem:[#allocation5 + $0x560] sm:$0xff]
    %v232 = vld [vmem:[#allocation5 + $0x568] sm:$0xff]
    %v233 = vld [vmem:[#allocation5 + $0x570] sm:$0xff]
    %v234 = vld [vmem:[#allocation5 + $0x57c] sm:$0xff]
    %v235 = vld [vmem:[#allocation5 + $0x584] sm:$0xff]
    %v236 = vld [vmem:[#allocation5 + $0x58c] sm:$0xff]
    %v237 = vld [vmem:[#allocation5 + $0x594] sm:$0xff]
    %v238 = vld [vmem:[#allocation5 + $0x5a0] sm:$0xff]
    %v239 = vld [vmem:[#allocation5 + $0x5a8] sm:$0xff]
    %v240 = vld [vmem:[#allocation5 + $0x5b0] sm:$0xff]
    %v241 = vld [vmem:[#allocation5 + $0x5b8] sm:$0xff]
    %v242 = vld [vmem:[#allocation5 + $0x5c4] sm:$0xff]
    %v243 = vld [vmem:[#allocation5 + $0x5cc] sm:$0xff]
    %v244 = vld [vmem:[#allocation5 + $0x5d4] sm:$0xff]
    %v245 = vld [vmem:[#allocation5 + $0x5dc] sm:$0xff]
    %v246 = vld [vmem:[#allocation5 + $0x5e8] sm:$0xff]
    %v247 = vld [vmem:[#allocation5 + $0x5f0] sm:$0xff]
    %v248 = vld [vmem:[#allocation5 + $0x5f8] sm:$0xff]
    %v249 = vld [vmem:[#allocation5 + $0x600] sm:$0xff]
    %v250 = vld [vmem:[#allocation5 + $0x60c] sm:$0xff]
    %v251 = vld [vmem:[#allocation5 + $0x614] sm:$0xff]
    %v252 = vld [vmem:[#allocation5 + $0x61c] sm:$0xff]
    %v253 = vld [vmem:[#allocation5 + $0x624] sm:$0xff]
    %v254 = vld [vmem:[#allocation5 + $0x630] sm:$0xff]
    %v255 = vld [vmem:[#allocation5 + $0x638] sm:$0xff]
    %v256 = vld [vmem:[#allocation5 + $0x640] sm:$0xff]
    %v257 = vld [vmem:[#allocation5 + $0x648] sm:$0xff]
    %v258 = vld [vmem:[#allocation5 + $0x654] sm:$0xff]
    %v259 = vld [vmem:[#allocation5 + $0x65c] sm:$0xff]
    %v260 = vld [vmem:[#allocation5 + $0x664] sm:$0xff]
    %v261 = vld [vmem:[#allocation5 + $0x66c] sm:$0xff]
    %v262 = vld [vmem:[#allocation5 + $0x678] sm:$0xff]
    %v263 = vld [vmem:[#allocation5 + $0x680] sm:$0xff]
    %v264 = vld [vmem:[#allocation5 + $0x688] sm:$0xff]
    %v265 = vld [vmem:[#allocation5 + $0x690] sm:$0xff]
    %v266 = vld [vmem:[#allocation5 + $0x69c] sm:$0xff]
    %v267 = vld [vmem:[#allocation5 + $0x6a4] sm:$0xff]
    %v268 = vld [vmem:[#allocation5 + $0x6ac] sm:$0xff]
    %v269 = vld [vmem:[#allocation5 + $0x6b4] sm:$0xff]
    %v270 = vld [vmem:[#allocation5 + $0x6c0] sm:$0xff]
    %v271 = vld [vmem:[#allocation5 + $0x6c8] sm:$0xff]
    %v272 = vld [vmem:[#allocation5 + $0x6d0] sm:$0xff]
    %v273 = vld [vmem:[#allocation5 + $0x6d8] sm:$0xff]
    %v274 = vld [vmem:[#allocation5 + $0x6e4] sm:$0xff]
    %v275 = vld [vmem:[#allocation5 + $0x6ec] sm:$0xff]
    %v276 = vld [vmem:[#allocation5 + $0x6f4] sm:$0xff]
    %v277 = vld [vmem:[#allocation5 + $0x6fc] sm:$0xff]
    %v278 = vld [vmem:[#allocation5 + $0x708] sm:$0xff]
    %v279 = vld [vmem:[#allocation5 + $0x710] sm:$0xff]
    %v280 = vld [vmem:[#allocation5 + $0x718] sm:$0xff]
    %v281 = vld [vmem:[#allocation5 + $0x720] sm:$0xff]
    %v282 = vld [vmem:[#allocation5 + $0x72c] sm:$0xff]
    %v283 = vld [vmem:[#allocation5 + $0x734] sm:$0xff]
    %v284 = vld [vmem:[#allocation5 + $0x73c] sm:$0xff]
    %v285 = vld [vmem:[#allocation5 + $0x744] sm:$0xff]
    %v286 = vld [vmem:[#allocation5 + $0x750] sm:$0xff]
    %v287 = vld [vmem:[#allocation5 + $0x758] sm:$0xff]
    %v288 = vld [vmem:[#allocation5 + $0x760] sm:$0xff]
    %v289 = vld [vmem:[#allocation5 + $0x768] sm:$0xff]
    %v290 = vld [vmem:[#allocation5 + $0x774] sm:$0xff]
    %v291 = vld [vmem:[#allocation5 + $0x77c] sm:$0xff]
    %v292 = vld [vmem:[#allocation5 + $0x784] sm:$0xff]
    %v293 = vld [vmem:[#allocation5 + $0x78c] sm:$0xff]
    %v294 = vld [vmem:[#allocation5 + $0x798] sm:$0xff]
    %v295 = vld [vmem:[#allocation5 + $0x7a0] sm:$0xff]
    %v296 = vld [vmem:[#allocation5 + $0x7a8] sm:$0xff]
    %v297 = vld [vmem:[#allocation5 + $0x7b0] sm:$0xff]
    %v298 = vld [vmem:[#allocation5 + $0x7bc] sm:$0xff]
    %v299 = vld [vmem:[#allocation5 + $0x7c4] sm:$0xff]
    %v300 = vld [vmem:[#allocation5 + $0x7cc] sm:$0xff]
    %v301 = vld [vmem:[#allocation5 + $0x7d4] sm:$0xff]
    %v302 = vld [vmem:[#allocation5 + $0x7e0] sm:$0xff]
    %v303 = vld [vmem:[#allocation5 + $0x7e8] sm:$0xff]
    %v304 = vld [vmem:[#allocation5 + $0x7f0] sm:$0xff]
    %v305 = vld [vmem:[#allocation5 + $0x7f8] sm:$0xff]
    %v306 = vld [vmem:[#allocation5 + $0x804] sm:$0xff]
    %v307 = vld [vmem:[#allocation5 + $0x80c] sm:$0xff]
    %v308 = vld [vmem:[#allocation5 + $0x814] sm:$0xff]
    %v309 = vld [vmem:[#allocation5 + $0x81c] sm:$0xff]
    %v310 = vld [vmem:[#allocation5 + $0x828] sm:$0xff]
    %v311 = vld [vmem:[#allocation5 + $0x830] sm:$0xff]
    %v312 = vld [vmem:[#allocation5 + $0x838] sm:$0xff]
    %v313 = vld [vmem:[#allocation5 + $0x840] sm:$0xff]
    %v314 = vld [vmem:[#allocation5 + $0x84c] sm:$0xff]
    %v315 = vld [vmem:[#allocation5 + $0x854] sm:$0xff]
    %v316 = vld [vmem:[#allocation5 + $0x85c] sm:$0xff]
    %v317 = vld [vmem:[#allocation5 + $0x864] sm:$0xff]
    %v318 = vld [vmem:[#allocation5 + $0x870] sm:$0xff]
    %v319 = vld [vmem:[#allocation5 + $0x878] sm:$0xff]
    %v320 = vld [vmem:[#allocation5 + $0x880] sm:$0xff]
    %v321 = vld [vmem:[#allocation5 + $0x888] sm:$0xff]
    %v322 = vld [vmem:[#allocation5 + $0x894] sm:$0xff]
    %v323 = vld [vmem:[#allocation5 + $0x89c] sm:$0xff]
    %v324 = vld [vmem:[#allocation5 + $0x8a4] sm:$0xff]
    %v325 = vld [vmem:[#allocation5 + $0x8ac] sm:$0xff]
    %v326 = vld [vmem:[#allocation5 + $0x8b8] sm:$0xff]
    %v327 = vld [vmem:[#allocation5 + $0x8c0] sm:$0xff]
    %v328 = vld [vmem:[#allocation5 + $0x8c8] sm:$0xff]
    %v329 = vld [vmem:[#allocation5 + $0x8d0] sm:$0xff]
    %v330 = vld [vmem:[#allocation5 + $0x8dc] sm:$0xff]
    %v331 = vld [vmem:[#allocation5 + $0x8e4] sm:$0xff]
    %v332 = vld [vmem:[#allocation5 + $0x8ec] sm:$0xff]
    %v333 = vld [vmem:[#allocation5 + $0x8f4] sm:$0xff]
    %v334 = vld [vmem:[#allocation5 + $0x20] sm:$0xf]
    %v335 = vld [vmem:[#allocation5 + $0x44] sm:$0xf]
    %v336 = vld [vmem:[#allocation5 + $0x68] sm:$0xf]
    %v337 = vld [vmem:[#allocation5 + $0x8c] sm:$0xf]
    %v338 = vld [vmem:[#allocation5 + $0xb0] sm:$0xf]
    %v339 = vld [vmem:[#allocation5 + $0xd4] sm:$0xf]
    %v340 = vld [vmem:[#allocation5 + $0xf8] sm:$0xf]
    %v341 = vld [vmem:[#allocation5 + $0x11c] sm:$0xf]
    %v342 = vld [vmem:[#allocation5 + $0x140] sm:$0xf]
    %v343 = vld [vmem:[#allocation5 + $0x164] sm:$0xf]
    %v344 = vld [vmem:[#allocation5 + $0x188] sm:$0xf]
    %v345 = vld [vmem:[#allocation5 + $0x1ac] sm:$0xf]
    %v346 = vld [vmem:[#allocation5 + $0x1d0] sm:$0xf]
    %v347 = vld [vmem:[#allocation5 + $0x1f4] sm:$0xf]
    %v348 = vld [vmem:[#allocation5 + $0x218] sm:$0xf]
    %v349 = vld [vmem:[#allocation5 + $0x23c] sm:$0xf]
    %v350 = vld [vmem:[#allocation5 + $0x260] sm:$0xf]
    %v351 = vld [vmem:[#allocation5 + $0x284] sm:$0xf]
    %v352 = vld [vmem:[#allocation5 + $0x2a8] sm:$0xf]
    %v353 = vld [vmem:[#allocation5 + $0x2cc] sm:$0xf]
    %v354 = vld [vmem:[#allocation5 + $0x2f0] sm:$0xf]
    %v355 = vld [vmem:[#allocation5 + $0x314] sm:$0xf]
    %v356 = vld [vmem:[#allocation5 + $0x338] sm:$0xf]
    %v357 = vld [vmem:[#allocation5 + $0x35c] sm:$0xf]
    %v358 = vld [vmem:[#allocation5 + $0x380] sm:$0xf]
    %v359 = vld [vmem:[#allocation5 + $0x3a4] sm:$0xf]
    %v360 = vld [vmem:[#allocation5 + $0x3c8] sm:$0xf]
    %v361 = vld [vmem:[#allocation5 + $0x3ec] sm:$0xf]
    %v362 = vld [vmem:[#allocation5 + $0x410] sm:$0xf]
    %v363 = vld [vmem:[#allocation5 + $0x434] sm:$0xf]
    %v364 = vld [vmem:[#allocation5 + $0x458] sm:$0xf]
    %v365 = vld [vmem:[#allocation5 + $0x47c] sm:$0xf]
    %v366 = vld [vmem:[#allocation5 + $0x4a0] sm:$0xf]
    %v367 = vld [vmem:[#allocation5 + $0x4c4] sm:$0xf]
    %v368 = vld [vmem:[#allocation5 + $0x4e8] sm:$0xf]
    %v369 = vld [vmem:[#allocation5 + $0x50c] sm:$0xf]
    %v370 = vld [vmem:[#allocation5 + $0x530] sm:$0xf]
    %v371 = vld [vmem:[#allocation5 + $0x554] sm:$0xf]
    %v372 = vld [vmem:[#allocation5 + $0x578] sm:$0xf]
    %v373 = vld [vmem:[#allocation5 + $0x59c] sm:$0xf]
    %v374 = vld [vmem:[#allocation5 + $0x5c0] sm:$0xf]
    %v375 = vld [vmem:[#allocation5 + $0x5e4] sm:$0xf]
    %v376 = vld [vmem:[#allocation5 + $0x608] sm:$0xf]
    %v377 = vld [vmem:[#allocation5 + $0x62c] sm:$0xf]
    %v378 = vld [vmem:[#allocation5 + $0x650] sm:$0xf]
    %v379 = vld [vmem:[#allocation5 + $0x674] sm:$0xf]
    %v380 = vld [vmem:[#allocation5 + $0x698] sm:$0xf]
    %v381 = vld [vmem:[#allocation5 + $0x6bc] sm:$0xf]
    %v382 = vld [vmem:[#allocation5 + $0x6e0] sm:$0xf]
    %v383 = vld [vmem:[#allocation5 + $0x704] sm:$0xf]
    %v384 = vld [vmem:[#allocation5 + $0x728] sm:$0xf]
    %v385 = vld [vmem:[#allocation5 + $0x74c] sm:$0xf]
    %v386 = vld [vmem:[#allocation5 + $0x770] sm:$0xf]
    %v387 = vld [vmem:[#allocation5 + $0x794] sm:$0xf]
    %v388 = vld [vmem:[#allocation5 + $0x7b8] sm:$0xf]
    %v389 = vld [vmem:[#allocation5 + $0x7dc] sm:$0xf]
    %v390 = vld [vmem:[#allocation5 + $0x800] sm:$0xf]
    %v391 = vld [vmem:[#allocation5 + $0x824] sm:$0xf]
    %v392 = vld [vmem:[#allocation5 + $0x848] sm:$0xf]
    %v393 = vld [vmem:[#allocation5 + $0x86c] sm:$0xf]
    %v394 = vld [vmem:[#allocation5 + $0x890] sm:$0xf]
    %v395 = vld [vmem:[#allocation5 + $0x8b4] sm:$0xf]
    %v396 = vld [vmem:[#allocation5 + $0x8d8] sm:$0xf]
    %v397 = vld [vmem:[#allocation5 + $0x8fc] sm:$0xf]
    %v398 = vld [vmem:[#allocation8] sm:$0xff]
    %v399 = vld [vmem:[#allocation8 + $0x8] sm:$0xf]
    %v400 = vld [vmem:[#allocation8 + $0xc] sm:$0x1]
    %v402 = vlaneseq
    %v403 = vshrl.u32 %v402, 7
    %v404 = vsub.s32 0, %v403
    %v405 = vrot.slane %v398, %v404
    %v406 = vlaneseq
    %v407 = vshrl.u32 %v406, 7
    %v408 = vsub.s32 1, %v407
    %v409 = vrot.slane %v398, %v408
    %v410 = vlaneseq
    %v411 = vshrl.u32 %v410, 7
    %v412 = vsub.s32 2, %v411
    %v413 = vrot.slane %v398, %v412
    %v414 = vlaneseq
    %v415 = vshrl.u32 %v414, 7
    %v416 = vsub.s32 3, %v415
    %v417 = vrot.slane %v398, %v416
    %v418 = vlaneseq
    %v419 = vshrl.u32 %v418, 7
    %v420 = vsub.s32 4, %v419
    %v421 = vrot.slane %v398, %v420
    %v422 = vlaneseq
    %v423 = vshrl.u32 %v422, 7
    %v424 = vsub.s32 5, %v423
    %v425 = vrot.slane %v398, %v424
    %v426 = vlaneseq
    %v427 = vshrl.u32 %v426, 7
    %v428 = vsub.s32 6, %v427
    %v429 = vrot.slane %v398, %v428
    %v430 = vlaneseq
    %v431 = vshrl.u32 %v430, 7
    %v432 = vsub.s32 7, %v431
    %v433 = vrot.slane %v398, %v432
    %v698 = vunpack.c.l.b16 %v78
    %v699 = vunpack.c.h.b16 %v78
    %v700 = vunpack.c.l.b16 %v79
    %v701 = vunpack.c.h.b16 %v79
    %v702 = vunpack.c.l.b16 %v80
    %v703 = vunpack.c.h.b16 %v80
    %v704 = vunpack.c.l.b16 %v81
    %v705 = vunpack.c.h.b16 %v81
    %v706 = vunpack.c.l.b16 %v82
    %v707 = vunpack.c.h.b16 %v82
    %v708 = vunpack.c.l.b16 %v83
    %v709 = vunpack.c.h.b16 %v83
    %v710 = vunpack.c.l.b16 %v84
    %v711 = vunpack.c.h.b16 %v84
    %v712 = vunpack.c.l.b16 %v85
    %v713 = vunpack.c.h.b16 %v85
    %v714 = vunpack.c.l.b16 %v86
    %v715 = vunpack.c.h.b16 %v86
    %v716 = vunpack.c.l.b16 %v87
    %v717 = vunpack.c.h.b16 %v87
    %v718 = vunpack.c.l.b16 %v88
    %v719 = vunpack.c.h.b16 %v88
    %v720 = vunpack.c.l.b16 %v89
    %v721 = vunpack.c.h.b16 %v89
    %v722 = vunpack.c.l.b16 %v90
    %v723 = vunpack.c.h.b16 %v90
    %v724 = vunpack.c.l.b16 %v91
    %v725 = vunpack.c.h.b16 %v91
    %v726 = vunpack.c.l.b16 %v92
    %v727 = vunpack.c.h.b16 %v92
    %v728 = vunpack.c.l.b16 %v93
    %v729 = vunpack.c.h.b16 %v93
    %v730 = vunpack.c.l.b16 %v94
    %v731 = vunpack.c.h.b16 %v94
    %v732 = vunpack.c.l.b16 %v95
    %v733 = vunpack.c.h.b16 %v95
    %v734 = vunpack.c.l.b16 %v96
    %v735 = vunpack.c.h.b16 %v96
    %v736 = vunpack.c.l.b16 %v97
    %v737 = vunpack.c.h.b16 %v97
    %v738 = vunpack.c.l.b16 %v98
    %v739 = vunpack.c.h.b16 %v98
    %v740 = vunpack.c.l.b16 %v99
    %v741 = vunpack.c.h.b16 %v99
    %v742 = vunpack.c.l.b16 %v100
    %v743 = vunpack.c.h.b16 %v100
    %v744 = vunpack.c.l.b16 %v101
    %v745 = vunpack.c.h.b16 %v101
    %v746 = vunpack.c.l.b16 %v102
    %v747 = vunpack.c.h.b16 %v102
    %v748 = vunpack.c.l.b16 %v103
    %v749 = vunpack.c.h.b16 %v103
    %v750 = vunpack.c.l.b16 %v104
    %v751 = vunpack.c.h.b16 %v104
    %v752 = vunpack.c.l.b16 %v105
    %v753 = vunpack.c.h.b16 %v105
    %v754 = vunpack.c.l.b16 %v106
    %v755 = vunpack.c.h.b16 %v106
    %v756 = vunpack.c.l.b16 %v107
    %v757 = vunpack.c.h.b16 %v107
    %v758 = vunpack.c.l.b16 %v108
    %v759 = vunpack.c.h.b16 %v108
    %v760 = vunpack.c.l.b16 %v109
    %v761 = vunpack.c.h.b16 %v109
    %v762 = vunpack.c.l.b16 %v110
    %v763 = vunpack.c.h.b16 %v110
    %v764 = vunpack.c.l.b16 %v111
    %v765 = vunpack.c.h.b16 %v111
    %v766 = vunpack.c.l.b16 %v112
    %v767 = vunpack.c.h.b16 %v112
    %v768 = vunpack.c.l.b16 %v113
    %v769 = vunpack.c.h.b16 %v113
    %v770 = vunpack.c.l.b16 %v114
    %v771 = vunpack.c.h.b16 %v114
    %v772 = vunpack.c.l.b16 %v115
    %v773 = vunpack.c.h.b16 %v115
    %v774 = vunpack.c.l.b16 %v116
    %v775 = vunpack.c.h.b16 %v116
    %v776 = vunpack.c.l.b16 %v117
    %v777 = vunpack.c.h.b16 %v117
    %v778 = vunpack.c.l.b16 %v118
    %v779 = vunpack.c.h.b16 %v118
    %v780 = vunpack.c.l.b16 %v119
    %v781 = vunpack.c.h.b16 %v119
    %v782 = vunpack.c.l.b16 %v120
    %v783 = vunpack.c.h.b16 %v120
    %v784 = vunpack.c.l.b16 %v121
    %v785 = vunpack.c.h.b16 %v121
    %v786 = vunpack.c.l.b16 %v122
    %v787 = vunpack.c.h.b16 %v122
    %v788 = vunpack.c.l.b16 %v123
    %v789 = vunpack.c.h.b16 %v123
    %v790 = vunpack.c.l.b16 %v124
    %v791 = vunpack.c.h.b16 %v124
    %v792 = vunpack.c.l.b16 %v125
    %v793 = vunpack.c.h.b16 %v125
    %v794 = vunpack.c.l.b16 %v126
    %v795 = vunpack.c.h.b16 %v126
    %v796 = vunpack.c.l.b16 %v127
    %v797 = vunpack.c.h.b16 %v127
    %v798 = vunpack.c.l.b16 %v128
    %v799 = vunpack.c.h.b16 %v128
    %v800 = vunpack.c.l.b16 %v129
    %v801 = vunpack.c.h.b16 %v129
    %v802 = vunpack.c.l.b16 %v130
    %v803 = vunpack.c.h.b16 %v130
    %v804 = vunpack.c.l.b16 %v131
    %v805 = vunpack.c.h.b16 %v131
    %v806 = vunpack.c.l.b16 %v132
    %v807 = vunpack.c.h.b16 %v132
    %v808 = vunpack.c.l.b16 %v133
    %v809 = vunpack.c.h.b16 %v133
    %v810 = vunpack.c.l.b16 %v134
    %v811 = vunpack.c.h.b16 %v134
    %v812 = vunpack.c.l.b16 %v135
    %v813 = vunpack.c.h.b16 %v135
    %v814 = vunpack.c.l.b16 %v136
    %v815 = vunpack.c.h.b16 %v136
    %v816 = vunpack.c.l.b16 %v137
    %v817 = vunpack.c.h.b16 %v137
    %v818 = vunpack.c.l.b16 %v138
    %v819 = vunpack.c.h.b16 %v138
    %v820 = vunpack.c.l.b16 %v139
    %v821 = vunpack.c.h.b16 %v139
    %v822 = vunpack.c.l.b16 %v140
    %v823 = vunpack.c.h.b16 %v140
    %v824 = vunpack.c.l.b16 %v141
    %v825 = vunpack.c.h.b16 %v141
    %v826 = vunpack.c.l.b16 %v142
    %v827 = vunpack.c.h.b16 %v142
    %v828 = vunpack.c.l.b16 %v143
    %v829 = vunpack.c.h.b16 %v143
    %v830 = vunpack.c.l.b16 %v144
    %v831 = vunpack.c.h.b16 %v144
    %v832 = vunpack.c.l.b16 %v145
    %v833 = vunpack.c.h.b16 %v145
    %v834 = vunpack.c.l.b16 %v146
    %v835 = vunpack.c.h.b16 %v146
    %v836 = vunpack.c.l.b16 %v147
    %v837 = vunpack.c.h.b16 %v147
    %v838 = vunpack.c.l.b16 %v148
    %v839 = vunpack.c.h.b16 %v148
    %v840 = vunpack.c.l.b16 %v149
    %v841 = vunpack.c.h.b16 %v149
    %v842 = vunpack.c.l.b16 %v150
    %v843 = vunpack.c.h.b16 %v150
    %v844 = vunpack.c.l.b16 %v151
    %v845 = vunpack.c.h.b16 %v151
    %v846 = vunpack.c.l.b16 %v152
    %v847 = vunpack.c.h.b16 %v152
    %v848 = vunpack.c.l.b16 %v153
    %v849 = vunpack.c.h.b16 %v153
    %v850 = vunpack.c.l.b16 %v154
    %v851 = vunpack.c.h.b16 %v154
    %v852 = vunpack.c.l.b16 %v155
    %v853 = vunpack.c.h.b16 %v155
    %v854 = vunpack.c.l.b16 %v156
    %v855 = vunpack.c.h.b16 %v156
    %v856 = vunpack.c.l.b16 %v157
    %v857 = vunpack.c.h.b16 %v157
    %v858 = vunpack.c.l.b16 %v158
    %v859 = vunpack.c.h.b16 %v158
    %v860 = vunpack.c.l.b16 %v159
    %v861 = vunpack.c.h.b16 %v159
    %v862 = vunpack.c.l.b16 %v160
    %v863 = vunpack.c.h.b16 %v160
    %v864 = vunpack.c.l.b16 %v161
    %v865 = vunpack.c.h.b16 %v161
    %v866 = vunpack.c.l.b16 %v162
    %v867 = vunpack.c.h.b16 %v162
    %v868 = vunpack.c.l.b16 %v163
    %v869 = vunpack.c.h.b16 %v163
    %v870 = vunpack.c.l.b16 %v164
    %v871 = vunpack.c.h.b16 %v164
    %v872 = vunpack.c.l.b16 %v165
    %v873 = vunpack.c.h.b16 %v165
    %v874 = vunpack.c.l.b16 %v166
    %v875 = vunpack.c.h.b16 %v166
    %v876 = vunpack.c.l.b16 %v167
    %v877 = vunpack.c.h.b16 %v167
    %v878 = vunpack.c.l.b16 %v168
    %v879 = vunpack.c.h.b16 %v168
    %v880 = vunpack.c.l.b16 %v169
    %v881 = vunpack.c.h.b16 %v169
    %v882 = vunpack.c.l.b16 %v170
    %v883 = vunpack.c.h.b16 %v170
    %v884 = vunpack.c.l.b16 %v171
    %v885 = vunpack.c.h.b16 %v171
    %v886 = vunpack.c.l.b16 %v172
    %v887 = vunpack.c.h.b16 %v172
    %v888 = vunpack.c.l.b16 %v173
    %v889 = vunpack.c.h.b16 %v173
    %v890 = vunpack.c.l.b16 %v174
    %v891 = vunpack.c.h.b16 %v174
    %v892 = vunpack.c.l.b16 %v175
    %v893 = vunpack.c.h.b16 %v175
    %v894 = vunpack.c.l.b16 %v176
    %v895 = vunpack.c.h.b16 %v176
    %v896 = vunpack.c.l.b16 %v177
    %v897 = vunpack.c.h.b16 %v177
    %v898 = vunpack.c.l.b16 %v178
    %v899 = vunpack.c.h.b16 %v178
    %v900 = vunpack.c.l.b16 %v179
    %v901 = vunpack.c.h.b16 %v179
    %v902 = vunpack.c.l.b16 %v180
    %v903 = vunpack.c.h.b16 %v180
    %v904 = vunpack.c.l.b16 %v181
    %v905 = vunpack.c.h.b16 %v181
    %v906 = vunpack.c.l.b16 %v182
    %v907 = vunpack.c.h.b16 %v182
    %v908 = vunpack.c.l.b16 %v183
    %v909 = vunpack.c.h.b16 %v183
    %v910 = vunpack.c.l.b16 %v184
    %v911 = vunpack.c.h.b16 %v184
    %v912 = vunpack.c.l.b16 %v185
    %v913 = vunpack.c.h.b16 %v185
    %v914 = vunpack.c.l.b16 %v186
    %v915 = vunpack.c.h.b16 %v186
    %v916 = vunpack.c.l.b16 %v187
    %v917 = vunpack.c.h.b16 %v187
    %v918 = vunpack.c.l.b16 %v188
    %v919 = vunpack.c.h.b16 %v188
    %v920 = vunpack.c.l.b16 %v189
    %v921 = vunpack.c.h.b16 %v189
    %v922 = vunpack.c.l.b16 %v190
    %v923 = vunpack.c.h.b16 %v190
    %v924 = vunpack.c.l.b16 %v191
    %v925 = vunpack.c.h.b16 %v191
    %v926 = vunpack.c.l.b16 %v192
    %v927 = vunpack.c.h.b16 %v192
    %v928 = vunpack.c.l.b16 %v193
    %v929 = vunpack.c.h.b16 %v193
    %v930 = vunpack.c.l.b16 %v194
    %v931 = vunpack.c.h.b16 %v194
    %v932 = vunpack.c.l.b16 %v195
    %v933 = vunpack.c.h.b16 %v195
    %v934 = vunpack.c.l.b16 %v196
    %v935 = vunpack.c.h.b16 %v196
    %v936 = vunpack.c.l.b16 %v197
    %v937 = vunpack.c.h.b16 %v197
    %v938 = vunpack.c.l.b16 %v198
    %v939 = vunpack.c.h.b16 %v198
    %v940 = vunpack.c.l.b16 %v199
    %v941 = vunpack.c.h.b16 %v199
    %v942 = vunpack.c.l.b16 %v200
    %v943 = vunpack.c.h.b16 %v200
    %v944 = vunpack.c.l.b16 %v201
    %v945 = vunpack.c.h.b16 %v201
    %v946 = vunpack.c.l.b16 %v202
    %v947 = vunpack.c.h.b16 %v202
    %v948 = vunpack.c.l.b16 %v203
    %v949 = vunpack.c.h.b16 %v203
    %v950 = vunpack.c.l.b16 %v204
    %v951 = vunpack.c.h.b16 %v204
    %v952 = vunpack.c.l.b16 %v205
    %v953 = vunpack.c.h.b16 %v205
    %v954 = vunpack.c.l.b16 %v206
    %v955 = vunpack.c.h.b16 %v206
    %v956 = vunpack.c.l.b16 %v207
    %v957 = vunpack.c.h.b16 %v207
    %v958 = vunpack.c.l.b16 %v208
    %v959 = vunpack.c.h.b16 %v208
    %v960 = vunpack.c.l.b16 %v209
    %v961 = vunpack.c.h.b16 %v209
    %v962 = vunpack.c.l.b16 %v210
    %v963 = vunpack.c.h.b16 %v210
    %v964 = vunpack.c.l.b16 %v211
    %v965 = vunpack.c.h.b16 %v211
    %v966 = vunpack.c.l.b16 %v212
    %v967 = vunpack.c.h.b16 %v212
    %v968 = vunpack.c.l.b16 %v213
    %v969 = vunpack.c.h.b16 %v213
    %v970 = vunpack.c.l.b16 %v214
    %v971 = vunpack.c.h.b16 %v214
    %v972 = vunpack.c.l.b16 %v215
    %v973 = vunpack.c.h.b16 %v215
    %v974 = vunpack.c.l.b16 %v216
    %v975 = vunpack.c.h.b16 %v216
    %v976 = vunpack.c.l.b16 %v217
    %v977 = vunpack.c.h.b16 %v217
    %v978 = vunpack.c.l.b16 %v218
    %v979 = vunpack.c.h.b16 %v218
    %v980 = vunpack.c.l.b16 %v219
    %v981 = vunpack.c.h.b16 %v219
    %v982 = vunpack.c.l.b16 %v220
    %v983 = vunpack.c.h.b16 %v220
    %v984 = vunpack.c.l.b16 %v221
    %v985 = vunpack.c.h.b16 %v221
    %v986 = vunpack.c.l.b16 %v222
    %v987 = vunpack.c.h.b16 %v222
    %v988 = vunpack.c.l.b16 %v223
    %v989 = vunpack.c.h.b16 %v223
    %v990 = vunpack.c.l.b16 %v224
    %v991 = vunpack.c.h.b16 %v224
    %v992 = vunpack.c.l.b16 %v225
    %v993 = vunpack.c.h.b16 %v225
    %v994 = vunpack.c.l.b16 %v226
    %v995 = vunpack.c.h.b16 %v226
    %v996 = vunpack.c.l.b16 %v227
    %v997 = vunpack.c.h.b16 %v227
    %v998 = vunpack.c.l.b16 %v228
    %v999 = vunpack.c.h.b16 %v228
    %v1000 = vunpack.c.l.b16 %v229
    %v1001 = vunpack.c.h.b16 %v229
    %v1002 = vunpack.c.l.b16 %v230
    %v1003 = vunpack.c.h.b16 %v230
    %v1004 = vunpack.c.l.b16 %v231
    %v1005 = vunpack.c.h.b16 %v231
    %v1006 = vunpack.c.l.b16 %v232
    %v1007 = vunpack.c.h.b16 %v232
    %v1008 = vunpack.c.l.b16 %v233
    %v1009 = vunpack.c.h.b16 %v233
    %v1010 = vunpack.c.l.b16 %v234
    %v1011 = vunpack.c.h.b16 %v234
    %v1012 = vunpack.c.l.b16 %v235
    %v1013 = vunpack.c.h.b16 %v235
    %v1014 = vunpack.c.l.b16 %v236
    %v1015 = vunpack.c.h.b16 %v236
    %v1016 = vunpack.c.l.b16 %v237
    %v1017 = vunpack.c.h.b16 %v237
    %v1018 = vunpack.c.l.b16 %v238
    %v1019 = vunpack.c.h.b16 %v238
    %v1020 = vunpack.c.l.b16 %v239
    %v1021 = vunpack.c.h.b16 %v239
    %v1022 = vunpack.c.l.b16 %v240
    %v1023 = vunpack.c.h.b16 %v240
    %v1024 = vunpack.c.l.b16 %v241
    %v1025 = vunpack.c.h.b16 %v241
    %v1026 = vunpack.c.l.b16 %v242
    %v1027 = vunpack.c.h.b16 %v242
    %v1028 = vunpack.c.l.b16 %v243
    %v1029 = vunpack.c.h.b16 %v243
    %v1030 = vunpack.c.l.b16 %v244
    %v1031 = vunpack.c.h.b16 %v244
    %v1032 = vunpack.c.l.b16 %v245
    %v1033 = vunpack.c.h.b16 %v245
    %v1034 = vunpack.c.l.b16 %v246
    %v1035 = vunpack.c.h.b16 %v246
    %v1036 = vunpack.c.l.b16 %v247
    %v1037 = vunpack.c.h.b16 %v247
    %v1038 = vunpack.c.l.b16 %v248
    %v1039 = vunpack.c.h.b16 %v248
    %v1040 = vunpack.c.l.b16 %v249
    %v1041 = vunpack.c.h.b16 %v249
    %v1042 = vunpack.c.l.b16 %v250
    %v1043 = vunpack.c.h.b16 %v250
    %v1044 = vunpack.c.l.b16 %v251
    %v1045 = vunpack.c.h.b16 %v251
    %v1046 = vunpack.c.l.b16 %v252
    %v1047 = vunpack.c.h.b16 %v252
    %v1048 = vunpack.c.l.b16 %v253
    %v1049 = vunpack.c.h.b16 %v253
    %v1050 = vunpack.c.l.b16 %v254
    %v1051 = vunpack.c.h.b16 %v254
    %v1052 = vunpack.c.l.b16 %v255
    %v1053 = vunpack.c.h.b16 %v255
    %v1054 = vunpack.c.l.b16 %v256
    %v1055 = vunpack.c.h.b16 %v256
    %v1056 = vunpack.c.l.b16 %v257
    %v1057 = vunpack.c.h.b16 %v257
    %v1058 = vunpack.c.l.b16 %v258
    %v1059 = vunpack.c.h.b16 %v258
    %v1060 = vunpack.c.l.b16 %v259
    %v1061 = vunpack.c.h.b16 %v259
    %v1062 = vunpack.c.l.b16 %v260
    %v1063 = vunpack.c.h.b16 %v260
    %v1064 = vunpack.c.l.b16 %v261
    %v1065 = vunpack.c.h.b16 %v261
    %v1066 = vunpack.c.l.b16 %v262
    %v1067 = vunpack.c.h.b16 %v262
    %v1068 = vunpack.c.l.b16 %v263
    %v1069 = vunpack.c.h.b16 %v263
    %v1070 = vunpack.c.l.b16 %v264
    %v1071 = vunpack.c.h.b16 %v264
    %v1072 = vunpack.c.l.b16 %v265
    %v1073 = vunpack.c.h.b16 %v265
    %v1074 = vunpack.c.l.b16 %v266
    %v1075 = vunpack.c.h.b16 %v266
    %v1076 = vunpack.c.l.b16 %v267
    %v1077 = vunpack.c.h.b16 %v267
    %v1078 = vunpack.c.l.b16 %v268
    %v1079 = vunpack.c.h.b16 %v268
    %v1080 = vunpack.c.l.b16 %v269
    %v1081 = vunpack.c.h.b16 %v269
    %v1082 = vunpack.c.l.b16 %v270
    %v1083 = vunpack.c.h.b16 %v270
    %v1084 = vunpack.c.l.b16 %v271
    %v1085 = vunpack.c.h.b16 %v271
    %v1086 = vunpack.c.l.b16 %v272
    %v1087 = vunpack.c.h.b16 %v272
    %v1088 = vunpack.c.l.b16 %v273
    %v1089 = vunpack.c.h.b16 %v273
    %v1090 = vunpack.c.l.b16 %v274
    %v1091 = vunpack.c.h.b16 %v274
    %v1092 = vunpack.c.l.b16 %v275
    %v1093 = vunpack.c.h.b16 %v275
    %v1094 = vunpack.c.l.b16 %v276
    %v1095 = vunpack.c.h.b16 %v276
    %v1096 = vunpack.c.l.b16 %v277
    %v1097 = vunpack.c.h.b16 %v277
    %v1098 = vunpack.c.l.b16 %v278
    %v1099 = vunpack.c.h.b16 %v278
    %v1100 = vunpack.c.l.b16 %v279
    %v1101 = vunpack.c.h.b16 %v279
    %v1102 = vunpack.c.l.b16 %v280
    %v1103 = vunpack.c.h.b16 %v280
    %v1104 = vunpack.c.l.b16 %v281
    %v1105 = vunpack.c.h.b16 %v281
    %v1106 = vunpack.c.l.b16 %v282
    %v1107 = vunpack.c.h.b16 %v282
    %v1108 = vunpack.c.l.b16 %v283
    %v1109 = vunpack.c.h.b16 %v283
    %v1110 = vunpack.c.l.b16 %v284
    %v1111 = vunpack.c.h.b16 %v284
    %v1112 = vunpack.c.l.b16 %v285
    %v1113 = vunpack.c.h.b16 %v285
    %v1114 = vunpack.c.l.b16 %v286
    %v1115 = vunpack.c.h.b16 %v286
    %v1116 = vunpack.c.l.b16 %v287
    %v1117 = vunpack.c.h.b16 %v287
    %v1118 = vunpack.c.l.b16 %v288
    %v1119 = vunpack.c.h.b16 %v288
    %v1120 = vunpack.c.l.b16 %v289
    %v1121 = vunpack.c.h.b16 %v289
    %v1122 = vunpack.c.l.b16 %v290
    %v1123 = vunpack.c.h.b16 %v290
    %v1124 = vunpack.c.l.b16 %v291
    %v1125 = vunpack.c.h.b16 %v291
    %v1126 = vunpack.c.l.b16 %v292
    %v1127 = vunpack.c.h.b16 %v292
    %v1128 = vunpack.c.l.b16 %v293
    %v1129 = vunpack.c.h.b16 %v293
    %v1130 = vunpack.c.l.b16 %v294
    %v1131 = vunpack.c.h.b16 %v294
    %v1132 = vunpack.c.l.b16 %v295
    %v1133 = vunpack.c.h.b16 %v295
    %v1134 = vunpack.c.l.b16 %v296
    %v1135 = vunpack.c.h.b16 %v296
    %v1136 = vunpack.c.l.b16 %v297
    %v1137 = vunpack.c.h.b16 %v297
    %v1138 = vunpack.c.l.b16 %v298
    %v1139 = vunpack.c.h.b16 %v298
    %v1140 = vunpack.c.l.b16 %v299
    %v1141 = vunpack.c.h.b16 %v299
    %v1142 = vunpack.c.l.b16 %v300
    %v1143 = vunpack.c.h.b16 %v300
    %v1144 = vunpack.c.l.b16 %v301
    %v1145 = vunpack.c.h.b16 %v301
    %v1146 = vunpack.c.l.b16 %v302
    %v1147 = vunpack.c.h.b16 %v302
    %v1148 = vunpack.c.l.b16 %v303
    %v1149 = vunpack.c.h.b16 %v303
    %v1150 = vunpack.c.l.b16 %v304
    %v1151 = vunpack.c.h.b16 %v304
    %v1152 = vunpack.c.l.b16 %v305
    %v1153 = vunpack.c.h.b16 %v305
    %v1154 = vunpack.c.l.b16 %v306
    %v1155 = vunpack.c.h.b16 %v306
    %v1156 = vunpack.c.l.b16 %v307
    %v1157 = vunpack.c.h.b16 %v307
    %v1158 = vunpack.c.l.b16 %v308
    %v1159 = vunpack.c.h.b16 %v308
    %v1160 = vunpack.c.l.b16 %v309
    %v1161 = vunpack.c.h.b16 %v309
    %v1162 = vunpack.c.l.b16 %v310
    %v1163 = vunpack.c.h.b16 %v310
    %v1164 = vunpack.c.l.b16 %v311
    %v1165 = vunpack.c.h.b16 %v311
    %v1166 = vunpack.c.l.b16 %v312
    %v1167 = vunpack.c.h.b16 %v312
    %v1168 = vunpack.c.l.b16 %v313
    %v1169 = vunpack.c.h.b16 %v313
    %v1170 = vunpack.c.l.b16 %v314
    %v1171 = vunpack.c.h.b16 %v314
    %v1172 = vunpack.c.l.b16 %v315
    %v1173 = vunpack.c.h.b16 %v315
    %v1174 = vunpack.c.l.b16 %v316
    %v1175 = vunpack.c.h.b16 %v316
    %v1176 = vunpack.c.l.b16 %v317
    %v1177 = vunpack.c.h.b16 %v317
    %v1178 = vunpack.c.l.b16 %v318
    %v1179 = vunpack.c.h.b16 %v318
    %v1180 = vunpack.c.l.b16 %v319
    %v1181 = vunpack.c.h.b16 %v319
    %v1182 = vunpack.c.l.b16 %v320
    %v1183 = vunpack.c.h.b16 %v320
    %v1184 = vunpack.c.l.b16 %v321
    %v1185 = vunpack.c.h.b16 %v321
    %v1186 = vunpack.c.l.b16 %v322
    %v1187 = vunpack.c.h.b16 %v322
    %v1188 = vunpack.c.l.b16 %v323
    %v1189 = vunpack.c.h.b16 %v323
    %v1190 = vunpack.c.l.b16 %v324
    %v1191 = vunpack.c.h.b16 %v324
    %v1192 = vunpack.c.l.b16 %v325
    %v1193 = vunpack.c.h.b16 %v325
    %v1194 = vunpack.c.l.b16 %v326
    %v1195 = vunpack.c.h.b16 %v326
    %v1196 = vunpack.c.l.b16 %v327
    %v1197 = vunpack.c.h.b16 %v327
    %v1198 = vunpack.c.l.b16 %v328
    %v1199 = vunpack.c.h.b16 %v328
    %v1200 = vunpack.c.l.b16 %v329
    %v1201 = vunpack.c.h.b16 %v329
    %v1202 = vunpack.c.l.b16 %v330
    %v1203 = vunpack.c.h.b16 %v330
    %v1204 = vunpack.c.l.b16 %v331
    %v1205 = vunpack.c.h.b16 %v331
    %v1206 = vunpack.c.l.b16 %v332
    %v1207 = vunpack.c.h.b16 %v332
    %v1208 = vunpack.c.l.b16 %v333
    %v1209 = vunpack.c.h.b16 %v333
    %v1210 = vpack.c.b16 %v706, %v698
    %v1211 = vpack.c.b16 %v707, %v699
    %v1212 = vpack.c.b16 %v708, %v700
    %v1213 = vpack.c.b16 %v709, %v701
    %v1214 = vpack.c.b16 %v710, %v702
    %v1215 = vpack.c.b16 %v711, %v703
    %v1216 = vpack.c.b16 %v712, %v704
    %v1217 = vpack.c.b16 %v713, %v705
    %v1218 = vpack.c.b16 %v722, %v714
    %v1219 = vpack.c.b16 %v723, %v715
    %v1220 = vpack.c.b16 %v724, %v716
    %v1221 = vpack.c.b16 %v725, %v717
    %v1222 = vpack.c.b16 %v726, %v718
    %v1223 = vpack.c.b16 %v727, %v719
    %v1224 = vpack.c.b16 %v728, %v720
    %v1225 = vpack.c.b16 %v729, %v721
    %v1226 = vpack.c.b16 %v738, %v730
    %v1227 = vpack.c.b16 %v739, %v731
    %v1228 = vpack.c.b16 %v740, %v732
    %v1229 = vpack.c.b16 %v741, %v733
    %v1230 = vpack.c.b16 %v742, %v734
    %v1231 = vpack.c.b16 %v743, %v735
    %v1232 = vpack.c.b16 %v744, %v736
    %v1233 = vpack.c.b16 %v745, %v737
    %v1234 = vpack.c.b16 %v754, %v746
    %v1235 = vpack.c.b16 %v755, %v747
    %v1236 = vpack.c.b16 %v756, %v748
    %v1237 = vpack.c.b16 %v757, %v749
    %v1238 = vpack.c.b16 %v758, %v750
    %v1239 = vpack.c.b16 %v759, %v751
    %v1240 = vpack.c.b16 %v760, %v752
    %v1241 = vpack.c.b16 %v761, %v753
    %v1242 = vpack.c.b16 %v770, %v762
    %v1243 = vpack.c.b16 %v771, %v763
    %v1244 = vpack.c.b16 %v772, %v764
    %v1245 = vpack.c.b16 %v773, %v765
    %v1246 = vpack.c.b16 %v774, %v766
    %v1247 = vpack.c.b16 %v775, %v767
    %v1248 = vpack.c.b16 %v776, %v768
    %v1249 = vpack.c.b16 %v777, %v769
    %v1250 = vpack.c.b16 %v786, %v778
    %v1251 = vpack.c.b16 %v787, %v779
    %v1252 = vpack.c.b16 %v788, %v780
    %v1253 = vpack.c.b16 %v789, %v781
    %v1254 = vpack.c.b16 %v790, %v782
    %v1255 = vpack.c.b16 %v791, %v783
    %v1256 = vpack.c.b16 %v792, %v784
    %v1257 = vpack.c.b16 %v793, %v785
    %v1258 = vpack.c.b16 %v802, %v794
    %v1259 = vpack.c.b16 %v803, %v795
    %v1260 = vpack.c.b16 %v804, %v796
    %v1261 = vpack.c.b16 %v805, %v797
    %v1262 = vpack.c.b16 %v806, %v798
    %v1263 = vpack.c.b16 %v807, %v799
    %v1264 = vpack.c.b16 %v808, %v800
    %v1265 = vpack.c.b16 %v809, %v801
    %v1266 = vpack.c.b16 %v818, %v810
    %v1267 = vpack.c.b16 %v819, %v811
    %v1268 = vpack.c.b16 %v820, %v812
    %v1269 = vpack.c.b16 %v821, %v813
    %v1270 = vpack.c.b16 %v822, %v814
    %v1271 = vpack.c.b16 %v823, %v815
    %v1272 = vpack.c.b16 %v824, %v816
    %v1273 = vpack.c.b16 %v825, %v817
    %v1274 = vpack.c.b16 %v834, %v826
    %v1275 = vpack.c.b16 %v835, %v827
    %v1276 = vpack.c.b16 %v836, %v828
    %v1277 = vpack.c.b16 %v837, %v829
    %v1278 = vpack.c.b16 %v838, %v830
    %v1279 = vpack.c.b16 %v839, %v831
    %v1280 = vpack.c.b16 %v840, %v832
    %v1281 = vpack.c.b16 %v841, %v833
    %v1282 = vpack.c.b16 %v850, %v842
    %v1283 = vpack.c.b16 %v851, %v843
    %v1284 = vpack.c.b16 %v852, %v844
    %v1285 = vpack.c.b16 %v853, %v845
    %v1286 = vpack.c.b16 %v854, %v846
    %v1287 = vpack.c.b16 %v855, %v847
    %v1288 = vpack.c.b16 %v856, %v848
    %v1289 = vpack.c.b16 %v857, %v849
    %v1290 = vpack.c.b16 %v866, %v858
    %v1291 = vpack.c.b16 %v867, %v859
    %v1292 = vpack.c.b16 %v868, %v860
    %v1293 = vpack.c.b16 %v869, %v861
    %v1294 = vpack.c.b16 %v870, %v862
    %v1295 = vpack.c.b16 %v871, %v863
    %v1296 = vpack.c.b16 %v872, %v864
    %v1297 = vpack.c.b16 %v873, %v865
    %v1298 = vpack.c.b16 %v882, %v874
    %v1299 = vpack.c.b16 %v883, %v875
    %v1300 = vpack.c.b16 %v884, %v876
    %v1301 = vpack.c.b16 %v885, %v877
    %v1302 = vpack.c.b16 %v886, %v878
    %v1303 = vpack.c.b16 %v887, %v879
    %v1304 = vpack.c.b16 %v888, %v880
    %v1305 = vpack.c.b16 %v889, %v881
    %v1306 = vpack.c.b16 %v898, %v890
    %v1307 = vpack.c.b16 %v899, %v891
    %v1308 = vpack.c.b16 %v900, %v892
    %v1309 = vpack.c.b16 %v901, %v893
    %v1310 = vpack.c.b16 %v902, %v894
    %v1311 = vpack.c.b16 %v903, %v895
    %v1312 = vpack.c.b16 %v904, %v896
    %v1313 = vpack.c.b16 %v905, %v897
    %v1314 = vpack.c.b16 %v914, %v906
    %v1315 = vpack.c.b16 %v915, %v907
    %v1316 = vpack.c.b16 %v916, %v908
    %v1317 = vpack.c.b16 %v917, %v909
    %v1318 = vpack.c.b16 %v918, %v910
    %v1319 = vpack.c.b16 %v919, %v911
    %v1320 = vpack.c.b16 %v920, %v912
    %v1321 = vpack.c.b16 %v921, %v913
    %v1322 = vpack.c.b16 %v930, %v922
    %v1323 = vpack.c.b16 %v931, %v923
    %v1324 = vpack.c.b16 %v932, %v924
    %v1325 = vpack.c.b16 %v933, %v925
    %v1326 = vpack.c.b16 %v934, %v926
    %v1327 = vpack.c.b16 %v935, %v927
    %v1328 = vpack.c.b16 %v936, %v928
    %v1329 = vpack.c.b16 %v937, %v929
    %v1330 = vpack.c.b16 %v946, %v938
    %v1331 = vpack.c.b16 %v947, %v939
    %v1332 = vpack.c.b16 %v948, %v940
    %v1333 = vpack.c.b16 %v949, %v941
    %v1334 = vpack.c.b16 %v950, %v942
    %v1335 = vpack.c.b16 %v951, %v943
    %v1336 = vpack.c.b16 %v952, %v944
    %v1337 = vpack.c.b16 %v953, %v945
    %v1338 = vpack.c.b16 %v962, %v954
    %v1339 = vpack.c.b16 %v963, %v955
    %v1340 = vpack.c.b16 %v964, %v956
    %v1341 = vpack.c.b16 %v965, %v957
    %v1342 = vpack.c.b16 %v966, %v958
    %v1343 = vpack.c.b16 %v967, %v959
    %v1344 = vpack.c.b16 %v968, %v960
    %v1345 = vpack.c.b16 %v969, %v961
    %v1346 = vpack.c.b16 %v978, %v970
    %v1347 = vpack.c.b16 %v979, %v971
    %v1348 = vpack.c.b16 %v980, %v972
    %v1349 = vpack.c.b16 %v981, %v973
    %v1350 = vpack.c.b16 %v982, %v974
    %v1351 = vpack.c.b16 %v983, %v975
    %v1352 = vpack.c.b16 %v984, %v976
    %v1353 = vpack.c.b16 %v985, %v977
    %v1354 = vpack.c.b16 %v994, %v986
    %v1355 = vpack.c.b16 %v995, %v987
    %v1356 = vpack.c.b16 %v996, %v988
    %v1357 = vpack.c.b16 %v997, %v989
    %v1358 = vpack.c.b16 %v998, %v990
    %v1359 = vpack.c.b16 %v999, %v991
    %v1360 = vpack.c.b16 %v1000, %v992
    %v1361 = vpack.c.b16 %v1001, %v993
    %v1362 = vpack.c.b16 %v1010, %v1002
    %v1363 = vpack.c.b16 %v1011, %v1003
    %v1364 = vpack.c.b16 %v1012, %v1004
    %v1365 = vpack.c.b16 %v1013, %v1005
    %v1366 = vpack.c.b16 %v1014, %v1006
    %v1367 = vpack.c.b16 %v1015, %v1007
    %v1368 = vpack.c.b16 %v1016, %v1008
    %v1369 = vpack.c.b16 %v1017, %v1009
    %v1370 = vpack.c.b16 %v1026, %v1018
    %v1371 = vpack.c.b16 %v1027, %v1019
    %v1372 = vpack.c.b16 %v1028, %v1020
    %v1373 = vpack.c.b16 %v1029, %v1021
    %v1374 = vpack.c.b16 %v1030, %v1022
    %v1375 = vpack.c.b16 %v1031, %v1023
    %v1376 = vpack.c.b16 %v1032, %v1024
    %v1377 = vpack.c.b16 %v1033, %v1025
    %v1378 = vpack.c.b16 %v1042, %v1034
    %v1379 = vpack.c.b16 %v1043, %v1035
    %v1380 = vpack.c.b16 %v1044, %v1036
    %v1381 = vpack.c.b16 %v1045, %v1037
    %v1382 = vpack.c.b16 %v1046, %v1038
    %v1383 = vpack.c.b16 %v1047, %v1039
    %v1384 = vpack.c.b16 %v1048, %v1040
    %v1385 = vpack.c.b16 %v1049, %v1041
    %v1386 = vpack.c.b16 %v1058, %v1050
    %v1387 = vpack.c.b16 %v1059, %v1051
    %v1388 = vpack.c.b16 %v1060, %v1052
    %v1389 = vpack.c.b16 %v1061, %v1053
    %v1390 = vpack.c.b16 %v1062, %v1054
    %v1391 = vpack.c.b16 %v1063, %v1055
    %v1392 = vpack.c.b16 %v1064, %v1056
    %v1393 = vpack.c.b16 %v1065, %v1057
    %v1394 = vpack.c.b16 %v1074, %v1066
    %v1395 = vpack.c.b16 %v1075, %v1067
    %v1396 = vpack.c.b16 %v1076, %v1068
    %v1397 = vpack.c.b16 %v1077, %v1069
    %v1398 = vpack.c.b16 %v1078, %v1070
    %v1399 = vpack.c.b16 %v1079, %v1071
    %v1400 = vpack.c.b16 %v1080, %v1072
    %v1401 = vpack.c.b16 %v1081, %v1073
    %v1402 = vpack.c.b16 %v1090, %v1082
    %v1403 = vpack.c.b16 %v1091, %v1083
    %v1404 = vpack.c.b16 %v1092, %v1084
    %v1405 = vpack.c.b16 %v1093, %v1085
    %v1406 = vpack.c.b16 %v1094, %v1086
    %v1407 = vpack.c.b16 %v1095, %v1087
    %v1408 = vpack.c.b16 %v1096, %v1088
    %v1409 = vpack.c.b16 %v1097, %v1089
    %v1410 = vpack.c.b16 %v1106, %v1098
    %v1411 = vpack.c.b16 %v1107, %v1099
    %v1412 = vpack.c.b16 %v1108, %v1100
    %v1413 = vpack.c.b16 %v1109, %v1101
    %v1414 = vpack.c.b16 %v1110, %v1102
    %v1415 = vpack.c.b16 %v1111, %v1103
    %v1416 = vpack.c.b16 %v1112, %v1104
    %v1417 = vpack.c.b16 %v1113, %v1105
    %v1418 = vpack.c.b16 %v1122, %v1114
    %v1419 = vpack.c.b16 %v1123, %v1115
    %v1420 = vpack.c.b16 %v1124, %v1116
    %v1421 = vpack.c.b16 %v1125, %v1117
    %v1422 = vpack.c.b16 %v1126, %v1118
    %v1423 = vpack.c.b16 %v1127, %v1119
    %v1424 = vpack.c.b16 %v1128, %v1120
    %v1425 = vpack.c.b16 %v1129, %v1121
    %v1426 = vpack.c.b16 %v1138, %v1130
    %v1427 = vpack.c.b16 %v1139, %v1131
    %v1428 = vpack.c.b16 %v1140, %v1132
    %v1429 = vpack.c.b16 %v1141, %v1133
    %v1430 = vpack.c.b16 %v1142, %v1134
    %v1431 = vpack.c.b16 %v1143, %v1135
    %v1432 = vpack.c.b16 %v1144, %v1136
    %v1433 = vpack.c.b16 %v1145, %v1137
    %v1434 = vpack.c.b16 %v1154, %v1146
    %v1435 = vpack.c.b16 %v1155, %v1147
    %v1436 = vpack.c.b16 %v1156, %v1148
    %v1437 = vpack.c.b16 %v1157, %v1149
    %v1438 = vpack.c.b16 %v1158, %v1150
    %v1439 = vpack.c.b16 %v1159, %v1151
    %v1440 = vpack.c.b16 %v1160, %v1152
    %v1441 = vpack.c.b16 %v1161, %v1153
    %v1442 = vpack.c.b16 %v1170, %v1162
    %v1443 = vpack.c.b16 %v1171, %v1163
    %v1444 = vpack.c.b16 %v1172, %v1164
    %v1445 = vpack.c.b16 %v1173, %v1165
    %v1446 = vpack.c.b16 %v1174, %v1166
    %v1447 = vpack.c.b16 %v1175, %v1167
    %v1448 = vpack.c.b16 %v1176, %v1168
    %v1449 = vpack.c.b16 %v1177, %v1169
    %v1450 = vpack.c.b16 %v1186, %v1178
    %v1451 = vpack.c.b16 %v1187, %v1179
    %v1452 = vpack.c.b16 %v1188, %v1180
    %v1453 = vpack.c.b16 %v1189, %v1181
    %v1454 = vpack.c.b16 %v1190, %v1182
    %v1455 = vpack.c.b16 %v1191, %v1183
    %v1456 = vpack.c.b16 %v1192, %v1184
    %v1457 = vpack.c.b16 %v1193, %v1185
    %v1458 = vpack.c.b16 %v1202, %v1194
    %v1459 = vpack.c.b16 %v1203, %v1195
    %v1460 = vpack.c.b16 %v1204, %v1196
    %v1461 = vpack.c.b16 %v1205, %v1197
    %v1462 = vpack.c.b16 %v1206, %v1198
    %v1463 = vpack.c.b16 %v1207, %v1199
    %v1464 = vpack.c.b16 %v1208, %v1200
    %v1465 = vpack.c.b16 %v1209, %v1201
    %1722 = vmatprep.subr.bf16.mxu0 %v1267
    %1723 = vmatpush1.bf16.msra.mxu0 %v1266
    %1724 = vmatprep.subr.bf16.mxu0 %v1259
    %1725 = vmatpush1.bf16.msra.mxu0 %v1258
    %1726 = vmatprep.subr.bf16.mxu0 %v1251
    %1727 = vmatpush1.bf16.msra.mxu0 %v1250
    %1728 = vmatprep.subr.bf16.mxu0 %v1243
    %1729 = vmatpush1.bf16.msra.mxu0 %v1242
    %1730 = vmatprep.subr.bf16.mxu0 %v1235
    %1731 = vmatpush1.bf16.msra.mxu0 %v1234
    %1732 = vmatprep.subr.bf16.mxu0 %v1227
    %1733 = vmatpush1.bf16.msra.mxu0 %v1226
    %1734 = vmatprep.subr.bf16.mxu0 %v1219
    %1735 = vmatpush1.bf16.msra.mxu0 %v1218
    %1736 = vmatprep.subr.bf16.mxu0 %v1211
    %1737 = vmatpush1.bf16.msra.mxu0 %v1210
    %1738 = vmatprep.subr.bf16.mxu0 %v1331
    %1739 = vmatpush2.bf16.msra.mxu0 %v1330
    %1740 = vmatprep.subr.bf16.mxu0 %v1323
    %1741 = vmatpush2.bf16.msra.mxu0 %v1322
    %1742 = vmatprep.subr.bf16.mxu0 %v1315
    %1743 = vmatpush2.bf16.msra.mxu0 %v1314
    %1744 = vmatprep.subr.bf16.mxu0 %v1307
    %1745 = vmatpush2.bf16.msra.mxu0 %v1306
    %1746 = vmatprep.subr.bf16.mxu0 %v1299
    %1747 = vmatpush2.bf16.msra.mxu0 %v1298
    %1748 = vmatprep.subr.bf16.mxu0 %v1291
    %1749 = vmatpush2.bf16.msra.mxu0 %v1290
    %1750 = vmatprep.subr.bf16.mxu0 %v1283
    %1751 = vmatpush2.bf16.msra.mxu0 %v1282
    %1752 = vmatprep.subr.bf16.mxu0 %v1275
    %1753 = vmatpush2.bf16.msra.mxu0 %v1274
    %1754 = vmatprep.mubr.bf16.mxu0 %v75
    %1755 = vmatmul.mubr.bf16.gmra.mxu0 %v74
    %v1756 = vpop.f32.mrf.mxu0
    %v1757 = vadd.f32 %v405, %v1756
    %v1758 = vpop.f32.mrf.mxu0
    %v1759 = vadd.f32 %v409, %v1758
    %v1760 = vpop.f32.mrf.mxu0
    %v1761 = vpop.f32.mrf.mxu0
    %1762 = vdwg.mxu0
    %1763 = vmatprep.subr.bf16.mxu0 %v1395
    %1764 = vmatpush1.bf16.msra.mxu0 %v1394
    %1765 = vmatprep.subr.bf16.mxu0 %v1387
    %1766 = vmatpush1.bf16.msra.mxu0 %v1386
    %1767 = vmatprep.subr.bf16.mxu0 %v1379
    %1768 = vmatpush1.bf16.msra.mxu0 %v1378
    %1769 = vmatprep.subr.bf16.mxu0 %v1371
    %1770 = vmatpush1.bf16.msra.mxu0 %v1370
    %1771 = vmatprep.subr.bf16.mxu0 %v1363
    %1772 = vmatpush1.bf16.msra.mxu0 %v1362
    %1773 = vmatprep.subr.bf16.mxu0 %v1355
    %1774 = vmatpush1.bf16.msra.mxu0 %v1354
    %1775 = vmatprep.subr.bf16.mxu0 %v1347
    %1776 = vmatpush1.bf16.msra.mxu0 %v1346
    %1777 = vmatprep.subr.bf16.mxu0 %v1339
    %1778 = vmatpush1.bf16.msra.mxu0 %v1338
    %1779 = vmatprep.subr.bf16.mxu0 %v1459
    %1780 = vmatpush2.bf16.msra.mxu0 %v1458
    %1781 = vmatprep.subr.bf16.mxu0 %v1451
    %1782 = vmatpush2.bf16.msra.mxu0 %v1450
    %1783 = vmatprep.subr.bf16.mxu0 %v1443
    %1784 = vmatpush2.bf16.msra.mxu0 %v1442
    %1785 = vmatprep.subr.bf16.mxu0 %v1435
    %1786 = vmatpush2.bf16.msra.mxu0 %v1434
    %1787 = vmatprep.subr.bf16.mxu0 %v1427
    %1788 = vmatpush2.bf16.msra.mxu0 %v1426
    %1789 = vmatprep.subr.bf16.mxu0 %v1419
    %1790 = vmatpush2.bf16.msra.mxu0 %v1418
    %1791 = vmatprep.subr.bf16.mxu0 %v1411
    %1792 = vmatpush2.bf16.msra.mxu0 %v1410
    %1793 = vmatprep.subr.bf16.mxu0 %v1403
    %1794 = vmatpush2.bf16.msra.mxu0 %v1402
    %1795 = vmatprep.mubr.bf16.mxu0 %v77
    %1796 = vmatmul.mubr.bf16.gmra.mxu0 %v76
    %v1797 = vpop.f32.mrf.mxu0
    %v1798 = vadd.f32 %v1757, %v1797
    %v1799 = vpop.f32.mrf.mxu0
    %v1800 = vadd.f32 %v1759, %v1799
    %v1801 = vpop.f32.mrf.mxu0
    %v1802 = vpop.f32.mrf.mxu0
    %1803 = vdwg.mxu0
    %1804 = vmatprep.subr.bf16.mxu0 %v1269
    %1805 = vmatpush1.bf16.msra.mxu0 %v1268
    %1806 = vmatprep.subr.bf16.mxu0 %v1261
    %1807 = vmatpush1.bf16.msra.mxu0 %v1260
    %1808 = vmatprep.subr.bf16.mxu0 %v1253
    %1809 = vmatpush1.bf16.msra.mxu0 %v1252
    %1810 = vmatprep.subr.bf16.mxu0 %v1245
    %1811 = vmatpush1.bf16.msra.mxu0 %v1244
    %1812 = vmatprep.subr.bf16.mxu0 %v1237
    %1813 = vmatpush1.bf16.msra.mxu0 %v1236
    %1814 = vmatprep.subr.bf16.mxu0 %v1229
    %1815 = vmatpush1.bf16.msra.mxu0 %v1228
    %1816 = vmatprep.subr.bf16.mxu0 %v1221
    %1817 = vmatpush1.bf16.msra.mxu0 %v1220
    %1818 = vmatprep.subr.bf16.mxu0 %v1213
    %1819 = vmatpush1.bf16.msra.mxu0 %v1212
    %1820 = vmatprep.subr.bf16.mxu0 %v1333
    %1821 = vmatpush2.bf16.msra.mxu0 %v1332
    %1822 = vmatprep.subr.bf16.mxu0 %v1325
    %1823 = vmatpush2.bf16.msra.mxu0 %v1324
    %1824 = vmatprep.subr.bf16.mxu0 %v1317
    %1825 = vmatpush2.bf16.msra.mxu0 %v1316
    %1826 = vmatprep.subr.bf16.mxu0 %v1309
    %1827 = vmatpush2.bf16.msra.mxu0 %v1308
    %1828 = vmatprep.subr.bf16.mxu0 %v1301
    %1829 = vmatpush2.bf16.msra.mxu0 %v1300
    %1830 = vmatprep.subr.bf16.mxu0 %v1293
    %1831 = vmatpush2.bf16.msra.mxu0 %v1292
    %1832 = vmatprep.subr.bf16.mxu0 %v1285
    %1833 = vmatpush2.bf16.msra.mxu0 %v1284
    %1834 = vmatprep.subr.bf16.mxu0 %v1277
    %1835 = vmatpush2.bf16.msra.mxu0 %v1276
    %1836 = vmatprep.mubr.bf16.mxu0 %v75
    %1837 = vmatmul.mubr.bf16.gmra.mxu0 %v74
    %v1838 = vpop.f32.mrf.mxu0
    %v1839 = vadd.f32 %v413, %v1838
    %v1840 = vpop.f32.mrf.mxu0
    %v1841 = vadd.f32 %v417, %v1840
    %v1842 = vpop.f32.mrf.mxu0
    %v1843 = vpop.f32.mrf.mxu0
    %1844 = vdwg.mxu0
    %1845 = vmatprep.subr.bf16.mxu0 %v1397
    %1846 = vmatpush1.bf16.msra.mxu0 %v1396
    %1847 = vmatprep.subr.bf16.mxu0 %v1389
    %1848 = vmatpush1.bf16.msra.mxu0 %v1388
    %1849 = vmatprep.subr.bf16.mxu0 %v1381
    %1850 = vmatpush1.bf16.msra.mxu0 %v1380
    %1851 = vmatprep.subr.bf16.mxu0 %v1373
    %1852 = vmatpush1.bf16.msra.mxu0 %v1372
    %1853 = vmatprep.subr.bf16.mxu0 %v1365
    %1854 = vmatpush1.bf16.msra.mxu0 %v1364
    %1855 = vmatprep.subr.bf16.mxu0 %v1357
    %1856 = vmatpush1.bf16.msra.mxu0 %v1356
    %1857 = vmatprep.subr.bf16.mxu0 %v1349
    %1858 = vmatpush1.bf16.msra.mxu0 %v1348
    %1859 = vmatprep.subr.bf16.mxu0 %v1341
    %1860 = vmatpush1.bf16.msra.mxu0 %v1340
    %1861 = vmatprep.subr.bf16.mxu0 %v1461
    %1862 = vmatpush2.bf16.msra.mxu0 %v1460
    %1863 = vmatprep.subr.bf16.mxu0 %v1453
    %1864 = vmatpush2.bf16.msra.mxu0 %v1452
    %1865 = vmatprep.subr.bf16.mxu0 %v1445
    %1866 = vmatpush2.bf16.msra.mxu0 %v1444
    %1867 = vmatprep.subr.bf16.mxu0 %v1437
    %1868 = vmatpush2.bf16.msra.mxu0 %v1436
    %1869 = vmatprep.subr.bf16.mxu0 %v1429
    %1870 = vmatpush2.bf16.msra.mxu0 %v1428
    %1871 = vmatprep.subr.bf16.mxu0 %v1421
    %1872 = vmatpush2.bf16.msra.mxu0 %v1420
    %1873 = vmatprep.subr.bf16.mxu0 %v1413
    %1874 = vmatpush2.bf16.msra.mxu0 %v1412
    %1875 = vmatprep.subr.bf16.mxu0 %v1405
    %1876 = vmatpush2.bf16.msra.mxu0 %v1404
    %1877 = vmatprep.mubr.bf16.mxu0 %v77
    %1878 = vmatmul.mubr.bf16.gmra.mxu0 %v76
    %v1879 = vpop.f32.mrf.mxu0
    %v1880 = vadd.f32 %v1839, %v1879
    %v1881 = vpop.f32.mrf.mxu0
    %v1882 = vadd.f32 %v1841, %v1881
    %v1883 = vpop.f32.mrf.mxu0
    %v1884 = vpop.f32.mrf.mxu0
    %1885 = vdwg.mxu0
    %1886 = vmatprep.subr.bf16.mxu0 %v1271
    %1887 = vmatpush1.bf16.msra.mxu0 %v1270
    %1888 = vmatprep.subr.bf16.mxu0 %v1263
    %1889 = vmatpush1.bf16.msra.mxu0 %v1262
    %1890 = vmatprep.subr.bf16.mxu0 %v1255
    %1891 = vmatpush1.bf16.msra.mxu0 %v1254
    %1892 = vmatprep.subr.bf16.mxu0 %v1247
    %1893 = vmatpush1.bf16.msra.mxu0 %v1246
    %1894 = vmatprep.subr.bf16.mxu0 %v1239
    %1895 = vmatpush1.bf16.msra.mxu0 %v1238
    %1896 = vmatprep.subr.bf16.mxu0 %v1231
    %1897 = vmatpush1.bf16.msra.mxu0 %v1230
    %1898 = vmatprep.subr.bf16.mxu0 %v1223
    %1899 = vmatpush1.bf16.msra.mxu0 %v1222
    %1900 = vmatprep.subr.bf16.mxu0 %v1215
    %1901 = vmatpush1.bf16.msra.mxu0 %v1214
    %1902 = vmatprep.subr.bf16.mxu0 %v1335
    %1903 = vmatpush2.bf16.msra.mxu0 %v1334
    %1904 = vmatprep.subr.bf16.mxu0 %v1327
    %1905 = vmatpush2.bf16.msra.mxu0 %v1326
    %1906 = vmatprep.subr.bf16.mxu0 %v1319
    %1907 = vmatpush2.bf16.msra.mxu0 %v1318
    %1908 = vmatprep.subr.bf16.mxu0 %v1311
    %1909 = vmatpush2.bf16.msra.mxu0 %v1310
    %1910 = vmatprep.subr.bf16.mxu0 %v1303
    %1911 = vmatpush2.bf16.msra.mxu0 %v1302
    %1912 = vmatprep.subr.bf16.mxu0 %v1295
    %1913 = vmatpush2.bf16.msra.mxu0 %v1294
    %1914 = vmatprep.subr.bf16.mxu0 %v1287
    %1915 = vmatpush2.bf16.msra.mxu0 %v1286
    %1916 = vmatprep.subr.bf16.mxu0 %v1279
    %1917 = vmatpush2.bf16.msra.mxu0 %v1278
    %1918 = vmatprep.mubr.bf16.mxu0 %v75
    %1919 = vmatmul.mubr.bf16.gmra.mxu0 %v74
    %v1920 = vpop.f32.mrf.mxu0
    %v1921 = vadd.f32 %v421, %v1920
    %v1922 = vpop.f32.mrf.mxu0
    %v1923 = vadd.f32 %v425, %v1922
    %v1924 = vpop.f32.mrf.mxu0
    %v1925 = vpop.f32.mrf.mxu0
    %1926 = vdwg.mxu0
    %1927 = vmatprep.subr.bf16.mxu0 %v1399
    %1928 = vmatpush1.bf16.msra.mxu0 %v1398
    %1929 = vmatprep.subr.bf16.mxu0 %v1391
    %1930 = vmatpush1.bf16.msra.mxu0 %v1390
    %1931 = vmatprep.subr.bf16.mxu0 %v1383
    %1932 = vmatpush1.bf16.msra.mxu0 %v1382
    %1933 = vmatprep.subr.bf16.mxu0 %v1375
    %1934 = vmatpush1.bf16.msra.mxu0 %v1374
    %1935 = vmatprep.subr.bf16.mxu0 %v1367
    %1936 = vmatpush1.bf16.msra.mxu0 %v1366
    %1937 = vmatprep.subr.bf16.mxu0 %v1359
    %1938 = vmatpush1.bf16.msra.mxu0 %v1358
    %1939 = vmatprep.subr.bf16.mxu0 %v1351
    %1940 = vmatpush1.bf16.msra.mxu0 %v1350
    %1941 = vmatprep.subr.bf16.mxu0 %v1343
    %1942 = vmatpush1.bf16.msra.mxu0 %v1342
    %1943 = vmatprep.subr.bf16.mxu0 %v1463
    %1944 = vmatpush2.bf16.msra.mxu0 %v1462
    %1945 = vmatprep.subr.bf16.mxu0 %v1455
    %1946 = vmatpush2.bf16.msra.mxu0 %v1454
    %1947 = vmatprep.subr.bf16.mxu0 %v1447
    %1948 = vmatpush2.bf16.msra.mxu0 %v1446
    %1949 = vmatprep.subr.bf16.mxu0 %v1439
    %1950 = vmatpush2.bf16.msra.mxu0 %v1438
    %1951 = vmatprep.subr.bf16.mxu0 %v1431
    %1952 = vmatpush2.bf16.msra.mxu0 %v1430
    %1953 = vmatprep.subr.bf16.mxu0 %v1423
    %1954 = vmatpush2.bf16.msra.mxu0 %v1422
    %1955 = vmatprep.subr.bf16.mxu0 %v1415
    %1956 = vmatpush2.bf16.msra.mxu0 %v1414
    %1957 = vmatprep.subr.bf16.mxu0 %v1407
    %1958 = vmatpush2.bf16.msra.mxu0 %v1406
    %1959 = vmatprep.mubr.bf16.mxu0 %v77
    %1960 = vmatmul.mubr.bf16.gmra.mxu0 %v76
    %v1961 = vpop.f32.mrf.mxu0
    %v1962 = vadd.f32 %v1921, %v1961
    %v1963 = vpop.f32.mrf.mxu0
    %v1964 = vadd.f32 %v1923, %v1963
    %v1965 = vpop.f32.mrf.mxu0
    %v1966 = vpop.f32.mrf.mxu0
    %1967 = vdwg.mxu0
    %1968 = vmatprep.subr.bf16.mxu0 %v1273
    %1969 = vmatpush1.bf16.msra.mxu0 %v1272
    %1970 = vmatprep.subr.bf16.mxu0 %v1265
    %1971 = vmatpush1.bf16.msra.mxu0 %v1264
    %1972 = vmatprep.subr.bf16.mxu0 %v1257
    %1973 = vmatpush1.bf16.msra.mxu0 %v1256
    %1974 = vmatprep.subr.bf16.mxu0 %v1249
    %1975 = vmatpush1.bf16.msra.mxu0 %v1248
    %1976 = vmatprep.subr.bf16.mxu0 %v1241
    %1977 = vmatpush1.bf16.msra.mxu0 %v1240
    %1978 = vmatprep.subr.bf16.mxu0 %v1233
    %1979 = vmatpush1.bf16.msra.mxu0 %v1232
    %1980 = vmatprep.subr.bf16.mxu0 %v1225
    %1981 = vmatpush1.bf16.msra.mxu0 %v1224
    %1982 = vmatprep.subr.bf16.mxu0 %v1217
    %1983 = vmatpush1.bf16.msra.mxu0 %v1216
    %1984 = vmatprep.subr.bf16.mxu0 %v1337
    %1985 = vmatpush2.bf16.msra.mxu0 %v1336
    %1986 = vmatprep.subr.bf16.mxu0 %v1329
    %1987 = vmatpush2.bf16.msra.mxu0 %v1328
    %1988 = vmatprep.subr.bf16.mxu0 %v1321
    %1989 = vmatpush2.bf16.msra.mxu0 %v1320
    %1990 = vmatprep.subr.bf16.mxu0 %v1313
    %1991 = vmatpush2.bf16.msra.mxu0 %v1312
    %1992 = vmatprep.subr.bf16.mxu0 %v1305
    %1993 = vmatpush2.bf16.msra.mxu0 %v1304
    %1994 = vmatprep.subr.bf16.mxu0 %v1297
    %1995 = vmatpush2.bf16.msra.mxu0 %v1296
    %1996 = vmatprep.subr.bf16.mxu0 %v1289
    %1997 = vmatpush2.bf16.msra.mxu0 %v1288
    %1998 = vmatprep.subr.bf16.mxu0 %v1281
    %1999 = vmatpush2.bf16.msra.mxu0 %v1280
    %2000 = vmatprep.mubr.bf16.mxu0 %v75
    %2001 = vmatmul.mubr.bf16.gmra.mxu0 %v74
    %v2002 = vpop.f32.mrf.mxu0
    %v2003 = vadd.f32 %v429, %v2002
    %v2004 = vpop.f32.mrf.mxu0
    %v2005 = vadd.f32 %v433, %v2004
    %v2006 = vpop.f32.mrf.mxu0
    %v2007 = vpop.f32.mrf.mxu0
    %2008 = vdwg.mxu0
    %2009 = vmatprep.subr.bf16.mxu0 %v1401
    %2010 = vmatpush1.bf16.msra.mxu0 %v1400
    %2011 = vmatprep.subr.bf16.mxu0 %v1393
    %2012 = vmatpush1.bf16.msra.mxu0 %v1392
    %2013 = vmatprep.subr.bf16.mxu0 %v1385
    %2014 = vmatpush1.bf16.msra.mxu0 %v1384
    %2015 = vmatprep.subr.bf16.mxu0 %v1377
    %2016 = vmatpush1.bf16.msra.mxu0 %v1376
    %2017 = vmatprep.subr.bf16.mxu0 %v1369
    %2018 = vmatpush1.bf16.msra.mxu0 %v1368
    %2019 = vmatprep.subr.bf16.mxu0 %v1361
    %2020 = vmatpush1.bf16.msra.mxu0 %v1360
    %2021 = vmatprep.subr.bf16.mxu0 %v1353
    %2022 = vmatpush1.bf16.msra.mxu0 %v1352
    %2023 = vmatprep.subr.bf16.mxu0 %v1345
    %2024 = vmatpush1.bf16.msra.mxu0 %v1344
    %2025 = vmatprep.subr.bf16.mxu0 %v1465
    %2026 = vmatpush2.bf16.msra.mxu0 %v1464
    %2027 = vmatprep.subr.bf16.mxu0 %v1457
    %2028 = vmatpush2.bf16.msra.mxu0 %v1456
    %2029 = vmatprep.subr.bf16.mxu0 %v1449
    %2030 = vmatpush2.bf16.msra.mxu0 %v1448
    %2031 = vmatprep.subr.bf16.mxu0 %v1441
    %2032 = vmatpush2.bf16.msra.mxu0 %v1440
    %2033 = vmatprep.subr.bf16.mxu0 %v1433
    %2034 = vmatpush2.bf16.msra.mxu0 %v1432
    %2035 = vmatprep.subr.bf16.mxu0 %v1425
    %2036 = vmatpush2.bf16.msra.mxu0 %v1424
    %2037 = vmatprep.subr.bf16.mxu0 %v1417
    %2038 = vmatpush2.bf16.msra.mxu0 %v1416
    %2039 = vmatprep.subr.bf16.mxu0 %v1409
    %2040 = vmatpush2.bf16.msra.mxu0 %v1408
    %2041 = vmatprep.mubr.bf16.mxu0 %v77
    %2042 = vmatmul.mubr.bf16.gmra.mxu0 %v76
    %v2043 = vpop.f32.mrf.mxu0
    %v2044 = vadd.f32 %v2003, %v2043
    %v2045 = vpop.f32.mrf.mxu0
    %v2046 = vadd.f32 %v2005, %v2045
    %v2047 = vpop.f32.mrf.mxu0
    %v2048 = vpop.f32.mrf.mxu0
    %2049 = vdwg.mxu0
    %v2050 = vmax.f32 %v1798, 0.0
    %v2051 = vmax.f32 %v1800, 0.0
    %v2052 = vmax.f32 %v1880, 0.0
    %v2053 = vmax.f32 %v1882, 0.0
    %v2054 = vmax.f32 %v1962, 0.0
    %v2055 = vmax.f32 %v1964, 0.0
    %v2056 = vmax.f32 %v2044, 0.0
    %v2057 = vmax.f32 %v2046, 0.0
    %v2058 = vpack.c.bf16 %v2050, %v2050
    %v2059 = vpack.c.bf16 %v2051, %v2051
    %v2060 = vpack.c.bf16 %v2052, %v2052
    %v2061 = vpack.c.bf16 %v2053, %v2053
    %v2062 = vpack.c.bf16 %v2054, %v2054
    %v2063 = vpack.c.bf16 %v2055, %v2055
    %v2064 = vpack.c.bf16 %v2056, %v2056
    %v2065 = vpack.c.bf16 %v2057, %v2057
    %v2066 = vld [vmem:[#allocation7] sm:$0xff]
    %v2067 = vld [vmem:[#allocation7 + $0x8] sm:$0xff]
    %v2068 = vld [vmem:[#allocation7 + $0x10] sm:$0xff]
    %v2069 = vld [vmem:[#allocation7 + $0x18] sm:$0xff]
    %v2070 = vld [vmem:[#allocation7 + $0x20] sm:$0xff]
    %v2071 = vld [vmem:[#allocation7 + $0x28] sm:$0xff]
    %v2072 = vld [vmem:[#allocation7 + $0x30] sm:$0xff]
    %v2073 = vld [vmem:[#allocation7 + $0x38] sm:$0xff]
    %v2074 = vld [vmem:[#allocation7 + $0x40] sm:$0xff]
    %v2075 = vld [vmem:[#allocation7 + $0x48] sm:$0xff]
    %v2076 = vld [vmem:[#allocation7 + $0x50] sm:$0xff]
    %v2077 = vld [vmem:[#allocation7 + $0x58] sm:$0xff]
    %v2078 = vld [vmem:[#allocation7 + $0x60] sm:$0xff]
    %v2079 = vld [vmem:[#allocation7 + $0x68] sm:$0xff]
    %v2080 = vld [vmem:[#allocation7 + $0x70] sm:$0xff]
    %v2081 = vld [vmem:[#allocation7 + $0x78] sm:$0xff]
    %v2082 = vld [vmem:[#allocation7 + $0x80] sm:$0xff]
    %v2083 = vld [vmem:[#allocation7 + $0x88] sm:$0xff]
    %v2084 = vld [vmem:[#allocation7 + $0x90] sm:$0xff]
    %v2085 = vld [vmem:[#allocation7 + $0x98] sm:$0xff]
    %v2086 = vld [vmem:[#allocation7 + $0xa0] sm:$0xff]
    %v2087 = vld [vmem:[#allocation7 + $0xa8] sm:$0xff]
    %v2088 = vld [vmem:[#allocation7 + $0xb0] sm:$0xff]
    %v2089 = vld [vmem:[#allocation7 + $0xb8] sm:$0xff]
    %v2090 = vld [vmem:[#allocation7 + $0xc0] sm:$0xff]
    %v2091 = vld [vmem:[#allocation7 + $0xc8] sm:$0xff]
    %v2092 = vld [vmem:[#allocation7 + $0xd0] sm:$0xff]
    %v2093 = vld [vmem:[#allocation7 + $0xd8] sm:$0xff]
    %v2094 = vld [vmem:[#allocation7 + $0xe0] sm:$0xff]
    %v2095 = vld [vmem:[#allocation7 + $0xe8] sm:$0xff]
    %v2096 = vld [vmem:[#allocation7 + $0xf0] sm:$0xff]
    %v2097 = vld [vmem:[#allocation7 + $0xf8] sm:$0xff]
    %v2098 = vld [vmem:[#allocation7 + $0x100] sm:$0xff]
    %v2099 = vld [vmem:[#allocation7 + $0x108] sm:$0xff]
    %v2100 = vld [vmem:[#allocation7 + $0x110] sm:$0xff]
    %v2101 = vld [vmem:[#allocation7 + $0x118] sm:$0xff]
    %v2102 = vld [vmem:[#allocation7 + $0x120] sm:$0xff]
    %v2103 = vld [vmem:[#allocation7 + $0x128] sm:$0xff]
    %v2104 = vld [vmem:[#allocation7 + $0x130] sm:$0xff]
    %v2105 = vld [vmem:[#allocation7 + $0x138] sm:$0xff]
    %v2106 = vld [vmem:[#allocation7 + $0x140] sm:$0xff]
    %v2107 = vld [vmem:[#allocation7 + $0x148] sm:$0xff]
    %v2108 = vld [vmem:[#allocation7 + $0x150] sm:$0xff]
    %v2109 = vld [vmem:[#allocation7 + $0x158] sm:$0xff]
    %v2110 = vld [vmem:[#allocation7 + $0x160] sm:$0xff]
    %v2111 = vld [vmem:[#allocation7 + $0x168] sm:$0xff]
    %v2112 = vld [vmem:[#allocation7 + $0x170] sm:$0xff]
    %v2113 = vld [vmem:[#allocation7 + $0x178] sm:$0xff]
    %v2114 = vld [vmem:[#allocation7 + $0x180] sm:$0xff]
    %v2115 = vld [vmem:[#allocation7 + $0x188] sm:$0xff]
    %v2116 = vld [vmem:[#allocation7 + $0x190] sm:$0xff]
    %v2117 = vld [vmem:[#allocation7 + $0x198] sm:$0xff]
    %v2118 = vld [vmem:[#allocation7 + $0x1a0] sm:$0xff]
    %v2119 = vld [vmem:[#allocation7 + $0x1a8] sm:$0xff]
    %v2120 = vld [vmem:[#allocation7 + $0x1b0] sm:$0xff]
    %v2121 = vld [vmem:[#allocation7 + $0x1b8] sm:$0xff]
    %v2122 = vld [vmem:[#allocation7 + $0x1c0] sm:$0xff]
    %v2123 = vld [vmem:[#allocation7 + $0x1c8] sm:$0xff]
    %v2124 = vld [vmem:[#allocation7 + $0x1d0] sm:$0xff]
    %v2125 = vld [vmem:[#allocation7 + $0x1d8] sm:$0xff]
    %v2126 = vld [vmem:[#allocation7 + $0x1e0] sm:$0xff]
    %v2127 = vld [vmem:[#allocation7 + $0x1e8] sm:$0xff]
    %v2128 = vld [vmem:[#allocation7 + $0x1f0] sm:$0xff]
    %v2129 = vld [vmem:[#allocation7 + $0x1f8] sm:$0xff]
    %v2130 = vld [vmem:[#allocation7 + $0x200] sm:$0xff]
    %v2131 = vld [vmem:[#allocation7 + $0x208] sm:$0xff]
    %v2132 = vld [vmem:[#allocation7 + $0x210] sm:$0xff]
    %v2133 = vld [vmem:[#allocation7 + $0x218] sm:$0xff]
    %v2134 = vld [vmem:[#allocation7 + $0x220] sm:$0xff]
    %v2135 = vld [vmem:[#allocation7 + $0x228] sm:$0xff]
    %v2136 = vld [vmem:[#allocation7 + $0x230] sm:$0xff]
    %v2137 = vld [vmem:[#allocation7 + $0x238] sm:$0xff]
    %v2138 = vld [vmem:[#allocation7 + $0x240] sm:$0xff]
    %v2139 = vld [vmem:[#allocation7 + $0x248] sm:$0xff]
    %v2140 = vld [vmem:[#allocation7 + $0x250] sm:$0xff]
    %v2141 = vld [vmem:[#allocation7 + $0x258] sm:$0xff]
    %v2142 = vld [vmem:[#allocation7 + $0x260] sm:$0xff]
    %v2143 = vld [vmem:[#allocation7 + $0x268] sm:$0xff]
    %v2144 = vld [vmem:[#allocation7 + $0x270] sm:$0xff]
    %v2145 = vld [vmem:[#allocation7 + $0x278] sm:$0xff]
    %v2146 = vld [vmem:[#allocation7 + $0x280] sm:$0xff]
    %v2147 = vld [vmem:[#allocation7 + $0x288] sm:$0xff]
    %v2148 = vld [vmem:[#allocation7 + $0x290] sm:$0xff]
    %v2149 = vld [vmem:[#allocation7 + $0x298] sm:$0xff]
    %v2150 = vld [vmem:[#allocation7 + $0x2a0] sm:$0xff]
    %v2151 = vld [vmem:[#allocation7 + $0x2a8] sm:$0xff]
    %v2152 = vld [vmem:[#allocation7 + $0x2b0] sm:$0xff]
    %v2153 = vld [vmem:[#allocation7 + $0x2b8] sm:$0xff]
    %v2154 = vld [vmem:[#allocation7 + $0x2c0] sm:$0xff]
    %v2155 = vld [vmem:[#allocation7 + $0x2c8] sm:$0xff]
    %v2156 = vld [vmem:[#allocation7 + $0x2d0] sm:$0xff]
    %v2157 = vld [vmem:[#allocation7 + $0x2d8] sm:$0xff]
    %v2158 = vld [vmem:[#allocation7 + $0x2e0] sm:$0xff]
    %v2159 = vld [vmem:[#allocation7 + $0x2e8] sm:$0xff]
    %v2160 = vld [vmem:[#allocation7 + $0x2f0] sm:$0xff]
    %v2161 = vld [vmem:[#allocation7 + $0x2f8] sm:$0xff]
    %v2162 = vld [vmem:[#allocation7 + $0x300] sm:$0xff]
    %v2163 = vld [vmem:[#allocation7 + $0x308] sm:$0xff]
    %v2164 = vld [vmem:[#allocation7 + $0x310] sm:$0xff]
    %v2165 = vld [vmem:[#allocation7 + $0x318] sm:$0xff]
    %v2166 = vld [vmem:[#allocation7 + $0x320] sm:$0xff]
    %v2167 = vld [vmem:[#allocation7 + $0x328] sm:$0xff]
    %v2168 = vld [vmem:[#allocation7 + $0x330] sm:$0xff]
    %v2169 = vld [vmem:[#allocation7 + $0x338] sm:$0xff]
    %v2170 = vld [vmem:[#allocation7 + $0x340] sm:$0xff]
    %v2171 = vld [vmem:[#allocation7 + $0x348] sm:$0xff]
    %v2172 = vld [vmem:[#allocation7 + $0x350] sm:$0xff]
    %v2173 = vld [vmem:[#allocation7 + $0x358] sm:$0xff]
    %v2174 = vld [vmem:[#allocation7 + $0x360] sm:$0xff]
    %v2175 = vld [vmem:[#allocation7 + $0x368] sm:$0xff]
    %v2176 = vld [vmem:[#allocation7 + $0x370] sm:$0xff]
    %v2177 = vld [vmem:[#allocation7 + $0x378] sm:$0xff]
    %v2178 = vld [vmem:[#allocation7 + $0x380] sm:$0xff]
    %v2179 = vld [vmem:[#allocation7 + $0x388] sm:$0xff]
    %v2180 = vld [vmem:[#allocation7 + $0x390] sm:$0xff]
    %v2181 = vld [vmem:[#allocation7 + $0x398] sm:$0xff]
    %v2182 = vld [vmem:[#allocation7 + $0x3a0] sm:$0xff]
    %v2183 = vld [vmem:[#allocation7 + $0x3a8] sm:$0xff]
    %v2184 = vld [vmem:[#allocation7 + $0x3b0] sm:$0xff]
    %v2185 = vld [vmem:[#allocation7 + $0x3b8] sm:$0xff]
    %v2186 = vld [vmem:[#allocation7 + $0x3c0] sm:$0xff]
    %v2187 = vld [vmem:[#allocation7 + $0x3c8] sm:$0xff]
    %v2188 = vld [vmem:[#allocation7 + $0x3d0] sm:$0xff]
    %v2189 = vld [vmem:[#allocation7 + $0x3d8] sm:$0xff]
    %v2190 = vld [vmem:[#allocation7 + $0x3e0] sm:$0xff]
    %v2191 = vld [vmem:[#allocation7 + $0x3e8] sm:$0xff]
    %v2192 = vld [vmem:[#allocation7 + $0x3f0] sm:$0xff]
    %v2193 = vld [vmem:[#allocation7 + $0x3f8] sm:$0xff]
    %v2194 = vld [vmem:[#allocation7 + $0x400] sm:$0xff]
    %v2195 = vld [vmem:[#allocation7 + $0x408] sm:$0xff]
    %v2196 = vld [vmem:[#allocation7 + $0x410] sm:$0xff]
    %v2197 = vld [vmem:[#allocation7 + $0x418] sm:$0xff]
    %v2198 = vld [vmem:[#allocation7 + $0x420] sm:$0xff]
    %v2199 = vld [vmem:[#allocation7 + $0x428] sm:$0xff]
    %v2200 = vld [vmem:[#allocation7 + $0x430] sm:$0xff]
    %v2201 = vld [vmem:[#allocation7 + $0x438] sm:$0xff]
    %v2202 = vld [vmem:[#allocation7 + $0x440] sm:$0xff]
    %v2203 = vld [vmem:[#allocation7 + $0x448] sm:$0xff]
    %v2204 = vld [vmem:[#allocation7 + $0x450] sm:$0xff]
    %v2205 = vld [vmem:[#allocation7 + $0x458] sm:$0xff]
    %v2206 = vld [vmem:[#allocation7 + $0x460] sm:$0xff]
    %v2207 = vld [vmem:[#allocation7 + $0x468] sm:$0xff]
    %v2208 = vld [vmem:[#allocation7 + $0x470] sm:$0xff]
    %v2209 = vld [vmem:[#allocation7 + $0x478] sm:$0xff]
    %v2210 = vld [vmem:[#allocation7 + $0x480] sm:$0xff]
    %v2211 = vld [vmem:[#allocation7 + $0x488] sm:$0xff]
    %v2212 = vld [vmem:[#allocation7 + $0x490] sm:$0xff]
    %v2213 = vld [vmem:[#allocation7 + $0x498] sm:$0xff]
    %v2214 = vld [vmem:[#allocation7 + $0x4a0] sm:$0xff]
    %v2215 = vld [vmem:[#allocation7 + $0x4a8] sm:$0xff]
    %v2216 = vld [vmem:[#allocation7 + $0x4b0] sm:$0xff]
    %v2217 = vld [vmem:[#allocation7 + $0x4b8] sm:$0xff]
    %v2218 = vld [vmem:[#allocation7 + $0x4c0] sm:$0xff]
    %v2219 = vld [vmem:[#allocation7 + $0x4c8] sm:$0xff]
    %v2220 = vld [vmem:[#allocation7 + $0x4d0] sm:$0xff]
    %v2221 = vld [vmem:[#allocation7 + $0x4d8] sm:$0xff]
    %v2222 = vld [vmem:[#allocation7 + $0x4e0] sm:$0xff]
    %v2223 = vld [vmem:[#allocation7 + $0x4e8] sm:$0xff]
    %v2224 = vld [vmem:[#allocation7 + $0x4f0] sm:$0xff]
    %v2225 = vld [vmem:[#allocation7 + $0x4f8] sm:$0xff]
    %v2226 = vld [vmem:[#allocation7 + $0x500] sm:$0xff]
    %v2227 = vld [vmem:[#allocation7 + $0x508] sm:$0xff]
    %v2228 = vld [vmem:[#allocation7 + $0x510] sm:$0xff]
    %v2229 = vld [vmem:[#allocation7 + $0x518] sm:$0xff]
    %v2230 = vld [vmem:[#allocation7 + $0x520] sm:$0xff]
    %v2231 = vld [vmem:[#allocation7 + $0x528] sm:$0xff]
    %v2232 = vld [vmem:[#allocation7 + $0x530] sm:$0xff]
    %v2233 = vld [vmem:[#allocation7 + $0x538] sm:$0xff]
    %v2234 = vld [vmem:[#allocation7 + $0x540] sm:$0xff]
    %v2235 = vld [vmem:[#allocation7 + $0x548] sm:$0xff]
    %v2236 = vld [vmem:[#allocation7 + $0x550] sm:$0xff]
    %v2237 = vld [vmem:[#allocation7 + $0x558] sm:$0xff]
    %v2238 = vld [vmem:[#allocation7 + $0x560] sm:$0xff]
    %v2239 = vld [vmem:[#allocation7 + $0x568] sm:$0xff]
    %v2240 = vld [vmem:[#allocation7 + $0x570] sm:$0xff]
    %v2241 = vld [vmem:[#allocation7 + $0x578] sm:$0xff]
    %v2242 = vld [vmem:[#allocation7 + $0x580] sm:$0xff]
    %v2243 = vld [vmem:[#allocation7 + $0x588] sm:$0xff]
    %v2244 = vld [vmem:[#allocation7 + $0x590] sm:$0xff]
    %v2245 = vld [vmem:[#allocation7 + $0x598] sm:$0xff]
    %v2246 = vld [vmem:[#allocation7 + $0x5a0] sm:$0xff]
    %v2247 = vld [vmem:[#allocation7 + $0x5a8] sm:$0xff]
    %v2248 = vld [vmem:[#allocation7 + $0x5b0] sm:$0xff]
    %v2249 = vld [vmem:[#allocation7 + $0x5b8] sm:$0xff]
    %v2250 = vld [vmem:[#allocation7 + $0x5c0] sm:$0xff]
    %v2251 = vld [vmem:[#allocation7 + $0x5c8] sm:$0xff]
    %v2252 = vld [vmem:[#allocation7 + $0x5d0] sm:$0xff]
    %v2253 = vld [vmem:[#allocation7 + $0x5d8] sm:$0xff]
    %v2254 = vld [vmem:[#allocation7 + $0x5e0] sm:$0xff]
    %v2255 = vld [vmem:[#allocation7 + $0x5e8] sm:$0xff]
    %v2256 = vld [vmem:[#allocation7 + $0x5f0] sm:$0xff]
    %v2257 = vld [vmem:[#allocation7 + $0x5f8] sm:$0xff]
    %v2258 = vld [vmem:[#allocation7 + $0x600] sm:$0xff]
    %v2259 = vld [vmem:[#allocation7 + $0x608] sm:$0xff]
    %v2260 = vld [vmem:[#allocation7 + $0x610] sm:$0xff]
    %v2261 = vld [vmem:[#allocation7 + $0x618] sm:$0xff]
    %v2262 = vld [vmem:[#allocation7 + $0x620] sm:$0xff]
    %v2263 = vld [vmem:[#allocation7 + $0x628] sm:$0xff]
    %v2264 = vld [vmem:[#allocation7 + $0x630] sm:$0xff]
    %v2265 = vld [vmem:[#allocation7 + $0x638] sm:$0xff]
    %v2266 = vld [vmem:[#allocation7 + $0x640] sm:$0xff]
    %v2267 = vld [vmem:[#allocation7 + $0x648] sm:$0xff]
    %v2268 = vld [vmem:[#allocation7 + $0x650] sm:$0xff]
    %v2269 = vld [vmem:[#allocation7 + $0x658] sm:$0xff]
    %v2270 = vld [vmem:[#allocation7 + $0x660] sm:$0xff]
    %v2271 = vld [vmem:[#allocation7 + $0x668] sm:$0xff]
    %v2272 = vld [vmem:[#allocation7 + $0x670] sm:$0xff]
    %v2273 = vld [vmem:[#allocation7 + $0x678] sm:$0xff]
    %v2274 = vld [vmem:[#allocation7 + $0x680] sm:$0xff]
    %v2275 = vld [vmem:[#allocation7 + $0x688] sm:$0xff]
    %v2276 = vld [vmem:[#allocation7 + $0x690] sm:$0xff]
    %v2277 = vld [vmem:[#allocation7 + $0x698] sm:$0xff]
    %v2278 = vld [vmem:[#allocation7 + $0x6a0] sm:$0xff]
    %v2279 = vld [vmem:[#allocation7 + $0x6a8] sm:$0xff]
    %v2280 = vld [vmem:[#allocation7 + $0x6b0] sm:$0xff]
    %v2281 = vld [vmem:[#allocation7 + $0x6b8] sm:$0xff]
    %v2282 = vld [vmem:[#allocation7 + $0x6c0] sm:$0xff]
    %v2283 = vld [vmem:[#allocation7 + $0x6c8] sm:$0xff]
    %v2284 = vld [vmem:[#allocation7 + $0x6d0] sm:$0xff]
    %v2285 = vld [vmem:[#allocation7 + $0x6d8] sm:$0xff]
    %v2286 = vld [vmem:[#allocation7 + $0x6e0] sm:$0xff]
    %v2287 = vld [vmem:[#allocation7 + $0x6e8] sm:$0xff]
    %v2288 = vld [vmem:[#allocation7 + $0x6f0] sm:$0xff]
    %v2289 = vld [vmem:[#allocation7 + $0x6f8] sm:$0xff]
    %v2290 = vld [vmem:[#allocation7 + $0x700] sm:$0xff]
    %v2291 = vld [vmem:[#allocation7 + $0x708] sm:$0xff]
    %v2292 = vld [vmem:[#allocation7 + $0x710] sm:$0xff]
    %v2293 = vld [vmem:[#allocation7 + $0x718] sm:$0xff]
    %v2294 = vld [vmem:[#allocation7 + $0x720] sm:$0xff]
    %v2295 = vld [vmem:[#allocation7 + $0x728] sm:$0xff]
    %v2296 = vld [vmem:[#allocation7 + $0x730] sm:$0xff]
    %v2297 = vld [vmem:[#allocation7 + $0x738] sm:$0xff]
    %v2298 = vld [vmem:[#allocation7 + $0x740] sm:$0xff]
    %v2299 = vld [vmem:[#allocation7 + $0x748] sm:$0xff]
    %v2300 = vld [vmem:[#allocation7 + $0x750] sm:$0xff]
    %v2301 = vld [vmem:[#allocation7 + $0x758] sm:$0xff]
    %v2302 = vld [vmem:[#allocation7 + $0x760] sm:$0xff]
    %v2303 = vld [vmem:[#allocation7 + $0x768] sm:$0xff]
    %v2304 = vld [vmem:[#allocation7 + $0x770] sm:$0xff]
    %v2305 = vld [vmem:[#allocation7 + $0x778] sm:$0xff]
    %v2306 = vld [vmem:[#allocation7 + $0x780] sm:$0xff]
    %v2307 = vld [vmem:[#allocation7 + $0x788] sm:$0xff]
    %v2308 = vld [vmem:[#allocation7 + $0x790] sm:$0xff]
    %v2309 = vld [vmem:[#allocation7 + $0x798] sm:$0xff]
    %v2310 = vld [vmem:[#allocation7 + $0x7a0] sm:$0xff]
    %v2311 = vld [vmem:[#allocation7 + $0x7a8] sm:$0xff]
    %v2312 = vld [vmem:[#allocation7 + $0x7b0] sm:$0xff]
    %v2313 = vld [vmem:[#allocation7 + $0x7b8] sm:$0xff]
    %v2314 = vld [vmem:[#allocation7 + $0x7c0] sm:$0xff]
    %v2315 = vld [vmem:[#allocation7 + $0x7c8] sm:$0xff]
    %v2316 = vld [vmem:[#allocation7 + $0x7d0] sm:$0xff]
    %v2317 = vld [vmem:[#allocation7 + $0x7d8] sm:$0xff]
    %v2318 = vld [vmem:[#allocation7 + $0x7e0] sm:$0xff]
    %v2319 = vld [vmem:[#allocation7 + $0x7e8] sm:$0xff]
    %v2320 = vld [vmem:[#allocation7 + $0x7f0] sm:$0xff]
    %v2321 = vld [vmem:[#allocation7 + $0x7f8] sm:$0xff]
    %v2323 = vlaneseq
    %v2324 = vshrl.u32 %v2323, 7
    %v2325 = vsub.s32 0, %v2324
    %v2326 = vrot.slane %v399, %v2325
    %v2327 = vlaneseq
    %v2328 = vshrl.u32 %v2327, 7
    %v2329 = vsub.s32 1, %v2328
    %v2330 = vrot.slane %v399, %v2329
    %v2331 = vlaneseq
    %v2332 = vshrl.u32 %v2331, 7
    %v2333 = vsub.s32 2, %v2332
    %v2334 = vrot.slane %v399, %v2333
    %v2335 = vlaneseq
    %v2336 = vshrl.u32 %v2335, 7
    %v2337 = vsub.s32 3, %v2336
    %v2338 = vrot.slane %v399, %v2337
    %v2599 = vunpack.c.l.b16 %v2066
    %v2600 = vunpack.c.h.b16 %v2066
    %v2601 = vunpack.c.l.b16 %v2067
    %v2602 = vunpack.c.h.b16 %v2067
    %v2603 = vunpack.c.l.b16 %v2068
    %v2604 = vunpack.c.h.b16 %v2068
    %v2605 = vunpack.c.l.b16 %v2069
    %v2606 = vunpack.c.h.b16 %v2069
    %v2607 = vunpack.c.l.b16 %v2070
    %v2608 = vunpack.c.h.b16 %v2070
    %v2609 = vunpack.c.l.b16 %v2071
    %v2610 = vunpack.c.h.b16 %v2071
    %v2611 = vunpack.c.l.b16 %v2072
    %v2612 = vunpack.c.h.b16 %v2072
    %v2613 = vunpack.c.l.b16 %v2073
    %v2614 = vunpack.c.h.b16 %v2073
    %v2615 = vunpack.c.l.b16 %v2074
    %v2616 = vunpack.c.h.b16 %v2074
    %v2617 = vunpack.c.l.b16 %v2075
    %v2618 = vunpack.c.h.b16 %v2075
    %v2619 = vunpack.c.l.b16 %v2076
    %v2620 = vunpack.c.h.b16 %v2076
    %v2621 = vunpack.c.l.b16 %v2077
    %v2622 = vunpack.c.h.b16 %v2077
    %v2623 = vunpack.c.l.b16 %v2078
    %v2624 = vunpack.c.h.b16 %v2078
    %v2625 = vunpack.c.l.b16 %v2079
    %v2626 = vunpack.c.h.b16 %v2079
    %v2627 = vunpack.c.l.b16 %v2080
    %v2628 = vunpack.c.h.b16 %v2080
    %v2629 = vunpack.c.l.b16 %v2081
    %v2630 = vunpack.c.h.b16 %v2081
    %v2631 = vunpack.c.l.b16 %v2082
    %v2632 = vunpack.c.h.b16 %v2082
    %v2633 = vunpack.c.l.b16 %v2083
    %v2634 = vunpack.c.h.b16 %v2083
    %v2635 = vunpack.c.l.b16 %v2084
    %v2636 = vunpack.c.h.b16 %v2084
    %v2637 = vunpack.c.l.b16 %v2085
    %v2638 = vunpack.c.h.b16 %v2085
    %v2639 = vunpack.c.l.b16 %v2086
    %v2640 = vunpack.c.h.b16 %v2086
    %v2641 = vunpack.c.l.b16 %v2087
    %v2642 = vunpack.c.h.b16 %v2087
    %v2643 = vunpack.c.l.b16 %v2088
    %v2644 = vunpack.c.h.b16 %v2088
    %v2645 = vunpack.c.l.b16 %v2089
    %v2646 = vunpack.c.h.b16 %v2089
    %v2647 = vunpack.c.l.b16 %v2090
    %v2648 = vunpack.c.h.b16 %v2090
    %v2649 = vunpack.c.l.b16 %v2091
    %v2650 = vunpack.c.h.b16 %v2091
    %v2651 = vunpack.c.l.b16 %v2092
    %v2652 = vunpack.c.h.b16 %v2092
    %v2653 = vunpack.c.l.b16 %v2093
    %v2654 = vunpack.c.h.b16 %v2093
    %v2655 = vunpack.c.l.b16 %v2094
    %v2656 = vunpack.c.h.b16 %v2094
    %v2657 = vunpack.c.l.b16 %v2095
    %v2658 = vunpack.c.h.b16 %v2095
    %v2659 = vunpack.c.l.b16 %v2096
    %v2660 = vunpack.c.h.b16 %v2096
    %v2661 = vunpack.c.l.b16 %v2097
    %v2662 = vunpack.c.h.b16 %v2097
    %v2663 = vunpack.c.l.b16 %v2098
    %v2664 = vunpack.c.h.b16 %v2098
    %v2665 = vunpack.c.l.b16 %v2099
    %v2666 = vunpack.c.h.b16 %v2099
    %v2667 = vunpack.c.l.b16 %v2100
    %v2668 = vunpack.c.h.b16 %v2100
    %v2669 = vunpack.c.l.b16 %v2101
    %v2670 = vunpack.c.h.b16 %v2101
    %v2671 = vunpack.c.l.b16 %v2102
    %v2672 = vunpack.c.h.b16 %v2102
    %v2673 = vunpack.c.l.b16 %v2103
    %v2674 = vunpack.c.h.b16 %v2103
    %v2675 = vunpack.c.l.b16 %v2104
    %v2676 = vunpack.c.h.b16 %v2104
    %v2677 = vunpack.c.l.b16 %v2105
    %v2678 = vunpack.c.h.b16 %v2105
    %v2679 = vunpack.c.l.b16 %v2106
    %v2680 = vunpack.c.h.b16 %v2106
    %v2681 = vunpack.c.l.b16 %v2107
    %v2682 = vunpack.c.h.b16 %v2107
    %v2683 = vunpack.c.l.b16 %v2108
    %v2684 = vunpack.c.h.b16 %v2108
    %v2685 = vunpack.c.l.b16 %v2109
    %v2686 = vunpack.c.h.b16 %v2109
    %v2687 = vunpack.c.l.b16 %v2110
    %v2688 = vunpack.c.h.b16 %v2110
    %v2689 = vunpack.c.l.b16 %v2111
    %v2690 = vunpack.c.h.b16 %v2111
    %v2691 = vunpack.c.l.b16 %v2112
    %v2692 = vunpack.c.h.b16 %v2112
    %v2693 = vunpack.c.l.b16 %v2113
    %v2694 = vunpack.c.h.b16 %v2113
    %v2695 = vunpack.c.l.b16 %v2114
    %v2696 = vunpack.c.h.b16 %v2114
    %v2697 = vunpack.c.l.b16 %v2115
    %v2698 = vunpack.c.h.b16 %v2115
    %v2699 = vunpack.c.l.b16 %v2116
    %v2700 = vunpack.c.h.b16 %v2116
    %v2701 = vunpack.c.l.b16 %v2117
    %v2702 = vunpack.c.h.b16 %v2117
    %v2703 = vunpack.c.l.b16 %v2118
    %v2704 = vunpack.c.h.b16 %v2118
    %v2705 = vunpack.c.l.b16 %v2119
    %v2706 = vunpack.c.h.b16 %v2119
    %v2707 = vunpack.c.l.b16 %v2120
    %v2708 = vunpack.c.h.b16 %v2120
    %v2709 = vunpack.c.l.b16 %v2121
    %v2710 = vunpack.c.h.b16 %v2121
    %v2711 = vunpack.c.l.b16 %v2122
    %v2712 = vunpack.c.h.b16 %v2122
    %v2713 = vunpack.c.l.b16 %v2123
    %v2714 = vunpack.c.h.b16 %v2123
    %v2715 = vunpack.c.l.b16 %v2124
    %v2716 = vunpack.c.h.b16 %v2124
    %v2717 = vunpack.c.l.b16 %v2125
    %v2718 = vunpack.c.h.b16 %v2125
    %v2719 = vunpack.c.l.b16 %v2126
    %v2720 = vunpack.c.h.b16 %v2126
    %v2721 = vunpack.c.l.b16 %v2127
    %v2722 = vunpack.c.h.b16 %v2127
    %v2723 = vunpack.c.l.b16 %v2128
    %v2724 = vunpack.c.h.b16 %v2128
    %v2725 = vunpack.c.l.b16 %v2129
    %v2726 = vunpack.c.h.b16 %v2129
    %v2727 = vunpack.c.l.b16 %v2130
    %v2728 = vunpack.c.h.b16 %v2130
    %v2729 = vunpack.c.l.b16 %v2131
    %v2730 = vunpack.c.h.b16 %v2131
    %v2731 = vunpack.c.l.b16 %v2132
    %v2732 = vunpack.c.h.b16 %v2132
    %v2733 = vunpack.c.l.b16 %v2133
    %v2734 = vunpack.c.h.b16 %v2133
    %v2735 = vunpack.c.l.b16 %v2134
    %v2736 = vunpack.c.h.b16 %v2134
    %v2737 = vunpack.c.l.b16 %v2135
    %v2738 = vunpack.c.h.b16 %v2135
    %v2739 = vunpack.c.l.b16 %v2136
    %v2740 = vunpack.c.h.b16 %v2136
    %v2741 = vunpack.c.l.b16 %v2137
    %v2742 = vunpack.c.h.b16 %v2137
    %v2743 = vunpack.c.l.b16 %v2138
    %v2744 = vunpack.c.h.b16 %v2138
    %v2745 = vunpack.c.l.b16 %v2139
    %v2746 = vunpack.c.h.b16 %v2139
    %v2747 = vunpack.c.l.b16 %v2140
    %v2748 = vunpack.c.h.b16 %v2140
    %v2749 = vunpack.c.l.b16 %v2141
    %v2750 = vunpack.c.h.b16 %v2141
    %v2751 = vunpack.c.l.b16 %v2142
    %v2752 = vunpack.c.h.b16 %v2142
    %v2753 = vunpack.c.l.b16 %v2143
    %v2754 = vunpack.c.h.b16 %v2143
    %v2755 = vunpack.c.l.b16 %v2144
    %v2756 = vunpack.c.h.b16 %v2144
    %v2757 = vunpack.c.l.b16 %v2145
    %v2758 = vunpack.c.h.b16 %v2145
    %v2759 = vunpack.c.l.b16 %v2146
    %v2760 = vunpack.c.h.b16 %v2146
    %v2761 = vunpack.c.l.b16 %v2147
    %v2762 = vunpack.c.h.b16 %v2147
    %v2763 = vunpack.c.l.b16 %v2148
    %v2764 = vunpack.c.h.b16 %v2148
    %v2765 = vunpack.c.l.b16 %v2149
    %v2766 = vunpack.c.h.b16 %v2149
    %v2767 = vunpack.c.l.b16 %v2150
    %v2768 = vunpack.c.h.b16 %v2150
    %v2769 = vunpack.c.l.b16 %v2151
    %v2770 = vunpack.c.h.b16 %v2151
    %v2771 = vunpack.c.l.b16 %v2152
    %v2772 = vunpack.c.h.b16 %v2152
    %v2773 = vunpack.c.l.b16 %v2153
    %v2774 = vunpack.c.h.b16 %v2153
    %v2775 = vunpack.c.l.b16 %v2154
    %v2776 = vunpack.c.h.b16 %v2154
    %v2777 = vunpack.c.l.b16 %v2155
    %v2778 = vunpack.c.h.b16 %v2155
    %v2779 = vunpack.c.l.b16 %v2156
    %v2780 = vunpack.c.h.b16 %v2156
    %v2781 = vunpack.c.l.b16 %v2157
    %v2782 = vunpack.c.h.b16 %v2157
    %v2783 = vunpack.c.l.b16 %v2158
    %v2784 = vunpack.c.h.b16 %v2158
    %v2785 = vunpack.c.l.b16 %v2159
    %v2786 = vunpack.c.h.b16 %v2159
    %v2787 = vunpack.c.l.b16 %v2160
    %v2788 = vunpack.c.h.b16 %v2160
    %v2789 = vunpack.c.l.b16 %v2161
    %v2790 = vunpack.c.h.b16 %v2161
    %v2791 = vunpack.c.l.b16 %v2162
    %v2792 = vunpack.c.h.b16 %v2162
    %v2793 = vunpack.c.l.b16 %v2163
    %v2794 = vunpack.c.h.b16 %v2163
    %v2795 = vunpack.c.l.b16 %v2164
    %v2796 = vunpack.c.h.b16 %v2164
    %v2797 = vunpack.c.l.b16 %v2165
    %v2798 = vunpack.c.h.b16 %v2165
    %v2799 = vunpack.c.l.b16 %v2166
    %v2800 = vunpack.c.h.b16 %v2166
    %v2801 = vunpack.c.l.b16 %v2167
    %v2802 = vunpack.c.h.b16 %v2167
    %v2803 = vunpack.c.l.b16 %v2168
    %v2804 = vunpack.c.h.b16 %v2168
    %v2805 = vunpack.c.l.b16 %v2169
    %v2806 = vunpack.c.h.b16 %v2169
    %v2807 = vunpack.c.l.b16 %v2170
    %v2808 = vunpack.c.h.b16 %v2170
    %v2809 = vunpack.c.l.b16 %v2171
    %v2810 = vunpack.c.h.b16 %v2171
    %v2811 = vunpack.c.l.b16 %v2172
    %v2812 = vunpack.c.h.b16 %v2172
    %v2813 = vunpack.c.l.b16 %v2173
    %v2814 = vunpack.c.h.b16 %v2173
    %v2815 = vunpack.c.l.b16 %v2174
    %v2816 = vunpack.c.h.b16 %v2174
    %v2817 = vunpack.c.l.b16 %v2175
    %v2818 = vunpack.c.h.b16 %v2175
    %v2819 = vunpack.c.l.b16 %v2176
    %v2820 = vunpack.c.h.b16 %v2176
    %v2821 = vunpack.c.l.b16 %v2177
    %v2822 = vunpack.c.h.b16 %v2177
    %v2823 = vunpack.c.l.b16 %v2178
    %v2824 = vunpack.c.h.b16 %v2178
    %v2825 = vunpack.c.l.b16 %v2179
    %v2826 = vunpack.c.h.b16 %v2179
    %v2827 = vunpack.c.l.b16 %v2180
    %v2828 = vunpack.c.h.b16 %v2180
    %v2829 = vunpack.c.l.b16 %v2181
    %v2830 = vunpack.c.h.b16 %v2181
    %v2831 = vunpack.c.l.b16 %v2182
    %v2832 = vunpack.c.h.b16 %v2182
    %v2833 = vunpack.c.l.b16 %v2183
    %v2834 = vunpack.c.h.b16 %v2183
    %v2835 = vunpack.c.l.b16 %v2184
    %v2836 = vunpack.c.h.b16 %v2184
    %v2837 = vunpack.c.l.b16 %v2185
    %v2838 = vunpack.c.h.b16 %v2185
    %v2839 = vunpack.c.l.b16 %v2186
    %v2840 = vunpack.c.h.b16 %v2186
    %v2841 = vunpack.c.l.b16 %v2187
    %v2842 = vunpack.c.h.b16 %v2187
    %v2843 = vunpack.c.l.b16 %v2188
    %v2844 = vunpack.c.h.b16 %v2188
    %v2845 = vunpack.c.l.b16 %v2189
    %v2846 = vunpack.c.h.b16 %v2189
    %v2847 = vunpack.c.l.b16 %v2190
    %v2848 = vunpack.c.h.b16 %v2190
    %v2849 = vunpack.c.l.b16 %v2191
    %v2850 = vunpack.c.h.b16 %v2191
    %v2851 = vunpack.c.l.b16 %v2192
    %v2852 = vunpack.c.h.b16 %v2192
    %v2853 = vunpack.c.l.b16 %v2193
    %v2854 = vunpack.c.h.b16 %v2193
    %v2855 = vunpack.c.l.b16 %v2194
    %v2856 = vunpack.c.h.b16 %v2194
    %v2857 = vunpack.c.l.b16 %v2195
    %v2858 = vunpack.c.h.b16 %v2195
    %v2859 = vunpack.c.l.b16 %v2196
    %v2860 = vunpack.c.h.b16 %v2196
    %v2861 = vunpack.c.l.b16 %v2197
    %v2862 = vunpack.c.h.b16 %v2197
    %v2863 = vunpack.c.l.b16 %v2198
    %v2864 = vunpack.c.h.b16 %v2198
    %v2865 = vunpack.c.l.b16 %v2199
    %v2866 = vunpack.c.h.b16 %v2199
    %v2867 = vunpack.c.l.b16 %v2200
    %v2868 = vunpack.c.h.b16 %v2200
    %v2869 = vunpack.c.l.b16 %v2201
    %v2870 = vunpack.c.h.b16 %v2201
    %v2871 = vunpack.c.l.b16 %v2202
    %v2872 = vunpack.c.h.b16 %v2202
    %v2873 = vunpack.c.l.b16 %v2203
    %v2874 = vunpack.c.h.b16 %v2203
    %v2875 = vunpack.c.l.b16 %v2204
    %v2876 = vunpack.c.h.b16 %v2204
    %v2877 = vunpack.c.l.b16 %v2205
    %v2878 = vunpack.c.h.b16 %v2205
    %v2879 = vunpack.c.l.b16 %v2206
    %v2880 = vunpack.c.h.b16 %v2206
    %v2881 = vunpack.c.l.b16 %v2207
    %v2882 = vunpack.c.h.b16 %v2207
    %v2883 = vunpack.c.l.b16 %v2208
    %v2884 = vunpack.c.h.b16 %v2208
    %v2885 = vunpack.c.l.b16 %v2209
    %v2886 = vunpack.c.h.b16 %v2209
    %v2887 = vunpack.c.l.b16 %v2210
    %v2888 = vunpack.c.h.b16 %v2210
    %v2889 = vunpack.c.l.b16 %v2211
    %v2890 = vunpack.c.h.b16 %v2211
    %v2891 = vunpack.c.l.b16 %v2212
    %v2892 = vunpack.c.h.b16 %v2212
    %v2893 = vunpack.c.l.b16 %v2213
    %v2894 = vunpack.c.h.b16 %v2213
    %v2895 = vunpack.c.l.b16 %v2214
    %v2896 = vunpack.c.h.b16 %v2214
    %v2897 = vunpack.c.l.b16 %v2215
    %v2898 = vunpack.c.h.b16 %v2215
    %v2899 = vunpack.c.l.b16 %v2216
    %v2900 = vunpack.c.h.b16 %v2216
    %v2901 = vunpack.c.l.b16 %v2217
    %v2902 = vunpack.c.h.b16 %v2217
    %v2903 = vunpack.c.l.b16 %v2218
    %v2904 = vunpack.c.h.b16 %v2218
    %v2905 = vunpack.c.l.b16 %v2219
    %v2906 = vunpack.c.h.b16 %v2219
    %v2907 = vunpack.c.l.b16 %v2220
    %v2908 = vunpack.c.h.b16 %v2220
    %v2909 = vunpack.c.l.b16 %v2221
    %v2910 = vunpack.c.h.b16 %v2221
    %v2911 = vunpack.c.l.b16 %v2222
    %v2912 = vunpack.c.h.b16 %v2222
    %v2913 = vunpack.c.l.b16 %v2223
    %v2914 = vunpack.c.h.b16 %v2223
    %v2915 = vunpack.c.l.b16 %v2224
    %v2916 = vunpack.c.h.b16 %v2224
    %v2917 = vunpack.c.l.b16 %v2225
    %v2918 = vunpack.c.h.b16 %v2225
    %v2919 = vunpack.c.l.b16 %v2226
    %v2920 = vunpack.c.h.b16 %v2226
    %v2921 = vunpack.c.l.b16 %v2227
    %v2922 = vunpack.c.h.b16 %v2227
    %v2923 = vunpack.c.l.b16 %v2228
    %v2924 = vunpack.c.h.b16 %v2228
    %v2925 = vunpack.c.l.b16 %v2229
    %v2926 = vunpack.c.h.b16 %v2229
    %v2927 = vunpack.c.l.b16 %v2230
    %v2928 = vunpack.c.h.b16 %v2230
    %v2929 = vunpack.c.l.b16 %v2231
    %v2930 = vunpack.c.h.b16 %v2231
    %v2931 = vunpack.c.l.b16 %v2232
    %v2932 = vunpack.c.h.b16 %v2232
    %v2933 = vunpack.c.l.b16 %v2233
    %v2934 = vunpack.c.h.b16 %v2233
    %v2935 = vunpack.c.l.b16 %v2234
    %v2936 = vunpack.c.h.b16 %v2234
    %v2937 = vunpack.c.l.b16 %v2235
    %v2938 = vunpack.c.h.b16 %v2235
    %v2939 = vunpack.c.l.b16 %v2236
    %v2940 = vunpack.c.h.b16 %v2236
    %v2941 = vunpack.c.l.b16 %v2237
    %v2942 = vunpack.c.h.b16 %v2237
    %v2943 = vunpack.c.l.b16 %v2238
    %v2944 = vunpack.c.h.b16 %v2238
    %v2945 = vunpack.c.l.b16 %v2239
    %v2946 = vunpack.c.h.b16 %v2239
    %v2947 = vunpack.c.l.b16 %v2240
    %v2948 = vunpack.c.h.b16 %v2240
    %v2949 = vunpack.c.l.b16 %v2241
    %v2950 = vunpack.c.h.b16 %v2241
    %v2951 = vunpack.c.l.b16 %v2242
    %v2952 = vunpack.c.h.b16 %v2242
    %v2953 = vunpack.c.l.b16 %v2243
    %v2954 = vunpack.c.h.b16 %v2243
    %v2955 = vunpack.c.l.b16 %v2244
    %v2956 = vunpack.c.h.b16 %v2244
    %v2957 = vunpack.c.l.b16 %v2245
    %v2958 = vunpack.c.h.b16 %v2245
    %v2959 = vunpack.c.l.b16 %v2246
    %v2960 = vunpack.c.h.b16 %v2246
    %v2961 = vunpack.c.l.b16 %v2247
    %v2962 = vunpack.c.h.b16 %v2247
    %v2963 = vunpack.c.l.b16 %v2248
    %v2964 = vunpack.c.h.b16 %v2248
    %v2965 = vunpack.c.l.b16 %v2249
    %v2966 = vunpack.c.h.b16 %v2249
    %v2967 = vunpack.c.l.b16 %v2250
    %v2968 = vunpack.c.h.b16 %v2250
    %v2969 = vunpack.c.l.b16 %v2251
    %v2970 = vunpack.c.h.b16 %v2251
    %v2971 = vunpack.c.l.b16 %v2252
    %v2972 = vunpack.c.h.b16 %v2252
    %v2973 = vunpack.c.l.b16 %v2253
    %v2974 = vunpack.c.h.b16 %v2253
    %v2975 = vunpack.c.l.b16 %v2254
    %v2976 = vunpack.c.h.b16 %v2254
    %v2977 = vunpack.c.l.b16 %v2255
    %v2978 = vunpack.c.h.b16 %v2255
    %v2979 = vunpack.c.l.b16 %v2256
    %v2980 = vunpack.c.h.b16 %v2256
    %v2981 = vunpack.c.l.b16 %v2257
    %v2982 = vunpack.c.h.b16 %v2257
    %v2983 = vunpack.c.l.b16 %v2258
    %v2984 = vunpack.c.h.b16 %v2258
    %v2985 = vunpack.c.l.b16 %v2259
    %v2986 = vunpack.c.h.b16 %v2259
    %v2987 = vunpack.c.l.b16 %v2260
    %v2988 = vunpack.c.h.b16 %v2260
    %v2989 = vunpack.c.l.b16 %v2261
    %v2990 = vunpack.c.h.b16 %v2261
    %v2991 = vunpack.c.l.b16 %v2262
    %v2992 = vunpack.c.h.b16 %v2262
    %v2993 = vunpack.c.l.b16 %v2263
    %v2994 = vunpack.c.h.b16 %v2263
    %v2995 = vunpack.c.l.b16 %v2264
    %v2996 = vunpack.c.h.b16 %v2264
    %v2997 = vunpack.c.l.b16 %v2265
    %v2998 = vunpack.c.h.b16 %v2265
    %v2999 = vunpack.c.l.b16 %v2266
    %v3000 = vunpack.c.h.b16 %v2266
    %v3001 = vunpack.c.l.b16 %v2267
    %v3002 = vunpack.c.h.b16 %v2267
    %v3003 = vunpack.c.l.b16 %v2268
    %v3004 = vunpack.c.h.b16 %v2268
    %v3005 = vunpack.c.l.b16 %v2269
    %v3006 = vunpack.c.h.b16 %v2269
    %v3007 = vunpack.c.l.b16 %v2270
    %v3008 = vunpack.c.h.b16 %v2270
    %v3009 = vunpack.c.l.b16 %v2271
    %v3010 = vunpack.c.h.b16 %v2271
    %v3011 = vunpack.c.l.b16 %v2272
    %v3012 = vunpack.c.h.b16 %v2272
    %v3013 = vunpack.c.l.b16 %v2273
    %v3014 = vunpack.c.h.b16 %v2273
    %v3015 = vunpack.c.l.b16 %v2274
    %v3016 = vunpack.c.h.b16 %v2274
    %v3017 = vunpack.c.l.b16 %v2275
    %v3018 = vunpack.c.h.b16 %v2275
    %v3019 = vunpack.c.l.b16 %v2276
    %v3020 = vunpack.c.h.b16 %v2276
    %v3021 = vunpack.c.l.b16 %v2277
    %v3022 = vunpack.c.h.b16 %v2277
    %v3023 = vunpack.c.l.b16 %v2278
    %v3024 = vunpack.c.h.b16 %v2278
    %v3025 = vunpack.c.l.b16 %v2279
    %v3026 = vunpack.c.h.b16 %v2279
    %v3027 = vunpack.c.l.b16 %v2280
    %v3028 = vunpack.c.h.b16 %v2280
    %v3029 = vunpack.c.l.b16 %v2281
    %v3030 = vunpack.c.h.b16 %v2281
    %v3031 = vunpack.c.l.b16 %v2282
    %v3032 = vunpack.c.h.b16 %v2282
    %v3033 = vunpack.c.l.b16 %v2283
    %v3034 = vunpack.c.h.b16 %v2283
    %v3035 = vunpack.c.l.b16 %v2284
    %v3036 = vunpack.c.h.b16 %v2284
    %v3037 = vunpack.c.l.b16 %v2285
    %v3038 = vunpack.c.h.b16 %v2285
    %v3039 = vunpack.c.l.b16 %v2286
    %v3040 = vunpack.c.h.b16 %v2286
    %v3041 = vunpack.c.l.b16 %v2287
    %v3042 = vunpack.c.h.b16 %v2287
    %v3043 = vunpack.c.l.b16 %v2288
    %v3044 = vunpack.c.h.b16 %v2288
    %v3045 = vunpack.c.l.b16 %v2289
    %v3046 = vunpack.c.h.b16 %v2289
    %v3047 = vunpack.c.l.b16 %v2290
    %v3048 = vunpack.c.h.b16 %v2290
    %v3049 = vunpack.c.l.b16 %v2291
    %v3050 = vunpack.c.h.b16 %v2291
    %v3051 = vunpack.c.l.b16 %v2292
    %v3052 = vunpack.c.h.b16 %v2292
    %v3053 = vunpack.c.l.b16 %v2293
    %v3054 = vunpack.c.h.b16 %v2293
    %v3055 = vunpack.c.l.b16 %v2294
    %v3056 = vunpack.c.h.b16 %v2294
    %v3057 = vunpack.c.l.b16 %v2295
    %v3058 = vunpack.c.h.b16 %v2295
    %v3059 = vunpack.c.l.b16 %v2296
    %v3060 = vunpack.c.h.b16 %v2296
    %v3061 = vunpack.c.l.b16 %v2297
    %v3062 = vunpack.c.h.b16 %v2297
    %v3063 = vunpack.c.l.b16 %v2298
    %v3064 = vunpack.c.h.b16 %v2298
    %v3065 = vunpack.c.l.b16 %v2299
    %v3066 = vunpack.c.h.b16 %v2299
    %v3067 = vunpack.c.l.b16 %v2300
    %v3068 = vunpack.c.h.b16 %v2300
    %v3069 = vunpack.c.l.b16 %v2301
    %v3070 = vunpack.c.h.b16 %v2301
    %v3071 = vunpack.c.l.b16 %v2302
    %v3072 = vunpack.c.h.b16 %v2302
    %v3073 = vunpack.c.l.b16 %v2303
    %v3074 = vunpack.c.h.b16 %v2303
    %v3075 = vunpack.c.l.b16 %v2304
    %v3076 = vunpack.c.h.b16 %v2304
    %v3077 = vunpack.c.l.b16 %v2305
    %v3078 = vunpack.c.h.b16 %v2305
    %v3079 = vunpack.c.l.b16 %v2306
    %v3080 = vunpack.c.h.b16 %v2306
    %v3081 = vunpack.c.l.b16 %v2307
    %v3082 = vunpack.c.h.b16 %v2307
    %v3083 = vunpack.c.l.b16 %v2308
    %v3084 = vunpack.c.h.b16 %v2308
    %v3085 = vunpack.c.l.b16 %v2309
    %v3086 = vunpack.c.h.b16 %v2309
    %v3087 = vunpack.c.l.b16 %v2310
    %v3088 = vunpack.c.h.b16 %v2310
    %v3089 = vunpack.c.l.b16 %v2311
    %v3090 = vunpack.c.h.b16 %v2311
    %v3091 = vunpack.c.l.b16 %v2312
    %v3092 = vunpack.c.h.b16 %v2312
    %v3093 = vunpack.c.l.b16 %v2313
    %v3094 = vunpack.c.h.b16 %v2313
    %v3095 = vunpack.c.l.b16 %v2314
    %v3096 = vunpack.c.h.b16 %v2314
    %v3097 = vunpack.c.l.b16 %v2315
    %v3098 = vunpack.c.h.b16 %v2315
    %v3099 = vunpack.c.l.b16 %v2316
    %v3100 = vunpack.c.h.b16 %v2316
    %v3101 = vunpack.c.l.b16 %v2317
    %v3102 = vunpack.c.h.b16 %v2317
    %v3103 = vunpack.c.l.b16 %v2318
    %v3104 = vunpack.c.h.b16 %v2318
    %v3105 = vunpack.c.l.b16 %v2319
    %v3106 = vunpack.c.h.b16 %v2319
    %v3107 = vunpack.c.l.b16 %v2320
    %v3108 = vunpack.c.h.b16 %v2320
    %v3109 = vunpack.c.l.b16 %v2321
    %v3110 = vunpack.c.h.b16 %v2321
    %v3111 = vpack.c.b16 %v2603, %v2599
    %v3112 = vpack.c.b16 %v2604, %v2600
    %v3113 = vpack.c.b16 %v2605, %v2601
    %v3114 = vpack.c.b16 %v2606, %v2602
    %v3115 = vpack.c.b16 %v2611, %v2607
    %v3116 = vpack.c.b16 %v2612, %v2608
    %v3117 = vpack.c.b16 %v2613, %v2609
    %v3118 = vpack.c.b16 %v2614, %v2610
    %v3119 = vpack.c.b16 %v2619, %v2615
    %v3120 = vpack.c.b16 %v2620, %v2616
    %v3121 = vpack.c.b16 %v2621, %v2617
    %v3122 = vpack.c.b16 %v2622, %v2618
    %v3123 = vpack.c.b16 %v2627, %v2623
    %v3124 = vpack.c.b16 %v2628, %v2624
    %v3125 = vpack.c.b16 %v2629, %v2625
    %v3126 = vpack.c.b16 %v2630, %v2626
    %v3127 = vpack.c.b16 %v2635, %v2631
    %v3128 = vpack.c.b16 %v2636, %v2632
    %v3129 = vpack.c.b16 %v2637, %v2633
    %v3130 = vpack.c.b16 %v2638, %v2634
    %v3131 = vpack.c.b16 %v2643, %v2639
    %v3132 = vpack.c.b16 %v2644, %v2640
    %v3133 = vpack.c.b16 %v2645, %v2641
    %v3134 = vpack.c.b16 %v2646, %v2642
    %v3135 = vpack.c.b16 %v2651, %v2647
    %v3136 = vpack.c.b16 %v2652, %v2648
    %v3137 = vpack.c.b16 %v2653, %v2649
    %v3138 = vpack.c.b16 %v2654, %v2650
    %v3139 = vpack.c.b16 %v2659, %v2655
    %v3140 = vpack.c.b16 %v2660, %v2656
    %v3141 = vpack.c.b16 %v2661, %v2657
    %v3142 = vpack.c.b16 %v2662, %v2658
    %v3143 = vpack.c.b16 %v2667, %v2663
    %v3144 = vpack.c.b16 %v2668, %v2664
    %v3145 = vpack.c.b16 %v2669, %v2665
    %v3146 = vpack.c.b16 %v2670, %v2666
    %v3147 = vpack.c.b16 %v2675, %v2671
    %v3148 = vpack.c.b16 %v2676, %v2672
    %v3149 = vpack.c.b16 %v2677, %v2673
    %v3150 = vpack.c.b16 %v2678, %v2674
    %v3151 = vpack.c.b16 %v2683, %v2679
    %v3152 = vpack.c.b16 %v2684, %v2680
    %v3153 = vpack.c.b16 %v2685, %v2681
    %v3154 = vpack.c.b16 %v2686, %v2682
    %v3155 = vpack.c.b16 %v2691, %v2687
    %v3156 = vpack.c.b16 %v2692, %v2688
    %v3157 = vpack.c.b16 %v2693, %v2689
    %v3158 = vpack.c.b16 %v2694, %v2690
    %v3159 = vpack.c.b16 %v2699, %v2695
    %v3160 = vpack.c.b16 %v2700, %v2696
    %v3161 = vpack.c.b16 %v2701, %v2697
    %v3162 = vpack.c.b16 %v2702, %v2698
    %v3163 = vpack.c.b16 %v2707, %v2703
    %v3164 = vpack.c.b16 %v2708, %v2704
    %v3165 = vpack.c.b16 %v2709, %v2705
    %v3166 = vpack.c.b16 %v2710, %v2706
    %v3167 = vpack.c.b16 %v2715, %v2711
    %v3168 = vpack.c.b16 %v2716, %v2712
    %v3169 = vpack.c.b16 %v2717, %v2713
    %v3170 = vpack.c.b16 %v2718, %v2714
    %v3171 = vpack.c.b16 %v2723, %v2719
    %v3172 = vpack.c.b16 %v2724, %v2720
    %v3173 = vpack.c.b16 %v2725, %v2721
    %v3174 = vpack.c.b16 %v2726, %v2722
    %v3175 = vpack.c.b16 %v2731, %v2727
    %v3176 = vpack.c.b16 %v2732, %v2728
    %v3177 = vpack.c.b16 %v2733, %v2729
    %v3178 = vpack.c.b16 %v2734, %v2730
    %v3179 = vpack.c.b16 %v2739, %v2735
    %v3180 = vpack.c.b16 %v2740, %v2736
    %v3181 = vpack.c.b16 %v2741, %v2737
    %v3182 = vpack.c.b16 %v2742, %v2738
    %v3183 = vpack.c.b16 %v2747, %v2743
    %v3184 = vpack.c.b16 %v2748, %v2744
    %v3185 = vpack.c.b16 %v2749, %v2745
    %v3186 = vpack.c.b16 %v2750, %v2746
    %v3187 = vpack.c.b16 %v2755, %v2751
    %v3188 = vpack.c.b16 %v2756, %v2752
    %v3189 = vpack.c.b16 %v2757, %v2753
    %v3190 = vpack.c.b16 %v2758, %v2754
    %v3191 = vpack.c.b16 %v2763, %v2759
    %v3192 = vpack.c.b16 %v2764, %v2760
    %v3193 = vpack.c.b16 %v2765, %v2761
    %v3194 = vpack.c.b16 %v2766, %v2762
    %v3195 = vpack.c.b16 %v2771, %v2767
    %v3196 = vpack.c.b16 %v2772, %v2768
    %v3197 = vpack.c.b16 %v2773, %v2769
    %v3198 = vpack.c.b16 %v2774, %v2770
    %v3199 = vpack.c.b16 %v2779, %v2775
    %v3200 = vpack.c.b16 %v2780, %v2776
    %v3201 = vpack.c.b16 %v2781, %v2777
    %v3202 = vpack.c.b16 %v2782, %v2778
    %v3203 = vpack.c.b16 %v2787, %v2783
    %v3204 = vpack.c.b16 %v2788, %v2784
    %v3205 = vpack.c.b16 %v2789, %v2785
    %v3206 = vpack.c.b16 %v2790, %v2786
    %v3207 = vpack.c.b16 %v2795, %v2791
    %v3208 = vpack.c.b16 %v2796, %v2792
    %v3209 = vpack.c.b16 %v2797, %v2793
    %v3210 = vpack.c.b16 %v2798, %v2794
    %v3211 = vpack.c.b16 %v2803, %v2799
    %v3212 = vpack.c.b16 %v2804, %v2800
    %v3213 = vpack.c.b16 %v2805, %v2801
    %v3214 = vpack.c.b16 %v2806, %v2802
    %v3215 = vpack.c.b16 %v2811, %v2807
    %v3216 = vpack.c.b16 %v2812, %v2808
    %v3217 = vpack.c.b16 %v2813, %v2809
    %v3218 = vpack.c.b16 %v2814, %v2810
    %v3219 = vpack.c.b16 %v2819, %v2815
    %v3220 = vpack.c.b16 %v2820, %v2816
    %v3221 = vpack.c.b16 %v2821, %v2817
    %v3222 = vpack.c.b16 %v2822, %v2818
    %v3223 = vpack.c.b16 %v2827, %v2823
    %v3224 = vpack.c.b16 %v2828, %v2824
    %v3225 = vpack.c.b16 %v2829, %v2825
    %v3226 = vpack.c.b16 %v2830, %v2826
    %v3227 = vpack.c.b16 %v2835, %v2831
    %v3228 = vpack.c.b16 %v2836, %v2832
    %v3229 = vpack.c.b16 %v2837, %v2833
    %v3230 = vpack.c.b16 %v2838, %v2834
    %v3231 = vpack.c.b16 %v2843, %v2839
    %v3232 = vpack.c.b16 %v2844, %v2840
    %v3233 = vpack.c.b16 %v2845, %v2841
    %v3234 = vpack.c.b16 %v2846, %v2842
    %v3235 = vpack.c.b16 %v2851, %v2847
    %v3236 = vpack.c.b16 %v2852, %v2848
    %v3237 = vpack.c.b16 %v2853, %v2849
    %v3238 = vpack.c.b16 %v2854, %v2850
    %v3239 = vpack.c.b16 %v2859, %v2855
    %v3240 = vpack.c.b16 %v2860, %v2856
    %v3241 = vpack.c.b16 %v2861, %v2857
    %v3242 = vpack.c.b16 %v2862, %v2858
    %v3243 = vpack.c.b16 %v2867, %v2863
    %v3244 = vpack.c.b16 %v2868, %v2864
    %v3245 = vpack.c.b16 %v2869, %v2865
    %v3246 = vpack.c.b16 %v2870, %v2866
    %v3247 = vpack.c.b16 %v2875, %v2871
    %v3248 = vpack.c.b16 %v2876, %v2872
    %v3249 = vpack.c.b16 %v2877, %v2873
    %v3250 = vpack.c.b16 %v2878, %v2874
    %v3251 = vpack.c.b16 %v2883, %v2879
    %v3252 = vpack.c.b16 %v2884, %v2880
    %v3253 = vpack.c.b16 %v2885, %v2881
    %v3254 = vpack.c.b16 %v2886, %v2882
    %v3255 = vpack.c.b16 %v2891, %v2887
    %v3256 = vpack.c.b16 %v2892, %v2888
    %v3257 = vpack.c.b16 %v2893, %v2889
    %v3258 = vpack.c.b16 %v2894, %v2890
    %v3259 = vpack.c.b16 %v2899, %v2895
    %v3260 = vpack.c.b16 %v2900, %v2896
    %v3261 = vpack.c.b16 %v2901, %v2897
    %v3262 = vpack.c.b16 %v2902, %v2898
    %v3263 = vpack.c.b16 %v2907, %v2903
    %v3264 = vpack.c.b16 %v2908, %v2904
    %v3265 = vpack.c.b16 %v2909, %v2905
    %v3266 = vpack.c.b16 %v2910, %v2906
    %v3267 = vpack.c.b16 %v2915, %v2911
    %v3268 = vpack.c.b16 %v2916, %v2912
    %v3269 = vpack.c.b16 %v2917, %v2913
    %v3270 = vpack.c.b16 %v2918, %v2914
    %v3271 = vpack.c.b16 %v2923, %v2919
    %v3272 = vpack.c.b16 %v2924, %v2920
    %v3273 = vpack.c.b16 %v2925, %v2921
    %v3274 = vpack.c.b16 %v2926, %v2922
    %v3275 = vpack.c.b16 %v2931, %v2927
    %v3276 = vpack.c.b16 %v2932, %v2928
    %v3277 = vpack.c.b16 %v2933, %v2929
    %v3278 = vpack.c.b16 %v2934, %v2930
    %v3279 = vpack.c.b16 %v2939, %v2935
    %v3280 = vpack.c.b16 %v2940, %v2936
    %v3281 = vpack.c.b16 %v2941, %v2937
    %v3282 = vpack.c.b16 %v2942, %v2938
    %v3283 = vpack.c.b16 %v2947, %v2943
    %v3284 = vpack.c.b16 %v2948, %v2944
    %v3285 = vpack.c.b16 %v2949, %v2945
    %v3286 = vpack.c.b16 %v2950, %v2946
    %v3287 = vpack.c.b16 %v2955, %v2951
    %v3288 = vpack.c.b16 %v2956, %v2952
    %v3289 = vpack.c.b16 %v2957, %v2953
    %v3290 = vpack.c.b16 %v2958, %v2954
    %v3291 = vpack.c.b16 %v2963, %v2959
    %v3292 = vpack.c.b16 %v2964, %v2960
    %v3293 = vpack.c.b16 %v2965, %v2961
    %v3294 = vpack.c.b16 %v2966, %v2962
    %v3295 = vpack.c.b16 %v2971, %v2967
    %v3296 = vpack.c.b16 %v2972, %v2968
    %v3297 = vpack.c.b16 %v2973, %v2969
    %v3298 = vpack.c.b16 %v2974, %v2970
    %v3299 = vpack.c.b16 %v2979, %v2975
    %v3300 = vpack.c.b16 %v2980, %v2976
    %v3301 = vpack.c.b16 %v2981, %v2977
    %v3302 = vpack.c.b16 %v2982, %v2978
    %v3303 = vpack.c.b16 %v2987, %v2983
    %v3304 = vpack.c.b16 %v2988, %v2984
    %v3305 = vpack.c.b16 %v2989, %v2985
    %v3306 = vpack.c.b16 %v2990, %v2986
    %v3307 = vpack.c.b16 %v2995, %v2991
    %v3308 = vpack.c.b16 %v2996, %v2992
    %v3309 = vpack.c.b16 %v2997, %v2993
    %v3310 = vpack.c.b16 %v2998, %v2994
    %v3311 = vpack.c.b16 %v3003, %v2999
    %v3312 = vpack.c.b16 %v3004, %v3000
    %v3313 = vpack.c.b16 %v3005, %v3001
    %v3314 = vpack.c.b16 %v3006, %v3002
    %v3315 = vpack.c.b16 %v3011, %v3007
    %v3316 = vpack.c.b16 %v3012, %v3008
    %v3317 = vpack.c.b16 %v3013, %v3009
    %v3318 = vpack.c.b16 %v3014, %v3010
    %v3319 = vpack.c.b16 %v3019, %v3015
    %v3320 = vpack.c.b16 %v3020, %v3016
    %v3321 = vpack.c.b16 %v3021, %v3017
    %v3322 = vpack.c.b16 %v3022, %v3018
    %v3323 = vpack.c.b16 %v3027, %v3023
    %v3324 = vpack.c.b16 %v3028, %v3024
    %v3325 = vpack.c.b16 %v3029, %v3025
    %v3326 = vpack.c.b16 %v3030, %v3026
    %v3327 = vpack.c.b16 %v3035, %v3031
    %v3328 = vpack.c.b16 %v3036, %v3032
    %v3329 = vpack.c.b16 %v3037, %v3033
    %v3330 = vpack.c.b16 %v3038, %v3034
    %v3331 = vpack.c.b16 %v3043, %v3039
    %v3332 = vpack.c.b16 %v3044, %v3040
    %v3333 = vpack.c.b16 %v3045, %v3041
    %v3334 = vpack.c.b16 %v3046, %v3042
    %v3335 = vpack.c.b16 %v3051, %v3047
    %v3336 = vpack.c.b16 %v3052, %v3048
    %v3337 = vpack.c.b16 %v3053, %v3049
    %v3338 = vpack.c.b16 %v3054, %v3050
    %v3339 = vpack.c.b16 %v3059, %v3055
    %v3340 = vpack.c.b16 %v3060, %v3056
    %v3341 = vpack.c.b16 %v3061, %v3057
    %v3342 = vpack.c.b16 %v3062, %v3058
    %v3343 = vpack.c.b16 %v3067, %v3063
    %v3344 = vpack.c.b16 %v3068, %v3064
    %v3345 = vpack.c.b16 %v3069, %v3065
    %v3346 = vpack.c.b16 %v3070, %v3066
    %v3347 = vpack.c.b16 %v3075, %v3071
    %v3348 = vpack.c.b16 %v3076, %v3072
    %v3349 = vpack.c.b16 %v3077, %v3073
    %v3350 = vpack.c.b16 %v3078, %v3074
    %v3351 = vpack.c.b16 %v3083, %v3079
    %v3352 = vpack.c.b16 %v3084, %v3080
    %v3353 = vpack.c.b16 %v3085, %v3081
    %v3354 = vpack.c.b16 %v3086, %v3082
    %v3355 = vpack.c.b16 %v3091, %v3087
    %v3356 = vpack.c.b16 %v3092, %v3088
    %v3357 = vpack.c.b16 %v3093, %v3089
    %v3358 = vpack.c.b16 %v3094, %v3090
    %v3359 = vpack.c.b16 %v3099, %v3095
    %v3360 = vpack.c.b16 %v3100, %v3096
    %v3361 = vpack.c.b16 %v3101, %v3097
    %v3362 = vpack.c.b16 %v3102, %v3098
    %v3363 = vpack.c.b16 %v3107, %v3103
    %v3364 = vpack.c.b16 %v3108, %v3104
    %v3365 = vpack.c.b16 %v3109, %v3105
    %v3366 = vpack.c.b16 %v3110, %v3106
    %3623 = vmatprep.subr.bf16.mxu0 %v3140
    %3624 = vmatpush1.bf16.msra.mxu0 %v3139
    %3625 = vmatprep.subr.bf16.mxu0 %v3136
    %3626 = vmatpush1.bf16.msra.mxu0 %v3135
    %3627 = vmatprep.subr.bf16.mxu0 %v3132
    %3628 = vmatpush1.bf16.msra.mxu0 %v3131
    %3629 = vmatprep.subr.bf16.mxu0 %v3128
    %3630 = vmatpush1.bf16.msra.mxu0 %v3127
    %3631 = vmatprep.subr.bf16.mxu0 %v3124
    %3632 = vmatpush1.bf16.msra.mxu0 %v3123
    %3633 = vmatprep.subr.bf16.mxu0 %v3120
    %3634 = vmatpush1.bf16.msra.mxu0 %v3119
    %3635 = vmatprep.subr.bf16.mxu0 %v3116
    %3636 = vmatpush1.bf16.msra.mxu0 %v3115
    %3637 = vmatprep.subr.bf16.mxu0 %v3112
    %3638 = vmatpush1.bf16.msra.mxu0 %v3111
    %3639 = vmatprep.subr.bf16.mxu0 %v3172
    %3640 = vmatpush2.bf16.msra.mxu0 %v3171
    %3641 = vmatprep.subr.bf16.mxu0 %v3168
    %3642 = vmatpush2.bf16.msra.mxu0 %v3167
    %3643 = vmatprep.subr.bf16.mxu0 %v3164
    %3644 = vmatpush2.bf16.msra.mxu0 %v3163
    %3645 = vmatprep.subr.bf16.mxu0 %v3160
    %3646 = vmatpush2.bf16.msra.mxu0 %v3159
    %3647 = vmatprep.subr.bf16.mxu0 %v3156
    %3648 = vmatpush2.bf16.msra.mxu0 %v3155
    %3649 = vmatprep.subr.bf16.mxu0 %v3152
    %3650 = vmatpush2.bf16.msra.mxu0 %v3151
    %3651 = vmatprep.subr.bf16.mxu0 %v3148
    %3652 = vmatpush2.bf16.msra.mxu0 %v3147
    %3653 = vmatprep.subr.bf16.mxu0 %v3144
    %3654 = vmatpush2.bf16.msra.mxu0 %v3143
    %3655 = vmatprep.mubr.bf16.mxu0 %v2059
    %3656 = vmatmul.mubr.bf16.gmra.mxu0 %v2058
    %v3657 = vpop.f32.mrf.mxu0
    %v3658 = vadd.f32 %v2326, %v3657
    %v3659 = vpop.f32.mrf.mxu0
    %v3660 = vadd.f32 %v2330, %v3659
    %v3661 = vpop.f32.mrf.mxu0
    %v3662 = vpop.f32.mrf.mxu0
    %3663 = vdwg.mxu0
    %3664 = vmatprep.subr.bf16.mxu0 %v3204
    %3665 = vmatpush1.bf16.msra.mxu0 %v3203
    %3666 = vmatprep.subr.bf16.mxu0 %v3200
    %3667 = vmatpush1.bf16.msra.mxu0 %v3199
    %3668 = vmatprep.subr.bf16.mxu0 %v3196
    %3669 = vmatpush1.bf16.msra.mxu0 %v3195
    %3670 = vmatprep.subr.bf16.mxu0 %v3192
    %3671 = vmatpush1.bf16.msra.mxu0 %v3191
    %3672 = vmatprep.subr.bf16.mxu0 %v3188
    %3673 = vmatpush1.bf16.msra.mxu0 %v3187
    %3674 = vmatprep.subr.bf16.mxu0 %v3184
    %3675 = vmatpush1.bf16.msra.mxu0 %v3183
    %3676 = vmatprep.subr.bf16.mxu0 %v3180
    %3677 = vmatpush1.bf16.msra.mxu0 %v3179
    %3678 = vmatprep.subr.bf16.mxu0 %v3176
    %3679 = vmatpush1.bf16.msra.mxu0 %v3175
    %3680 = vmatprep.subr.bf16.mxu0 %v3236
    %3681 = vmatpush2.bf16.msra.mxu0 %v3235
    %3682 = vmatprep.subr.bf16.mxu0 %v3232
    %3683 = vmatpush2.bf16.msra.mxu0 %v3231
    %3684 = vmatprep.subr.bf16.mxu0 %v3228
    %3685 = vmatpush2.bf16.msra.mxu0 %v3227
    %3686 = vmatprep.subr.bf16.mxu0 %v3224
    %3687 = vmatpush2.bf16.msra.mxu0 %v3223
    %3688 = vmatprep.subr.bf16.mxu0 %v3220
    %3689 = vmatpush2.bf16.msra.mxu0 %v3219
    %3690 = vmatprep.subr.bf16.mxu0 %v3216
    %3691 = vmatpush2.bf16.msra.mxu0 %v3215
    %3692 = vmatprep.subr.bf16.mxu0 %v3212
    %3693 = vmatpush2.bf16.msra.mxu0 %v3211
    %3694 = vmatprep.subr.bf16.mxu0 %v3208
    %3695 = vmatpush2.bf16.msra.mxu0 %v3207
    %3696 = vmatprep.mubr.bf16.mxu0 %v2061
    %3697 = vmatmul.mubr.bf16.gmra.mxu0 %v2060
    %v3698 = vpop.f32.mrf.mxu0
    %v3699 = vadd.f32 %v3658, %v3698
    %v3700 = vpop.f32.mrf.mxu0
    %v3701 = vadd.f32 %v3660, %v3700
    %v3702 = vpop.f32.mrf.mxu0
    %v3703 = vpop.f32.mrf.mxu0
    %3704 = vdwg.mxu0
    %3705 = vmatprep.subr.bf16.mxu0 %v3268
    %3706 = vmatpush1.bf16.msra.mxu0 %v3267
    %3707 = vmatprep.subr.bf16.mxu0 %v3264
    %3708 = vmatpush1.bf16.msra.mxu0 %v3263
    %3709 = vmatprep.subr.bf16.mxu0 %v3260
    %3710 = vmatpush1.bf16.msra.mxu0 %v3259
    %3711 = vmatprep.subr.bf16.mxu0 %v3256
    %3712 = vmatpush1.bf16.msra.mxu0 %v3255
    %3713 = vmatprep.subr.bf16.mxu0 %v3252
    %3714 = vmatpush1.bf16.msra.mxu0 %v3251
    %3715 = vmatprep.subr.bf16.mxu0 %v3248
    %3716 = vmatpush1.bf16.msra.mxu0 %v3247
    %3717 = vmatprep.subr.bf16.mxu0 %v3244
    %3718 = vmatpush1.bf16.msra.mxu0 %v3243
    %3719 = vmatprep.subr.bf16.mxu0 %v3240
    %3720 = vmatpush1.bf16.msra.mxu0 %v3239
    %3721 = vmatprep.subr.bf16.mxu0 %v3300
    %3722 = vmatpush2.bf16.msra.mxu0 %v3299
    %3723 = vmatprep.subr.bf16.mxu0 %v3296
    %3724 = vmatpush2.bf16.msra.mxu0 %v3295
    %3725 = vmatprep.subr.bf16.mxu0 %v3292
    %3726 = vmatpush2.bf16.msra.mxu0 %v3291
    %3727 = vmatprep.subr.bf16.mxu0 %v3288
    %3728 = vmatpush2.bf16.msra.mxu0 %v3287
    %3729 = vmatprep.subr.bf16.mxu0 %v3284
    %3730 = vmatpush2.bf16.msra.mxu0 %v3283
    %3731 = vmatprep.subr.bf16.mxu0 %v3280
    %3732 = vmatpush2.bf16.msra.mxu0 %v3279
    %3733 = vmatprep.subr.bf16.mxu0 %v3276
    %3734 = vmatpush2.bf16.msra.mxu0 %v3275
    %3735 = vmatprep.subr.bf16.mxu0 %v3272
    %3736 = vmatpush2.bf16.msra.mxu0 %v3271
    %3737 = vmatprep.mubr.bf16.mxu0 %v2063
    %3738 = vmatmul.mubr.bf16.gmra.mxu0 %v2062
    %v3739 = vpop.f32.mrf.mxu0
    %v3740 = vadd.f32 %v3699, %v3739
    %v3741 = vpop.f32.mrf.mxu0
    %v3742 = vadd.f32 %v3701, %v3741
    %v3743 = vpop.f32.mrf.mxu0
    %v3744 = vpop.f32.mrf.mxu0
    %3745 = vdwg.mxu0
    %3746 = vmatprep.subr.bf16.mxu0 %v3332
    %3747 = vmatpush1.bf16.msra.mxu0 %v3331
    %3748 = vmatprep.subr.bf16.mxu0 %v3328
    %3749 = vmatpush1.bf16.msra.mxu0 %v3327
    %3750 = vmatprep.subr.bf16.mxu0 %v3324
    %3751 = vmatpush1.bf16.msra.mxu0 %v3323
    %3752 = vmatprep.subr.bf16.mxu0 %v3320
    %3753 = vmatpush1.bf16.msra.mxu0 %v3319
    %3754 = vmatprep.subr.bf16.mxu0 %v3316
    %3755 = vmatpush1.bf16.msra.mxu0 %v3315
    %3756 = vmatprep.subr.bf16.mxu0 %v3312
    %3757 = vmatpush1.bf16.msra.mxu0 %v3311
    %3758 = vmatprep.subr.bf16.mxu0 %v3308
    %3759 = vmatpush1.bf16.msra.mxu0 %v3307
    %3760 = vmatprep.subr.bf16.mxu0 %v3304
    %3761 = vmatpush1.bf16.msra.mxu0 %v3303
    %3762 = vmatprep.subr.bf16.mxu0 %v3364
    %3763 = vmatpush2.bf16.msra.mxu0 %v3363
    %3764 = vmatprep.subr.bf16.mxu0 %v3360
    %3765 = vmatpush2.bf16.msra.mxu0 %v3359
    %3766 = vmatprep.subr.bf16.mxu0 %v3356
    %3767 = vmatpush2.bf16.msra.mxu0 %v3355
    %3768 = vmatprep.subr.bf16.mxu0 %v3352
    %3769 = vmatpush2.bf16.msra.mxu0 %v3351
    %3770 = vmatprep.subr.bf16.mxu0 %v3348
    %3771 = vmatpush2.bf16.msra.mxu0 %v3347
    %3772 = vmatprep.subr.bf16.mxu0 %v3344
    %3773 = vmatpush2.bf16.msra.mxu0 %v3343
    %3774 = vmatprep.subr.bf16.mxu0 %v3340
    %3775 = vmatpush2.bf16.msra.mxu0 %v3339
    %3776 = vmatprep.subr.bf16.mxu0 %v3336
    %3777 = vmatpush2.bf16.msra.mxu0 %v3335
    %3778 = vmatprep.mubr.bf16.mxu0 %v2065
    %3779 = vmatmul.mubr.bf16.gmra.mxu0 %v2064
    %v3780 = vpop.f32.mrf.mxu0
    %v3781 = vadd.f32 %v3740, %v3780
    %v3782 = vpop.f32.mrf.mxu0
    %v3783 = vadd.f32 %v3742, %v3782
    %v3784 = vpop.f32.mrf.mxu0
    %v3785 = vpop.f32.mrf.mxu0
    %3786 = vdwg.mxu0
    %3787 = vmatprep.subr.bf16.mxu0 %v3142
    %3788 = vmatpush1.bf16.msra.mxu0 %v3141
    %3789 = vmatprep.subr.bf16.mxu0 %v3138
    %3790 = vmatpush1.bf16.msra.mxu0 %v3137
    %3791 = vmatprep.subr.bf16.mxu0 %v3134
    %3792 = vmatpush1.bf16.msra.mxu0 %v3133
    %3793 = vmatprep.subr.bf16.mxu0 %v3130
    %3794 = vmatpush1.bf16.msra.mxu0 %v3129
    %3795 = vmatprep.subr.bf16.mxu0 %v3126
    %3796 = vmatpush1.bf16.msra.mxu0 %v3125
    %3797 = vmatprep.subr.bf16.mxu0 %v3122
    %3798 = vmatpush1.bf16.msra.mxu0 %v3121
    %3799 = vmatprep.subr.bf16.mxu0 %v3118
    %3800 = vmatpush1.bf16.msra.mxu0 %v3117
    %3801 = vmatprep.subr.bf16.mxu0 %v3114
    %3802 = vmatpush1.bf16.msra.mxu0 %v3113
    %3803 = vmatprep.subr.bf16.mxu0 %v3174
    %3804 = vmatpush2.bf16.msra.mxu0 %v3173
    %3805 = vmatprep.subr.bf16.mxu0 %v3170
    %3806 = vmatpush2.bf16.msra.mxu0 %v3169
    %3807 = vmatprep.subr.bf16.mxu0 %v3166
    %3808 = vmatpush2.bf16.msra.mxu0 %v3165
    %3809 = vmatprep.subr.bf16.mxu0 %v3162
    %3810 = vmatpush2.bf16.msra.mxu0 %v3161
    %3811 = vmatprep.subr.bf16.mxu0 %v3158
    %3812 = vmatpush2.bf16.msra.mxu0 %v3157
    %3813 = vmatprep.subr.bf16.mxu0 %v3154
    %3814 = vmatpush2.bf16.msra.mxu0 %v3153
    %3815 = vmatprep.subr.bf16.mxu0 %v3150
    %3816 = vmatpush2.bf16.msra.mxu0 %v3149
    %3817 = vmatprep.subr.bf16.mxu0 %v3146
    %3818 = vmatpush2.bf16.msra.mxu0 %v3145
    %3819 = vmatprep.mubr.bf16.mxu0 %v2059
    %3820 = vmatmul.mubr.bf16.gmra.mxu0 %v2058
    %v3821 = vpop.f32.mrf.mxu0
    %v3822 = vadd.f32 %v2334, %v3821
    %v3823 = vpop.f32.mrf.mxu0
    %v3824 = vadd.f32 %v2338, %v3823
    %v3825 = vpop.f32.mrf.mxu0
    %v3826 = vpop.f32.mrf.mxu0
    %3827 = vdwg.mxu0
    %3828 = vmatprep.subr.bf16.mxu0 %v3206
    %3829 = vmatpush1.bf16.msra.mxu0 %v3205
    %3830 = vmatprep.subr.bf16.mxu0 %v3202
    %3831 = vmatpush1.bf16.msra.mxu0 %v3201
    %3832 = vmatprep.subr.bf16.mxu0 %v3198
    %3833 = vmatpush1.bf16.msra.mxu0 %v3197
    %3834 = vmatprep.subr.bf16.mxu0 %v3194
    %3835 = vmatpush1.bf16.msra.mxu0 %v3193
    %3836 = vmatprep.subr.bf16.mxu0 %v3190
    %3837 = vmatpush1.bf16.msra.mxu0 %v3189
    %3838 = vmatprep.subr.bf16.mxu0 %v3186
    %3839 = vmatpush1.bf16.msra.mxu0 %v3185
    %3840 = vmatprep.subr.bf16.mxu0 %v3182
    %3841 = vmatpush1.bf16.msra.mxu0 %v3181
    %3842 = vmatprep.subr.bf16.mxu0 %v3178
    %3843 = vmatpush1.bf16.msra.mxu0 %v3177
    %3844 = vmatprep.subr.bf16.mxu0 %v3238
    %3845 = vmatpush2.bf16.msra.mxu0 %v3237
    %3846 = vmatprep.subr.bf16.mxu0 %v3234
    %3847 = vmatpush2.bf16.msra.mxu0 %v3233
    %3848 = vmatprep.subr.bf16.mxu0 %v3230
    %3849 = vmatpush2.bf16.msra.mxu0 %v3229
    %3850 = vmatprep.subr.bf16.mxu0 %v3226
    %3851 = vmatpush2.bf16.msra.mxu0 %v3225
    %3852 = vmatprep.subr.bf16.mxu0 %v3222
    %3853 = vmatpush2.bf16.msra.mxu0 %v3221
    %3854 = vmatprep.subr.bf16.mxu0 %v3218
    %3855 = vmatpush2.bf16.msra.mxu0 %v3217
    %3856 = vmatprep.subr.bf16.mxu0 %v3214
    %3857 = vmatpush2.bf16.msra.mxu0 %v3213
    %3858 = vmatprep.subr.bf16.mxu0 %v3210
    %3859 = vmatpush2.bf16.msra.mxu0 %v3209
    %3860 = vmatprep.mubr.bf16.mxu0 %v2061
    %3861 = vmatmul.mubr.bf16.gmra.mxu0 %v2060
    %v3862 = vpop.f32.mrf.mxu0
    %v3863 = vadd.f32 %v3822, %v3862
    %v3864 = vpop.f32.mrf.mxu0
    %v3865 = vadd.f32 %v3824, %v3864
    %v3866 = vpop.f32.mrf.mxu0
    %v3867 = vpop.f32.mrf.mxu0
    %3868 = vdwg.mxu0
    %3869 = vmatprep.subr.bf16.mxu0 %v3270
    %3870 = vmatpush1.bf16.msra.mxu0 %v3269
    %3871 = vmatprep.subr.bf16.mxu0 %v3266
    %3872 = vmatpush1.bf16.msra.mxu0 %v3265
    %3873 = vmatprep.subr.bf16.mxu0 %v3262
    %3874 = vmatpush1.bf16.msra.mxu0 %v3261
    %3875 = vmatprep.subr.bf16.mxu0 %v3258
    %3876 = vmatpush1.bf16.msra.mxu0 %v3257
    %3877 = vmatprep.subr.bf16.mxu0 %v3254
    %3878 = vmatpush1.bf16.msra.mxu0 %v3253
    %3879 = vmatprep.subr.bf16.mxu0 %v3250
    %3880 = vmatpush1.bf16.msra.mxu0 %v3249
    %3881 = vmatprep.subr.bf16.mxu0 %v3246
    %3882 = vmatpush1.bf16.msra.mxu0 %v3245
    %3883 = vmatprep.subr.bf16.mxu0 %v3242
    %3884 = vmatpush1.bf16.msra.mxu0 %v3241
    %3885 = vmatprep.subr.bf16.mxu0 %v3302
    %3886 = vmatpush2.bf16.msra.mxu0 %v3301
    %3887 = vmatprep.subr.bf16.mxu0 %v3298
    %3888 = vmatpush2.bf16.msra.mxu0 %v3297
    %3889 = vmatprep.subr.bf16.mxu0 %v3294
    %3890 = vmatpush2.bf16.msra.mxu0 %v3293
    %3891 = vmatprep.subr.bf16.mxu0 %v3290
    %3892 = vmatpush2.bf16.msra.mxu0 %v3289
    %3893 = vmatprep.subr.bf16.mxu0 %v3286
    %3894 = vmatpush2.bf16.msra.mxu0 %v3285
    %3895 = vmatprep.subr.bf16.mxu0 %v3282
    %3896 = vmatpush2.bf16.msra.mxu0 %v3281
    %3897 = vmatprep.subr.bf16.mxu0 %v3278
    %3898 = vmatpush2.bf16.msra.mxu0 %v3277
    %3899 = vmatprep.subr.bf16.mxu0 %v3274
    %3900 = vmatpush2.bf16.msra.mxu0 %v3273
    %3901 = vmatprep.mubr.bf16.mxu0 %v2063
    %3902 = vmatmul.mubr.bf16.gmra.mxu0 %v2062
    %v3903 = vpop.f32.mrf.mxu0
    %v3904 = vadd.f32 %v3863, %v3903
    %v3905 = vpop.f32.mrf.mxu0
    %v3906 = vadd.f32 %v3865, %v3905
    %v3907 = vpop.f32.mrf.mxu0
    %v3908 = vpop.f32.mrf.mxu0
    %3909 = vdwg.mxu0
    %3910 = vmatprep.subr.bf16.mxu0 %v3334
    %3911 = vmatpush1.bf16.msra.mxu0 %v3333
    %3912 = vmatprep.subr.bf16.mxu0 %v3330
    %3913 = vmatpush1.bf16.msra.mxu0 %v3329
    %3914 = vmatprep.subr.bf16.mxu0 %v3326
    %3915 = vmatpush1.bf16.msra.mxu0 %v3325
    %3916 = vmatprep.subr.bf16.mxu0 %v3322
    %3917 = vmatpush1.bf16.msra.mxu0 %v3321
    %3918 = vmatprep.subr.bf16.mxu0 %v3318
    %3919 = vmatpush1.bf16.msra.mxu0 %v3317
    %3920 = vmatprep.subr.bf16.mxu0 %v3314
    %3921 = vmatpush1.bf16.msra.mxu0 %v3313
    %3922 = vmatprep.subr.bf16.mxu0 %v3310
    %3923 = vmatpush1.bf16.msra.mxu0 %v3309
    %3924 = vmatprep.subr.bf16.mxu0 %v3306
    %3925 = vmatpush1.bf16.msra.mxu0 %v3305
    %3926 = vmatprep.subr.bf16.mxu0 %v3366
    %3927 = vmatpush2.bf16.msra.mxu0 %v3365
    %3928 = vmatprep.subr.bf16.mxu0 %v3362
    %3929 = vmatpush2.bf16.msra.mxu0 %v3361
    %3930 = vmatprep.subr.bf16.mxu0 %v3358
    %3931 = vmatpush2.bf16.msra.mxu0 %v3357
    %3932 = vmatprep.subr.bf16.mxu0 %v3354
    %3933 = vmatpush2.bf16.msra.mxu0 %v3353
    %3934 = vmatprep.subr.bf16.mxu0 %v3350
    %3935 = vmatpush2.bf16.msra.mxu0 %v3349
    %3936 = vmatprep.subr.bf16.mxu0 %v3346
    %3937 = vmatpush2.bf16.msra.mxu0 %v3345
    %3938 = vmatprep.subr.bf16.mxu0 %v3342
    %3939 = vmatpush2.bf16.msra.mxu0 %v3341
    %3940 = vmatprep.subr.bf16.mxu0 %v3338
    %3941 = vmatpush2.bf16.msra.mxu0 %v3337
    %3942 = vmatprep.mubr.bf16.mxu0 %v2065
    %3943 = vmatmul.mubr.bf16.gmra.mxu0 %v2064
    %v3944 = vpop.f32.mrf.mxu0
    %v3945 = vadd.f32 %v3904, %v3944
    %v3946 = vpop.f32.mrf.mxu0
    %v3947 = vadd.f32 %v3906, %v3946
    %v3948 = vpop.f32.mrf.mxu0
    %v3949 = vpop.f32.mrf.mxu0
    %3950 = vdwg.mxu0
    %v3951 = vmax.f32 %v3781, 0.0
    %v3952 = vmax.f32 %v3783, 0.0
    %v3953 = vmax.f32 %v3945, 0.0
    %v3954 = vmax.f32 %v3947, 0.0
    %v3955 = vpack.c.bf16 %v3951, %v3951
    %v3956 = vpack.c.bf16 %v3952, %v3952
    %v3957 = vpack.c.bf16 %v3953, %v3953
    %v3958 = vpack.c.bf16 %v3954, %v3954
    %v3960 = vlaneseq
    %v3961 = vshrl.u32 %v3960, 7
    %v3962 = vsub.s32 0, %v3961
    %v3963 = vrot.slane %v400, %v3962
    %v4029 = vunpack.c.l.b16 %v334
    %v4030 = vunpack.c.l.b16 %v335
    %v4031 = vunpack.c.l.b16 %v336
    %v4032 = vunpack.c.l.b16 %v337
    %v4033 = vunpack.c.l.b16 %v338
    %v4034 = vunpack.c.l.b16 %v339
    %v4035 = vunpack.c.l.b16 %v340
    %v4036 = vunpack.c.l.b16 %v341
    %v4037 = vunpack.c.l.b16 %v342
    %v4038 = vunpack.c.l.b16 %v343
    %v4039 = vunpack.c.l.b16 %v344
    %v4040 = vunpack.c.l.b16 %v345
    %v4041 = vunpack.c.l.b16 %v346
    %v4042 = vunpack.c.l.b16 %v347
    %v4043 = vunpack.c.l.b16 %v348
    %v4044 = vunpack.c.l.b16 %v349
    %v4045 = vunpack.c.l.b16 %v350
    %v4046 = vunpack.c.l.b16 %v351
    %v4047 = vunpack.c.l.b16 %v352
    %v4048 = vunpack.c.l.b16 %v353
    %v4049 = vunpack.c.l.b16 %v354
    %v4050 = vunpack.c.l.b16 %v355
    %v4051 = vunpack.c.l.b16 %v356
    %v4052 = vunpack.c.l.b16 %v357
    %v4053 = vunpack.c.l.b16 %v358
    %v4054 = vunpack.c.l.b16 %v359
    %v4055 = vunpack.c.l.b16 %v360
    %v4056 = vunpack.c.l.b16 %v361
    %v4057 = vunpack.c.l.b16 %v362
    %v4058 = vunpack.c.l.b16 %v363
    %v4059 = vunpack.c.l.b16 %v364
    %v4060 = vunpack.c.l.b16 %v365
    %v4061 = vunpack.c.l.b16 %v366
    %v4062 = vunpack.c.l.b16 %v367
    %v4063 = vunpack.c.l.b16 %v368
    %v4064 = vunpack.c.l.b16 %v369
    %v4065 = vunpack.c.l.b16 %v370
    %v4066 = vunpack.c.l.b16 %v371
    %v4067 = vunpack.c.l.b16 %v372
    %v4068 = vunpack.c.l.b16 %v373
    %v4069 = vunpack.c.l.b16 %v374
    %v4070 = vunpack.c.l.b16 %v375
    %v4071 = vunpack.c.l.b16 %v376
    %v4072 = vunpack.c.l.b16 %v377
    %v4073 = vunpack.c.l.b16 %v378
    %v4074 = vunpack.c.l.b16 %v379
    %v4075 = vunpack.c.l.b16 %v380
    %v4076 = vunpack.c.l.b16 %v381
    %v4077 = vunpack.c.l.b16 %v382
    %v4078 = vunpack.c.l.b16 %v383
    %v4079 = vunpack.c.l.b16 %v384
    %v4080 = vunpack.c.l.b16 %v385
    %v4081 = vunpack.c.l.b16 %v386
    %v4082 = vunpack.c.l.b16 %v387
    %v4083 = vunpack.c.l.b16 %v388
    %v4084 = vunpack.c.l.b16 %v389
    %v4085 = vunpack.c.l.b16 %v390
    %v4086 = vunpack.c.l.b16 %v391
    %v4087 = vunpack.c.l.b16 %v392
    %v4088 = vunpack.c.l.b16 %v393
    %v4089 = vunpack.c.l.b16 %v394
    %v4090 = vunpack.c.l.b16 %v395
    %v4091 = vunpack.c.l.b16 %v396
    %v4092 = vunpack.c.l.b16 %v397
    %v4093 = vpack.c.b16 %v4030, %v4029
    %v4094 = vpack.c.b16 %v4032, %v4031
    %v4095 = vpack.c.b16 %v4034, %v4033
    %v4096 = vpack.c.b16 %v4036, %v4035
    %v4097 = vpack.c.b16 %v4038, %v4037
    %v4098 = vpack.c.b16 %v4040, %v4039
    %v4099 = vpack.c.b16 %v4042, %v4041
    %v4100 = vpack.c.b16 %v4044, %v4043
    %v4101 = vpack.c.b16 %v4046, %v4045
    %v4102 = vpack.c.b16 %v4048, %v4047
    %v4103 = vpack.c.b16 %v4050, %v4049
    %v4104 = vpack.c.b16 %v4052, %v4051
    %v4105 = vpack.c.b16 %v4054, %v4053
    %v4106 = vpack.c.b16 %v4056, %v4055
    %v4107 = vpack.c.b16 %v4058, %v4057
    %v4108 = vpack.c.b16 %v4060, %v4059
    %v4109 = vpack.c.b16 %v4062, %v4061
    %v4110 = vpack.c.b16 %v4064, %v4063
    %v4111 = vpack.c.b16 %v4066, %v4065
    %v4112 = vpack.c.b16 %v4068, %v4067
    %v4113 = vpack.c.b16 %v4070, %v4069
    %v4114 = vpack.c.b16 %v4072, %v4071
    %v4115 = vpack.c.b16 %v4074, %v4073
    %v4116 = vpack.c.b16 %v4076, %v4075
    %v4117 = vpack.c.b16 %v4078, %v4077
    %v4118 = vpack.c.b16 %v4080, %v4079
    %v4119 = vpack.c.b16 %v4082, %v4081
    %v4120 = vpack.c.b16 %v4084, %v4083
    %v4121 = vpack.c.b16 %v4086, %v4085
    %v4122 = vpack.c.b16 %v4088, %v4087
    %v4123 = vpack.c.b16 %v4090, %v4089
    %v4124 = vpack.c.b16 %v4092, %v4091
    %4157 = vmatprep.subr.bf16.mxu0 0
    %4158 = vmatpush1.bf16.msra.mxu0 %v4100
    %4159 = vmatprep.subr.bf16.mxu0 0
    %4160 = vmatpush1.bf16.msra.mxu0 %v4099
    %4161 = vmatprep.subr.bf16.mxu0 0
    %4162 = vmatpush1.bf16.msra.mxu0 %v4098
    %4163 = vmatprep.subr.bf16.mxu0 0
    %4164 = vmatpush1.bf16.msra.mxu0 %v4097
    %4165 = vmatprep.subr.bf16.mxu0 0
    %4166 = vmatpush1.bf16.msra.mxu0 %v4096
    %4167 = vmatprep.subr.bf16.mxu0 0
    %4168 = vmatpush1.bf16.msra.mxu0 %v4095
    %4169 = vmatprep.subr.bf16.mxu0 0
    %4170 = vmatpush1.bf16.msra.mxu0 %v4094
    %4171 = vmatprep.subr.bf16.mxu0 0
    %4172 = vmatpush1.bf16.msra.mxu0 %v4093
    %4173 = vmatprep.subr.bf16.mxu0 0
    %4174 = vmatpush2.bf16.msra.mxu0 %v4108
    %4175 = vmatprep.subr.bf16.mxu0 0
    %4176 = vmatpush2.bf16.msra.mxu0 %v4107
    %4177 = vmatprep.subr.bf16.mxu0 0
    %4178 = vmatpush2.bf16.msra.mxu0 %v4106
    %4179 = vmatprep.subr.bf16.mxu0 0
    %4180 = vmatpush2.bf16.msra.mxu0 %v4105
    %4181 = vmatprep.subr.bf16.mxu0 0
    %4182 = vmatpush2.bf16.msra.mxu0 %v4104
    %4183 = vmatprep.subr.bf16.mxu0 0
    %4184 = vmatpush2.bf16.msra.mxu0 %v4103
    %4185 = vmatprep.subr.bf16.mxu0 0
    %4186 = vmatpush2.bf16.msra.mxu0 %v4102
    %4187 = vmatprep.subr.bf16.mxu0 0
    %4188 = vmatpush2.bf16.msra.mxu0 %v4101
    %4189 = vmatprep.mubr.bf16.mxu0 %v3956
    %4190 = vmatmul.mubr.bf16.gmra.mxu0 %v3955
    %v4191 = vpop.f32.mrf.mxu0
    %v4192 = vadd.f32 %v3963, %v4191
    %v4193 = vpop.f32.mrf.mxu0
    %v4194 = vpop.f32.mrf.mxu0
    %v4195 = vpop.f32.mrf.mxu0
    %4196 = vdwg.mxu0
    %4197 = vmatprep.subr.bf16.mxu0 0
    %4198 = vmatpush1.bf16.msra.mxu0 %v4116
    %4199 = vmatprep.subr.bf16.mxu0 0
    %4200 = vmatpush1.bf16.msra.mxu0 %v4115
    %4201 = vmatprep.subr.bf16.mxu0 0
    %4202 = vmatpush1.bf16.msra.mxu0 %v4114
    %4203 = vmatprep.subr.bf16.mxu0 0
    %4204 = vmatpush1.bf16.msra.mxu0 %v4113
    %4205 = vmatprep.subr.bf16.mxu0 0
    %4206 = vmatpush1.bf16.msra.mxu0 %v4112
    %4207 = vmatprep.subr.bf16.mxu0 0
    %4208 = vmatpush1.bf16.msra.mxu0 %v4111
    %4209 = vmatprep.subr.bf16.mxu0 0
    %4210 = vmatpush1.bf16.msra.mxu0 %v4110
    %4211 = vmatprep.subr.bf16.mxu0 0
    %4212 = vmatpush1.bf16.msra.mxu0 %v4109
    %4213 = vmatprep.subr.bf16.mxu0 0
    %4214 = vmatpush2.bf16.msra.mxu0 %v4124
    %4215 = vmatprep.subr.bf16.mxu0 0
    %4216 = vmatpush2.bf16.msra.mxu0 %v4123
    %4217 = vmatprep.subr.bf16.mxu0 0
    %4218 = vmatpush2.bf16.msra.mxu0 %v4122
    %4219 = vmatprep.subr.bf16.mxu0 0
    %4220 = vmatpush2.bf16.msra.mxu0 %v4121
    %4221 = vmatprep.subr.bf16.mxu0 0
    %4222 = vmatpush2.bf16.msra.mxu0 %v4120
    %4223 = vmatprep.subr.bf16.mxu0 0
    %4224 = vmatpush2.bf16.msra.mxu0 %v4119
    %4225 = vmatprep.subr.bf16.mxu0 0
    %4226 = vmatpush2.bf16.msra.mxu0 %v4118
    %4227 = vmatprep.subr.bf16.mxu0 0
    %4228 = vmatpush2.bf16.msra.mxu0 %v4117
    %4229 = vmatprep.mubr.bf16.mxu0 %v3958
    %4230 = vmatmul.mubr.bf16.gmra.mxu0 %v3957
    %v4231 = vpop.f32.mrf.mxu0
    %v4232 = vadd.f32 %v4192, %v4231
    %v4233 = vpop.f32.mrf.mxu0
    %v4234 = vpop.f32.mrf.mxu0
    %v4235 = vpop.f32.mrf.mxu0
    %4236 = vdwg.mxu0
    %v4237 = vlaneseq
    %v4238 = vand.u32 %v4237, 127
    %vm4239 = vcmp.lt.s32.totalorder %v4238, 4
    %v4240 = vmul.f32 %v4232, %v4232
    %v4241 = vsel %vm4239, %v4240, 0.0
    %4242 = vadd.xlane.f32.xlu0 %v4241
    %v4243 = vpop.xlane.xlu0 %4242
    %v4244 = vmax.f32 %v4243, 1e-24
    %v4245 = vrsqrt.pop %v4244
    %v4246 = vsel %vm4239, %v4245, 1.0
    %v4247 = vmul.f32 %v4232, %v4246
    %vm4248 = vcmp.eq.s32.totalorder %v4238, 7
    %v4249 = vxor.u32 %v4232, 2147483648
    %v4250 = vmul.f32 %v4249, 1.442695
    %v4251 = vpow.pop %v4250
    %v4252 = vadd.f32 %v4251, 1.0
    %v4253 = vrcp.pop %v4252
    %v4254 = vmul.f32 1.0, %v4253
    %v4255 = vsel %vm4248, %v4254, %v4247
    %4256 = vst [vmem:[#allocation10] sm:$0xff] %v4255
    // Predicated region
    $region34: #{tpu_custom_call.1} parent=1 // pred_check
      _
    $region35: #{tpu_custom_call.1} parent=1 // pred_check_branch
      %4258 = sbr.rel (0) target = $region37
    $region36: #{tpu_custom_call.1} parent=1 // pred_region
      %s4260 = ssub.s32 128, 128
      %4261 = vsyncadd [#allocation4], %s4260
      %s4263 = sshll.u32 [#allocation10], 4
      %s4264 = int_to_ptr.vmem [resolvable:$true] %s4263
      %4266 = dma.vmem_to_hbm [thread:$0]  %s4264, 128, %s4, [#allocation4]
    $region37: #{tpu_custom_call.1} parent=1 // pred_fallthru
      _
    // Predicated region
    $region38: #{tpu_custom_call.1} parent=1 // pred_check
      _
    $region39: #{tpu_custom_call.1} parent=1 // pred_check_branch
      %4268 = sbr.rel (0) target = $region41
    $region40: #{tpu_custom_call.1} parent=1 // pred_region
      %4269 = dma.done [#allocation4], 128
    $region41: #{tpu_custom_call.1} parent=1 // pred_fallthru
      _
    %4270 = vsyncpa [#allocation3], 1
    %4271 = vsyncpa [#allocation6], 1
    %4272 = vsyncpa [#allocation9], 1
    %4273 = vsyncpa [#allocation4], 1

</llo_original>
